<compile_context>
chip_gen: v5e
topology: v5e:2x2
jax: 0.10.0
libtpu: 0.0.40
codegen_flags: <defaults>
</compile_context>

<pallas_src>
import math

import jax
import jax.numpy as jnp
import numpy as np
from jax.experimental import pallas as pl
from jax.experimental.pallas import tpu as pltpu

# ----------------------------- small "electra" config -----------------------------
VOCAB = 100
EMB = 16          # embedding size (projected to HIDDEN, like electra-small)
HIDDEN = 32       # hidden_size
LAYERS = 2
HEADS = 4
HEAD_DIM = HIDDEN // HEADS
INTERMEDIATE = 64
MAX_POS = 64
NUM_LABELS = 2
LN_EPS = 1e-12
NEG_BIG = -10000.0


def _gelu_exact(x):
    # matches torch.nn.functional.gelu (erf-based)
    return 0.5 * x * (1.0 + jax.lax.erf(x * (1.0 / math.sqrt(2.0))))


def _layer_norm(h, g, b):
    mu = jnp.mean(h, axis=-1, keepdims=True)
    var = jnp.mean((h - mu) ** 2, axis=-1, keepdims=True)
    return (h - mu) * jax.lax.rsqrt(var + LN_EPS) * g + b


def _mxu(a, b):
    # bf16 operands at the MXU (native on v5e/v6e/v7x), f32 accumulation.
    return jnp.dot(a.astype(jnp.bfloat16), b.astype(jnp.bfloat16),
                   preferred_element_type=jnp.float32)


def _full_block(shape):
    nd = len(shape)
    return pl.BlockSpec(shape, lambda i, _nd=nd: (0,) * _nd)


# ------------------------------ fused Pallas kernel --------------------------------
def _make_kernel(bt, seq):
    """One grid step = `bt` examples (R = bt*seq token rows) end-to-end in VMEM."""
    rows = bt * seq
    scale = 1.0 / math.sqrt(HEAD_DIM)

    def kernel(ids_ref, mask_ref,
               word_emb_ref, pos_type_ref, block_bias_ref, emb_ln_ref,
               emb_proj_w_ref, emb_proj_b_ref,
               w_qkv_ref, b_qkv_ref, w_ao_ref, w1_ref, b1_ref, w2_ref, vec_ref,
               cls_wd_ref, cls_bd_ref, cls_wo_ref, cls_bo_ref,
               out_ref):
        # ---- in-kernel embedding gather: one-hot(ids) @ table on the MXU ----
        ids = ids_ref[0]                                                  # (R, 1) int32
        vocab_iota = jax.lax.broadcasted_iota(jnp.int32, (rows, VOCAB), 1)
        onehot = (vocab_iota == ids).astype(jnp.bfloat16)                 # (R, VOCAB)
        emb = _mxu(onehot, word_emb_ref[...]) + pos_type_ref[...]         # (R, EMB) f32

        # embedding LayerNorm + projection to HIDDEN
        x = _layer_norm(emb, emb_ln_ref[0:1, :], emb_ln_ref[1:2, :])
        x = _mxu(x, emb_proj_w_ref[...]) + emb_proj_b_ref[...]            # (R, HIDDEN)

        # ---- additive attention bias, hoisted once per step ----
        # block-diagonal term keeps attention within each example; padding term from
        # the raw (1, R) mask; no (B,H,S,S) tensor is ever materialized.
        bias = block_bias_ref[...] + (1.0 - mask_ref[0]) * NEG_BIG        # (R, R)

        # ---- encoder layers (all weights VMEM-resident, loops fully unrolled) ----
        for l in range(LAYERS):
            vecs = vec_ref[l]          # (6, HIDDEN): b_ao, b2, ln1_g, ln1_b, ln2_g, ln2_b
            # fused QKV: one (R,32)@(32,96) matmul per layer
            qkv = _mxu(x, w_qkv_ref[l]) + b_qkv_ref[l]                    # (R, 3*HIDDEN)
            ctx_heads = []
            for h in range(HEADS):
                q = qkv[:, h * HEAD_DIM:(h + 1) * HEAD_DIM]
                k = qkv[:, HIDDEN + h * HEAD_DIM:HIDDEN + (h + 1) * HEAD_DIM]
                v = qkv[:, 2 * HIDDEN + h * HEAD_DIM:2 * HIDDEN + (h + 1) * HEAD_DIM]
                s = jax.lax.dot_general(
                    q.astype(jnp.bfloat16), k.astype(jnp.bfloat16),
                    (((1,), (1,)), ((), ())),
                    preferred_element_type=jnp.float32) * scale + bias    # (R, R)
                m = jnp.max(s, axis=-1, keepdims=True)
                p = jnp.exp(s - m)
                p = p * pl.reciprocal(jnp.sum(p, axis=-1, keepdims=True), approx=True)
                ctx_heads.append(_mxu(p, v))                              # (R, HEAD_DIM)
            ctx = jnp.concatenate(ctx_heads, axis=-1)                     # (R, HIDDEN)
            # single full-width output projection (head-sum inside the K=HIDDEN contraction)
            attn_out = _mxu(ctx, w_ao_ref[l]) + vecs[0:1, :]
            x = _layer_norm(x + attn_out, vecs[2:3, :], vecs[3:4, :])

            hdn = _gelu_exact(_mxu(x, w1_ref[l]) + b1_ref[l])             # (R, INTER)
            ff = _mxu(hdn, w2_ref[l]) + vecs[1:2, :]
            x = _layer_norm(x + ff, vecs[4:5, :], vecs[5:6, :])

        # ---- classifier head on each example's [CLS] row (rows 0, S, 2S, ...) ----
        cls = jnp.concatenate([x[b * seq:b * seq + 1, :] for b in range(bt)], axis=0)
        hcls = _gelu_exact(_mxu(cls, cls_wd_ref[...]) + cls_bd_ref[...])  # (bt, HIDDEN)
        # dropout: identity (inference)
        logits = _mxu(hcls, cls_wo_ref[...]) + cls_bo_ref[...]            # (bt, NUM_LABELS)
        m = jnp.max(logits, axis=-1, keepdims=True)
        e = jnp.exp(logits - m)
        out_ref[0] = (e / jnp.sum(e, axis=-1, keepdims=True)).astype(out_ref.dtype)

    return kernel


def _choose_bt(batch, seq):
    """~128 token rows per grid step, while keeping >=2 steps when possible (v7x 2 TCs)."""
    bt = max(1, min(batch, 128 // max(1, seq)))
    if batch >= 2:
        bt = min(bt, max(1, batch // 2))
    while batch % bt:
        bt -= 1
    return bt


# ------------------------------- forward (Pallas) ----------------------------------
def electra_classifier_forward(params, input_ids, attention_mask):
    batch, seq = input_ids.shape
    bt = _choose_bt(batch, seq)
    nsteps = batch // bt
    rows = bt * seq

    # per-step data blocks: bt consecutive examples per grid step
    ids3 = input_ids.astype(jnp.int32).reshape(nsteps, rows, 1)
    mask3 = attention_mask.astype(jnp.float32).reshape(nsteps, 1, rows)

    bf16 = lambda a: a.astype(jnp.bfloat16)
    # pos + token-type embeddings pre-summed and tiled to the step's row count
    pos_type = jnp.tile(params["pos_emb"][:seq] + params["type_emb"][0][None, :], (bt, 1))
    # static block-diagonal bias (keeps attention within each example inside a step)
    ex_id = jnp.arange(rows, dtype=jnp.int32) // seq
    block_bias = jnp.where(ex_id[:, None] == ex_id[None, :], 0.0, NEG_BIG).astype(jnp.float32)

    weights = (
        bf16(params["word_emb"]),                                    # (VOCAB, EMB)
        pos_type,                                                    # (rows, EMB)
        block_bias,                                                  # (rows, rows)
        jnp.stack([params["emb_ln_g"], params["emb_ln_b"]]),         # (2, EMB)
        bf16(params["emb_proj_w"]),                                  # (EMB, HIDDEN)
        params["emb_proj_b"][None, :],                               # (1, HIDDEN)
        bf16(params["w_qkv"]),                                       # (L, HIDDEN, 3*HIDDEN)
        params["b_qkv"][:, None, :],                                 # (L, 1, 3*HIDDEN)
        bf16(params["w_ao"]),                                        # (L, HIDDEN, HIDDEN)
        bf16(params["w1"]),                                          # (L, HIDDEN, INTER)
        params["b1"][:, None, :],                                    # (L, 1, INTER)
        bf16(params["w2"]),                                          # (L, INTER, HIDDEN)
        jnp.stack([params["b_ao"], params["b2"], params["ln1_g"], params["ln1_b"],
                   params["ln2_g"], params["ln2_b"]], axis=1),       # (L, 6, HIDDEN)
        bf16(params["cls_wd"]),                                      # (HIDDEN, HIDDEN)
        params["cls_bd"][None, :],                                   # (1, HIDDEN)
        bf16(params["cls_wo"]),                                      # (HIDDEN, NUM_LABELS)
        params["cls_bo"][None, :],                                   # (1, NUM_LABELS)
    )

    in_specs = ([pl.BlockSpec((1, rows, 1), lambda i: (i, 0, 0)),
                 pl.BlockSpec((1, 1, rows), lambda i: (i, 0, 0))]
                + [_full_block(w.shape) for w in weights])

    probs = pl.pallas_call(
        _make_kernel(bt, seq),
        out_shape=jax.ShapeDtypeStruct((nsteps, bt, NUM_LABELS), jnp.float32),
        grid=(nsteps,),
        in_specs=in_specs,
        out_specs=pl.BlockSpec((1, bt, NUM_LABELS), lambda i: (i, 0, 0)),
        compiler_params=pltpu.CompilerParams(dimension_semantics=("parallel",)),
    )(ids3, mask3, *weights)
    return probs.reshape(batch, NUM_LABELS)


# --------------------------------- parameters --------------------------------------
def init_params(key):
    keys = jax.random.split(key, 24)
    it = iter(keys)

    def nrm(shape, s=0.02):
        return (s * jax.random.normal(next(it), shape)).astype(jnp.float32)

    return {
        "word_emb": nrm((VOCAB, EMB)),
        "pos_emb": nrm((MAX_POS, EMB)),
        "type_emb": nrm((2, EMB)),
        "emb_ln_g": jnp.ones((EMB,), jnp.float32),
        "emb_ln_b": jnp.zeros((EMB,), jnp.float32),
        "emb_proj_w": nrm((EMB, HIDDEN)),
        "emb_proj_b": nrm((HIDDEN,)),
        # fused Q|K|V projection (heads are contiguous HEAD_DIM chunks within each third)
        "w_qkv": nrm((LAYERS, HIDDEN, 3 * HIDDEN)),
        "b_qkv": nrm((LAYERS, 3 * HIDDEN)),
        "w_ao": nrm((LAYERS, HIDDEN, HIDDEN)),
        "b_ao": nrm((LAYERS, HIDDEN)),
        "ln1_g": jnp.ones((LAYERS, HIDDEN), jnp.float32),
        "ln1_b": jnp.zeros((LAYERS, HIDDEN), jnp.float32),
        "w1": nrm((LAYERS, HIDDEN, INTERMEDIATE)),
        "b1": nrm((LAYERS, INTERMEDIATE)),
        "w2": nrm((LAYERS, INTERMEDIATE, HIDDEN)),
        "b2": nrm((LAYERS, HIDDEN)),
        "ln2_g": jnp.ones((LAYERS, HIDDEN), jnp.float32),
        "ln2_b": jnp.zeros((LAYERS, HIDDEN), jnp.float32),
        # classifier head (dense1 + out_proj from the PyTorch module)
        "cls_wd": nrm((HIDDEN, HIDDEN), 0.1),
        "cls_bd": nrm((HIDDEN,), 0.1),
        "cls_wo": nrm((HIDDEN, NUM_LABELS), 0.1),
        "cls_bo": nrm((NUM_LABELS,), 0.1),
    }


# ------------------------------ pure-JAX reference ---------------------------------
def ref_forward(params, input_ids, attention_mask):
    batch, seq = input_ids.shape

    emb = (params["word_emb"][input_ids]
           + params["pos_emb"][:seq][None]
           + params["type_emb"][0][None, None])
    x = _layer_norm(emb, params["emb_ln_g"], params["emb_ln_b"])
    x = x @ params["emb_proj_w"] + params["emb_proj_b"]

    bias = (1.0 - attention_mask.astype(jnp.float32))[:, None, None, :] * NEG_BIG

    for l in range(LAYERS):
        qkv = x @ params["w_qkv"][l] + params["b_qkv"][l]              # (B, S, 3H)
        q, k, v = jnp.split(qkv, 3, axis=-1)

        def heads(t):
            return t.reshape(batch, seq, HEADS, HEAD_DIM).transpose(0, 2, 1, 3)

        q, k, v = heads(q), heads(k), heads(v)
        s = jnp.einsum("bhqe,bhke->bhqk", q, k) / math.sqrt(HEAD_DIM) + bias
        p = jax.nn.softmax(s, axis=-1)
        ctx = jnp.einsum("bhqk,bhke->bhqe", p, v)
        ctx = ctx.transpose(0, 2, 1, 3).reshape(batch, seq, HIDDEN)
        attn_out = ctx @ params["w_ao"][l] + params["b_ao"][l]
        x = _layer_norm(x + attn_out, params["ln1_g"][l], params["ln1_b"][l])
        hdn = _gelu_exact(x @ params["w1"][l] + params["b1"][l])
        x = _layer_norm(x + hdn @ params["w2"][l] + params["b2"][l],
                        params["ln2_g"][l], params["ln2_b"][l])

    cls = x[:, 0, :]
    h = _gelu_exact(cls @ params["cls_wd"] + params["cls_bd"])
    logits = h @ params["cls_wo"] + params["cls_bo"]
    return jax.nn.softmax(logits, axis=1)


# ---------------------------------------- main --------------------------------------
if __name__ == "__main__":
    key = jax.random.PRNGKey(0)
    pkey, ikey = jax.random.split(key)
    params = init_params(pkey)

    B, S = 8, 8
    input_ids = jax.random.randint(ikey, (B, S), 0, VOCAB, dtype=jnp.int32)
    attention_mask = (jnp.ones((B, S), jnp.int32)
                      .at[1, 6:].set(0)       # pad last 2 tokens of example 1
                      .at[5, 4:].set(0))      # pad last 4 tokens of example 5

    probs = jax.block_until_ready(
        jax.jit(electra_classifier_forward)(params, input_ids, attention_mask))
    ref = jax.block_until_ready(
        jax.jit(ref_forward)(params, input_ids, attention_mask))

    assert probs.shape == (B, NUM_LABELS)
    # relaxed tolerance: bf16 MXU operands + EUP approximate reciprocal in the attention
    # softmax, compared against a pure-f32 reference
    np.testing.assert_allclose(np.asarray(probs), np.asarray(ref), rtol=2e-2, atol=2e-3)
    np.testing.assert_allclose(np.asarray(probs).sum(axis=1), np.ones(B), rtol=1e-5, atol=1e-5)

    print("KERNEL_OK")
</pallas_src>

<mosaic_0001>
module attributes {stable_mosaic.version = 11 : i64} {
  func.func @kernel(%arg0: i32, %arg1: memref<1x32x1xi32, #tpu.memory_space<vmem>>, %arg2: memref<1x1x32xf32, #tpu.memory_space<vmem>>, %arg3: memref<100x16xbf16, #tpu.memory_space<vmem>>, %arg4: memref<32x16xf32, #tpu.memory_space<vmem>>, %arg5: memref<32x32xf32, #tpu.memory_space<vmem>>, %arg6: memref<2x16xf32, #tpu.memory_space<vmem>>, %arg7: memref<16x32xbf16, #tpu.memory_space<vmem>>, %arg8: memref<1x32xf32, #tpu.memory_space<vmem>>, %arg9: memref<2x32x96xbf16, #tpu.memory_space<vmem>>, %arg10: memref<2x1x96xf32, #tpu.memory_space<vmem>>, %arg11: memref<2x32x32xbf16, #tpu.memory_space<vmem>>, %arg12: memref<2x32x64xbf16, #tpu.memory_space<vmem>>, %arg13: memref<2x1x64xf32, #tpu.memory_space<vmem>>, %arg14: memref<2x64x32xbf16, #tpu.memory_space<vmem>>, %arg15: memref<2x6x32xf32, #tpu.memory_space<vmem>>, %arg16: memref<32x32xbf16, #tpu.memory_space<vmem>>, %arg17: memref<1x32xf32, #tpu.memory_space<vmem>>, %arg18: memref<32x2xbf16, #tpu.memory_space<vmem>>, %arg19: memref<1x2xf32, #tpu.memory_space<vmem>>, %arg20: memref<1x4x2xf32, #tpu.memory_space<vmem>>) attributes {dimension_semantics = [#tpu.dimension_semantics<parallel>], iteration_bounds = array<i64: 2>, scalar_prefetch = 0 : i64, scratch_operands = 0 : i64, tpu.core_type = #tpu.core_type<tc>, window_params = [{transform_indices = @transform_0, window_bounds = array<i64: 1, 32, 1>}, {transform_indices = @transform_1, window_bounds = array<i64: 1, 1, 32>}, {pipeline_mode = #tpu.pipeline_mode<synchronous>, transform_indices = @transform_2, window_bounds = array<i64: 100, 16>}, {pipeline_mode = #tpu.pipeline_mode<synchronous>, transform_indices = @transform_3, window_bounds = array<i64: 32, 16>}, {pipeline_mode = #tpu.pipeline_mode<synchronous>, transform_indices = @transform_4, window_bounds = array<i64: 32, 32>}, {pipeline_mode = #tpu.pipeline_mode<synchronous>, transform_indices = @transform_5, window_bounds = array<i64: 2, 16>}, {pipeline_mode = #tpu.pipeline_mode<synchronous>, transform_indices = @transform_6, window_bounds = array<i64: 16, 32>}, {pipeline_mode = #tpu.pipeline_mode<synchronous>, transform_indices = @transform_7, window_bounds = array<i64: 1, 32>}, {pipeline_mode = #tpu.pipeline_mode<synchronous>, transform_indices = @transform_8, window_bounds = array<i64: 2, 32, 96>}, {pipeline_mode = #tpu.pipeline_mode<synchronous>, transform_indices = @transform_9, window_bounds = array<i64: 2, 1, 96>}, {pipeline_mode = #tpu.pipeline_mode<synchronous>, transform_indices = @transform_10, window_bounds = array<i64: 2, 32, 32>}, {pipeline_mode = #tpu.pipeline_mode<synchronous>, transform_indices = @transform_11, window_bounds = array<i64: 2, 32, 64>}, {pipeline_mode = #tpu.pipeline_mode<synchronous>, transform_indices = @transform_12, window_bounds = array<i64: 2, 1, 64>}, {pipeline_mode = #tpu.pipeline_mode<synchronous>, transform_indices = @transform_13, window_bounds = array<i64: 2, 64, 32>}, {pipeline_mode = #tpu.pipeline_mode<synchronous>, transform_indices = @transform_14, window_bounds = array<i64: 2, 6, 32>}, {pipeline_mode = #tpu.pipeline_mode<synchronous>, transform_indices = @transform_15, window_bounds = array<i64: 32, 32>}, {pipeline_mode = #tpu.pipeline_mode<synchronous>, transform_indices = @transform_16, window_bounds = array<i64: 1, 32>}, {pipeline_mode = #tpu.pipeline_mode<synchronous>, transform_indices = @transform_17, window_bounds = array<i64: 32, 2>}, {pipeline_mode = #tpu.pipeline_mode<synchronous>, transform_indices = @transform_18, window_bounds = array<i64: 1, 2>}, {transform_indices = @transform_19, window_bounds = array<i64: 1, 4, 2>}]} {
    %c0 = arith.constant 0 : index
    %c0_0 = arith.constant 0 : index
    %c0_1 = arith.constant 0 : index
    %0 = vector.load %arg1[%c0, %c0_0, %c0_1] : memref<1x32x1xi32, #tpu.memory_space<vmem>>, vector<1x32x1xi32>
    %1 = vector.shape_cast %0 : vector<1x32x1xi32> to vector<32x1xi32>
    %2 = tpu.iota {dimensions = array<i32: 1>} : vector<32x100xi32>
    %3 = vector.broadcast %1 : vector<32x1xi32> to vector<32x100xi32>
    %4 = arith.cmpi eq, %2, %3 : vector<32x100xi32>
    %5 = arith.extui %4 : vector<32x100xi1> to vector<32x100xi32>
    %6 = arith.sitofp %5 : vector<32x100xi32> to vector<32x100xf32>
    %7 = arith.truncf %6 : vector<32x100xf32> to vector<32x100xbf16>
    %c0_2 = arith.constant 0 : index
    %c0_3 = arith.constant 0 : index
    %8 = vector.load %arg3[%c0_2, %c0_3] : memref<100x16xbf16, #tpu.memory_space<vmem>>, vector<100x16xbf16>
    %cst = arith.constant dense<0.000000e+00> : vector<32x16xf32>
    %9 = tpu.matmul %7, %8, %cst {dimension_numbers = #tpu.dot_dimension_numbers<[1], [0], [0], [1], [0, 0, 1, 1], [], []>} : vector<32x100xbf16>, vector<100x16xbf16>, vector<32x16xf32> -> vector<32x16xf32>
    %c0_4 = arith.constant 0 : index
    %c0_5 = arith.constant 0 : index
    %10 = vector.load %arg4[%c0_4, %c0_5] : memref<32x16xf32, #tpu.memory_space<vmem>>, vector<32x16xf32>
    %11 = arith.addf %9, %10 : vector<32x16xf32>
    %c0_6 = arith.constant 0 : index
    %c0_7 = arith.constant 0 : index
    %12 = vector.load %arg6[%c0_6, %c0_7] : memref<2x16xf32, #tpu.memory_space<vmem>>, vector<1x16xf32>
    %c1 = arith.constant 1 : index
    %c0_8 = arith.constant 0 : index
    %13 = vector.load %arg6[%c1, %c0_8] : memref<2x16xf32, #tpu.memory_space<vmem>>, vector<1x16xf32>
    %cst_9 = arith.constant dense<0.000000e+00> : vector<32xf32>
    %14 = vector.multi_reduction <add>, %11, %cst_9 [1] : vector<32x16xf32> to vector<32xf32>
    %15 = vector.shape_cast %14 : vector<32xf32> to vector<32x1xf32>
    %cst_10 = arith.constant 1.600000e+01 : f32
    %16 = vector.broadcast %cst_10 : f32 to vector<32x1xf32>
    %17 = arith.divf %15, %16 : vector<32x1xf32>
    %18 = vector.broadcast %17 : vector<32x1xf32> to vector<32x16xf32>
    %19 = arith.subf %11, %18 : vector<32x16xf32>
    %20 = arith.mulf %19, %19 : vector<32x16xf32>
    %cst_11 = arith.constant dense<0.000000e+00> : vector<32xf32>
    %21 = vector.multi_reduction <add>, %20, %cst_11 [1] : vector<32x16xf32> to vector<32xf32>
    %22 = vector.shape_cast %21 : vector<32xf32> to vector<32x1xf32>
    %cst_12 = arith.constant 1.600000e+01 : f32
    %23 = vector.broadcast %cst_12 : f32 to vector<32x1xf32>
    %24 = arith.divf %22, %23 : vector<32x1xf32>
    %25 = vector.broadcast %17 : vector<32x1xf32> to vector<32x16xf32>
    %26 = arith.subf %11, %25 : vector<32x16xf32>
    %cst_13 = arith.constant 9.99999996E-13 : f32
    %27 = vector.broadcast %cst_13 : f32 to vector<32x1xf32>
    %28 = arith.addf %24, %27 : vector<32x1xf32>
    %29 = math.rsqrt %28 : vector<32x1xf32>
    %30 = vector.broadcast %29 : vector<32x1xf32> to vector<32x16xf32>
    %31 = arith.mulf %26, %30 : vector<32x16xf32>
    %32 = vector.broadcast %12 : vector<1x16xf32> to vector<32x16xf32>
    %33 = arith.mulf %31, %32 : vector<32x16xf32>
    %34 = vector.broadcast %13 : vector<1x16xf32> to vector<32x16xf32>
    %35 = arith.addf %33, %34 : vector<32x16xf32>
    %c0_14 = arith.constant 0 : index
    %c0_15 = arith.constant 0 : index
    %36 = vector.load %arg7[%c0_14, %c0_15] : memref<16x32xbf16, #tpu.memory_space<vmem>>, vector<16x32xbf16>
    %37 = arith.truncf %35 : vector<32x16xf32> to vector<32x16xbf16>
    %cst_16 = arith.constant dense<0.000000e+00> : vector<32x32xf32>
    %38 = tpu.matmul %37, %36, %cst_16 {dimension_numbers = #tpu.dot_dimension_numbers<[1], [0], [0], [1], [0, 0, 1, 1], [], []>} : vector<32x16xbf16>, vector<16x32xbf16>, vector<32x32xf32> -> vector<32x32xf32>
    %c0_17 = arith.constant 0 : index
    %c0_18 = arith.constant 0 : index
    %39 = vector.load %arg8[%c0_17, %c0_18] : memref<1x32xf32, #tpu.memory_space<vmem>>, vector<1x32xf32>
    %40 = vector.broadcast %39 : vector<1x32xf32> to vector<32x32xf32>
    %41 = arith.addf %38, %40 : vector<32x32xf32>
    %c0_19 = arith.constant 0 : index
    %c0_20 = arith.constant 0 : index
    %42 = vector.load %arg5[%c0_19, %c0_20] : memref<32x32xf32, #tpu.memory_space<vmem>>, vector<32x32xf32>
    %c0_21 = arith.constant 0 : index
    %c0_22 = arith.constant 0 : index
    %c0_23 = arith.constant 0 : index
    %43 = vector.load %arg2[%c0_21, %c0_22, %c0_23] : memref<1x1x32xf32, #tpu.memory_space<vmem>>, vector<1x1x32xf32>
    %44 = vector.shape_cast %43 : vector<1x1x32xf32> to vector<1x32xf32>
    %cst_24 = arith.constant 1.000000e+00 : f32
    %45 = vector.broadcast %cst_24 : f32 to vector<1x32xf32>
    %46 = arith.subf %45, %44 : vector<1x32xf32>
    %cst_25 = arith.constant -1.000000e+04 : f32
    %47 = vector.broadcast %cst_25 : f32 to vector<1x32xf32>
    %48 = arith.mulf %46, %47 : vector<1x32xf32>
    %49 = vector.broadcast %48 : vector<1x32xf32> to vector<32x32xf32>
    %50 = arith.addf %42, %49 : vector<32x32xf32>
    %c0_26 = arith.constant 0 : index
    %c0_27 = arith.constant 0 : index
    %c0_28 = arith.constant 0 : index
    %51 = vector.load %arg15[%c0_26, %c0_27, %c0_28] : memref<2x6x32xf32, #tpu.memory_space<vmem>>, vector<1x6x32xf32>
    %52 = vector.shape_cast %51 : vector<1x6x32xf32> to vector<6x32xf32>
    %c0_29 = arith.constant 0 : index
    %c0_30 = arith.constant 0 : index
    %c0_31 = arith.constant 0 : index
    %53 = vector.load %arg9[%c0_29, %c0_30, %c0_31] : memref<2x32x96xbf16, #tpu.memory_space<vmem>>, vector<1x32x96xbf16>
    %54 = vector.shape_cast %53 : vector<1x32x96xbf16> to vector<32x96xbf16>
    %55 = arith.truncf %41 : vector<32x32xf32> to vector<32x32xbf16>
    %cst_32 = arith.constant dense<0.000000e+00> : vector<32x96xf32>
    %56 = tpu.matmul %55, %54, %cst_32 {dimension_numbers = #tpu.dot_dimension_numbers<[1], [0], [0], [1], [0, 0, 1, 1], [], []>} : vector<32x32xbf16>, vector<32x96xbf16>, vector<32x96xf32> -> vector<32x96xf32>
    %c0_33 = arith.constant 0 : index
    %c0_34 = arith.constant 0 : index
    %c0_35 = arith.constant 0 : index
    %57 = vector.load %arg10[%c0_33, %c0_34, %c0_35] : memref<2x1x96xf32, #tpu.memory_space<vmem>>, vector<1x1x96xf32>
    %58 = vector.shape_cast %57 : vector<1x1x96xf32> to vector<1x96xf32>
    %59 = vector.broadcast %58 : vector<1x96xf32> to vector<32x96xf32>
    %60 = arith.addf %56, %59 : vector<32x96xf32>
    %61 = vector.extract_strided_slice %60 {offsets = [0, 0], sizes = [32, 8], strides = [1, 1]} : vector<32x96xf32> to vector<32x8xf32>
    %62 = vector.extract_strided_slice %60 {offsets = [0, 32], sizes = [32, 8], strides = [1, 1]} : vector<32x96xf32> to vector<32x8xf32>
    %63 = vector.extract_strided_slice %60 {offsets = [0, 64], sizes = [32, 8], strides = [1, 1]} : vector<32x96xf32> to vector<32x8xf32>
    %64 = arith.truncf %61 : vector<32x8xf32> to vector<32x8xbf16>
    %65 = arith.truncf %62 : vector<32x8xf32> to vector<32x8xbf16>
    %cst_36 = arith.constant dense<0.000000e+00> : vector<32x32xf32>
    %66 = tpu.matmul %64, %65, %cst_36 {dimension_numbers = #tpu.dot_dimension_numbers<[1], [1], [0], [0], [0, 0, 1, 0], [], []>} : vector<32x8xbf16>, vector<32x8xbf16>, vector<32x32xf32> -> vector<32x32xf32>
    %cst_37 = arith.constant 0.353553385 : f32
    %67 = vector.broadcast %cst_37 : f32 to vector<32x32xf32>
    %68 = arith.mulf %66, %67 : vector<32x32xf32>
    %69 = arith.addf %68, %50 : vector<32x32xf32>
    %cst_38 = arith.constant dense<0xFF800000> : vector<32xf32>
    %70 = vector.multi_reduction <maximumf>, %69, %cst_38 [1] : vector<32x32xf32> to vector<32xf32>
    %71 = vector.shape_cast %70 : vector<32xf32> to vector<32x1xf32>
    %72 = vector.broadcast %71 : vector<32x1xf32> to vector<32x32xf32>
    %73 = arith.subf %69, %72 : vector<32x32xf32>
    %74 = math.exp %73 : vector<32x32xf32>
    %cst_39 = arith.constant dense<0.000000e+00> : vector<32xf32>
    %75 = vector.multi_reduction <add>, %74, %cst_39 [1] : vector<32x32xf32> to vector<32xf32>
    %76 = vector.shape_cast %75 : vector<32xf32> to vector<32x1xf32>
    %77 = tpu.reciprocal %76 {approx = true} : vector<32x1xf32> -> vector<32x1xf32>
    %78 = vector.broadcast %77 : vector<32x1xf32> to vector<32x32xf32>
    %79 = arith.mulf %74, %78 : vector<32x32xf32>
    %80 = arith.truncf %79 : vector<32x32xf32> to vector<32x32xbf16>
    %81 = arith.truncf %63 : vector<32x8xf32> to vector<32x8xbf16>
    %cst_40 = arith.constant dense<0.000000e+00> : vector<32x8xf32>
    %82 = tpu.matmul %80, %81, %cst_40 {dimension_numbers = #tpu.dot_dimension_numbers<[1], [0], [0], [1], [0, 0, 1, 1], [], []>} : vector<32x32xbf16>, vector<32x8xbf16>, vector<32x8xf32> -> vector<32x8xf32>
    %83 = vector.extract_strided_slice %60 {offsets = [0, 8], sizes = [32, 8], strides = [1, 1]} : vector<32x96xf32> to vector<32x8xf32>
    %84 = vector.extract_strided_slice %60 {offsets = [0, 40], sizes = [32, 8], strides = [1, 1]} : vector<32x96xf32> to vector<32x8xf32>
    %85 = vector.extract_strided_slice %60 {offsets = [0, 72], sizes = [32, 8], strides = [1, 1]} : vector<32x96xf32> to vector<32x8xf32>
    %86 = arith.truncf %83 : vector<32x8xf32> to vector<32x8xbf16>
    %87 = arith.truncf %84 : vector<32x8xf32> to vector<32x8xbf16>
    %cst_41 = arith.constant dense<0.000000e+00> : vector<32x32xf32>
    %88 = tpu.matmul %86, %87, %cst_41 {dimension_numbers = #tpu.dot_dimension_numbers<[1], [1], [0], [0], [0, 0, 1, 0], [], []>} : vector<32x8xbf16>, vector<32x8xbf16>, vector<32x32xf32> -> vector<32x32xf32>
    %cst_42 = arith.constant 0.353553385 : f32
    %89 = vector.broadcast %cst_42 : f32 to vector<32x32xf32>
    %90 = arith.mulf %88, %89 : vector<32x32xf32>
    %91 = arith.addf %90, %50 : vector<32x32xf32>
    %cst_43 = arith.constant dense<0xFF800000> : vector<32xf32>
    %92 = vector.multi_reduction <maximumf>, %91, %cst_43 [1] : vector<32x32xf32> to vector<32xf32>
    %93 = vector.shape_cast %92 : vector<32xf32> to vector<32x1xf32>
    %94 = vector.broadcast %93 : vector<32x1xf32> to vector<32x32xf32>
    %95 = arith.subf %91, %94 : vector<32x32xf32>
    %96 = math.exp %95 : vector<32x32xf32>
    %cst_44 = arith.constant dense<0.000000e+00> : vector<32xf32>
    %97 = vector.multi_reduction <add>, %96, %cst_44 [1] : vector<32x32xf32> to vector<32xf32>
    %98 = vector.shape_cast %97 : vector<32xf32> to vector<32x1xf32>
    %99 = tpu.reciprocal %98 {approx = true} : vector<32x1xf32> -> vector<32x1xf32>
    %100 = vector.broadcast %99 : vector<32x1xf32> to vector<32x32xf32>
    %101 = arith.mulf %96, %100 : vector<32x32xf32>
    %102 = arith.truncf %101 : vector<32x32xf32> to vector<32x32xbf16>
    %103 = arith.truncf %85 : vector<32x8xf32> to vector<32x8xbf16>
    %cst_45 = arith.constant dense<0.000000e+00> : vector<32x8xf32>
    %104 = tpu.matmul %102, %103, %cst_45 {dimension_numbers = #tpu.dot_dimension_numbers<[1], [0], [0], [1], [0, 0, 1, 1], [], []>} : vector<32x32xbf16>, vector<32x8xbf16>, vector<32x8xf32> -> vector<32x8xf32>
    %105 = vector.extract_strided_slice %60 {offsets = [0, 16], sizes = [32, 8], strides = [1, 1]} : vector<32x96xf32> to vector<32x8xf32>
    %106 = vector.extract_strided_slice %60 {offsets = [0, 48], sizes = [32, 8], strides = [1, 1]} : vector<32x96xf32> to vector<32x8xf32>
    %107 = vector.extract_strided_slice %60 {offsets = [0, 80], sizes = [32, 8], strides = [1, 1]} : vector<32x96xf32> to vector<32x8xf32>
    %108 = arith.truncf %105 : vector<32x8xf32> to vector<32x8xbf16>
    %109 = arith.truncf %106 : vector<32x8xf32> to vector<32x8xbf16>
    %cst_46 = arith.constant dense<0.000000e+00> : vector<32x32xf32>
    %110 = tpu.matmul %108, %109, %cst_46 {dimension_numbers = #tpu.dot_dimension_numbers<[1], [1], [0], [0], [0, 0, 1, 0], [], []>} : vector<32x8xbf16>, vector<32x8xbf16>, vector<32x32xf32> -> vector<32x32xf32>
    %cst_47 = arith.constant 0.353553385 : f32
    %111 = vector.broadcast %cst_47 : f32 to vector<32x32xf32>
    %112 = arith.mulf %110, %111 : vector<32x32xf32>
    %113 = arith.addf %112, %50 : vector<32x32xf32>
    %cst_48 = arith.constant dense<0xFF800000> : vector<32xf32>
    %114 = vector.multi_reduction <maximumf>, %113, %cst_48 [1] : vector<32x32xf32> to vector<32xf32>
    %115 = vector.shape_cast %114 : vector<32xf32> to vector<32x1xf32>
    %116 = vector.broadcast %115 : vector<32x1xf32> to vector<32x32xf32>
    %117 = arith.subf %113, %116 : vector<32x32xf32>
    %118 = math.exp %117 : vector<32x32xf32>
    %cst_49 = arith.constant dense<0.000000e+00> : vector<32xf32>
    %119 = vector.multi_reduction <add>, %118, %cst_49 [1] : vector<32x32xf32> to vector<32xf32>
    %120 = vector.shape_cast %119 : vector<32xf32> to vector<32x1xf32>
    %121 = tpu.reciprocal %120 {approx = true} : vector<32x1xf32> -> vector<32x1xf32>
    %122 = vector.broadcast %121 : vector<32x1xf32> to vector<32x32xf32>
    %123 = arith.mulf %118, %122 : vector<32x32xf32>
    %124 = arith.truncf %123 : vector<32x32xf32> to vector<32x32xbf16>
    %125 = arith.truncf %107 : vector<32x8xf32> to vector<32x8xbf16>
    %cst_50 = arith.constant dense<0.000000e+00> : vector<32x8xf32>
    %126 = tpu.matmul %124, %125, %cst_50 {dimension_numbers = #tpu.dot_dimension_numbers<[1], [0], [0], [1], [0, 0, 1, 1], [], []>} : vector<32x32xbf16>, vector<32x8xbf16>, vector<32x8xf32> -> vector<32x8xf32>
    %127 = vector.extract_strided_slice %60 {offsets = [0, 24], sizes = [32, 8], strides = [1, 1]} : vector<32x96xf32> to vector<32x8xf32>
    %128 = vector.extract_strided_slice %60 {offsets = [0, 56], sizes = [32, 8], strides = [1, 1]} : vector<32x96xf32> to vector<32x8xf32>
    %129 = vector.extract_strided_slice %60 {offsets = [0, 88], sizes = [32, 8], strides = [1, 1]} : vector<32x96xf32> to vector<32x8xf32>
    %130 = arith.truncf %127 : vector<32x8xf32> to vector<32x8xbf16>
    %131 = arith.truncf %128 : vector<32x8xf32> to vector<32x8xbf16>
    %cst_51 = arith.constant dense<0.000000e+00> : vector<32x32xf32>
    %132 = tpu.matmul %130, %131, %cst_51 {dimension_numbers = #tpu.dot_dimension_numbers<[1], [1], [0], [0], [0, 0, 1, 0], [], []>} : vector<32x8xbf16>, vector<32x8xbf16>, vector<32x32xf32> -> vector<32x32xf32>
    %cst_52 = arith.constant 0.353553385 : f32
    %133 = vector.broadcast %cst_52 : f32 to vector<32x32xf32>
    %134 = arith.mulf %132, %133 : vector<32x32xf32>
    %135 = arith.addf %134, %50 : vector<32x32xf32>
    %cst_53 = arith.constant dense<0xFF800000> : vector<32xf32>
    %136 = vector.multi_reduction <maximumf>, %135, %cst_53 [1] : vector<32x32xf32> to vector<32xf32>
    %137 = vector.shape_cast %136 : vector<32xf32> to vector<32x1xf32>
    %138 = vector.broadcast %137 : vector<32x1xf32> to vector<32x32xf32>
    %139 = arith.subf %135, %138 : vector<32x32xf32>
    %140 = math.exp %139 : vector<32x32xf32>
    %cst_54 = arith.constant dense<0.000000e+00> : vector<32xf32>
    %141 = vector.multi_reduction <add>, %140, %cst_54 [1] : vector<32x32xf32> to vector<32xf32>
    %142 = vector.shape_cast %141 : vector<32xf32> to vector<32x1xf32>
    %143 = tpu.reciprocal %142 {approx = true} : vector<32x1xf32> -> vector<32x1xf32>
    %144 = vector.broadcast %143 : vector<32x1xf32> to vector<32x32xf32>
    %145 = arith.mulf %140, %144 : vector<32x32xf32>
    %146 = arith.truncf %145 : vector<32x32xf32> to vector<32x32xbf16>
    %147 = arith.truncf %129 : vector<32x8xf32> to vector<32x8xbf16>
    %cst_55 = arith.constant dense<0.000000e+00> : vector<32x8xf32>
    %148 = tpu.matmul %146, %147, %cst_55 {dimension_numbers = #tpu.dot_dimension_numbers<[1], [0], [0], [1], [0, 0, 1, 1], [], []>} : vector<32x32xbf16>, vector<32x8xbf16>, vector<32x8xf32> -> vector<32x8xf32>
    %149 = tpu.concatenate %82, %104, %126, %148 in 1 : vector<32x8xf32>, vector<32x8xf32>, vector<32x8xf32>, vector<32x8xf32> -> vector<32x32xf32>
    %c0_56 = arith.constant 0 : index
    %c0_57 = arith.constant 0 : index
    %c0_58 = arith.constant 0 : index
    %150 = vector.load %arg11[%c0_56, %c0_57, %c0_58] : memref<2x32x32xbf16, #tpu.memory_space<vmem>>, vector<1x32x32xbf16>
    %151 = vector.shape_cast %150 : vector<1x32x32xbf16> to vector<32x32xbf16>
    %152 = arith.truncf %149 : vector<32x32xf32> to vector<32x32xbf16>
    %cst_59 = arith.constant dense<0.000000e+00> : vector<32x32xf32>
    %153 = tpu.matmul %152, %151, %cst_59 {dimension_numbers = #tpu.dot_dimension_numbers<[1], [0], [0], [1], [0, 0, 1, 1], [], []>} : vector<32x32xbf16>, vector<32x32xbf16>, vector<32x32xf32> -> vector<32x32xf32>
    %154 = vector.extract_strided_slice %52 {offsets = [0, 0], sizes = [1, 32], strides = [1, 1]} : vector<6x32xf32> to vector<1x32xf32>
    %155 = vector.broadcast %154 : vector<1x32xf32> to vector<32x32xf32>
    %156 = arith.addf %153, %155 : vector<32x32xf32>
    %157 = arith.addf %41, %156 : vector<32x32xf32>
    %158 = vector.extract_strided_slice %52 {offsets = [2, 0], sizes = [1, 32], strides = [1, 1]} : vector<6x32xf32> to vector<1x32xf32>
    %159 = vector.extract_strided_slice %52 {offsets = [3, 0], sizes = [1, 32], strides = [1, 1]} : vector<6x32xf32> to vector<1x32xf32>
    %cst_60 = arith.constant dense<0.000000e+00> : vector<32xf32>
    %160 = vector.multi_reduction <add>, %157, %cst_60 [1] : vector<32x32xf32> to vector<32xf32>
    %161 = vector.shape_cast %160 : vector<32xf32> to vector<32x1xf32>
    %cst_61 = arith.constant 3.200000e+01 : f32
    %162 = vector.broadcast %cst_61 : f32 to vector<32x1xf32>
    %163 = arith.divf %161, %162 : vector<32x1xf32>
    %164 = vector.broadcast %163 : vector<32x1xf32> to vector<32x32xf32>
    %165 = arith.subf %157, %164 : vector<32x32xf32>
    %166 = arith.mulf %165, %165 : vector<32x32xf32>
    %cst_62 = arith.constant dense<0.000000e+00> : vector<32xf32>
    %167 = vector.multi_reduction <add>, %166, %cst_62 [1] : vector<32x32xf32> to vector<32xf32>
    %168 = vector.shape_cast %167 : vector<32xf32> to vector<32x1xf32>
    %cst_63 = arith.constant 3.200000e+01 : f32
    %169 = vector.broadcast %cst_63 : f32 to vector<32x1xf32>
    %170 = arith.divf %168, %169 : vector<32x1xf32>
    %171 = vector.broadcast %163 : vector<32x1xf32> to vector<32x32xf32>
    %172 = arith.subf %157, %171 : vector<32x32xf32>
    %cst_64 = arith.constant 9.99999996E-13 : f32
    %173 = vector.broadcast %cst_64 : f32 to vector<32x1xf32>
    %174 = arith.addf %170, %173 : vector<32x1xf32>
    %175 = math.rsqrt %174 : vector<32x1xf32>
    %176 = vector.broadcast %175 : vector<32x1xf32> to vector<32x32xf32>
    %177 = arith.mulf %172, %176 : vector<32x32xf32>
    %178 = vector.broadcast %158 : vector<1x32xf32> to vector<32x32xf32>
    %179 = arith.mulf %177, %178 : vector<32x32xf32>
    %180 = vector.broadcast %159 : vector<1x32xf32> to vector<32x32xf32>
    %181 = arith.addf %179, %180 : vector<32x32xf32>
    %c0_65 = arith.constant 0 : index
    %c0_66 = arith.constant 0 : index
    %c0_67 = arith.constant 0 : index
    %182 = vector.load %arg12[%c0_65, %c0_66, %c0_67] : memref<2x32x64xbf16, #tpu.memory_space<vmem>>, vector<1x32x64xbf16>
    %183 = vector.shape_cast %182 : vector<1x32x64xbf16> to vector<32x64xbf16>
    %184 = arith.truncf %181 : vector<32x32xf32> to vector<32x32xbf16>
    %cst_68 = arith.constant dense<0.000000e+00> : vector<32x64xf32>
    %185 = tpu.matmul %184, %183, %cst_68 {dimension_numbers = #tpu.dot_dimension_numbers<[1], [0], [0], [1], [0, 0, 1, 1], [], []>} : vector<32x32xbf16>, vector<32x64xbf16>, vector<32x64xf32> -> vector<32x64xf32>
    %c0_69 = arith.constant 0 : index
    %c0_70 = arith.constant 0 : index
    %c0_71 = arith.constant 0 : index
    %186 = vector.load %arg13[%c0_69, %c0_70, %c0_71] : memref<2x1x64xf32, #tpu.memory_space<vmem>>, vector<1x1x64xf32>
    %187 = vector.shape_cast %186 : vector<1x1x64xf32> to vector<1x64xf32>
    %188 = vector.broadcast %187 : vector<1x64xf32> to vector<32x64xf32>
    %189 = arith.addf %185, %188 : vector<32x64xf32>
    %cst_72 = arith.constant 5.000000e-01 : f32
    %190 = vector.broadcast %cst_72 : f32 to vector<32x64xf32>
    %191 = arith.mulf %190, %189 : vector<32x64xf32>
    %cst_73 = arith.constant 0.707106769 : f32
    %192 = vector.broadcast %cst_73 : f32 to vector<32x64xf32>
    %193 = arith.mulf %189, %192 : vector<32x64xf32>
    %194 = math.erf %193 : vector<32x64xf32>
    %cst_74 = arith.constant 1.000000e+00 : f32
    %195 = vector.broadcast %cst_74 : f32 to vector<32x64xf32>
    %196 = arith.addf %195, %194 : vector<32x64xf32>
    %197 = arith.mulf %191, %196 : vector<32x64xf32>
    %c0_75 = arith.constant 0 : index
    %c0_76 = arith.constant 0 : index
    %c0_77 = arith.constant 0 : index
    %198 = vector.load %arg14[%c0_75, %c0_76, %c0_77] : memref<2x64x32xbf16, #tpu.memory_space<vmem>>, vector<1x64x32xbf16>
    %199 = vector.shape_cast %198 : vector<1x64x32xbf16> to vector<64x32xbf16>
    %200 = arith.truncf %197 : vector<32x64xf32> to vector<32x64xbf16>
    %cst_78 = arith.constant dense<0.000000e+00> : vector<32x32xf32>
    %201 = tpu.matmul %200, %199, %cst_78 {dimension_numbers = #tpu.dot_dimension_numbers<[1], [0], [0], [1], [0, 0, 1, 1], [], []>} : vector<32x64xbf16>, vector<64x32xbf16>, vector<32x32xf32> -> vector<32x32xf32>
    %202 = vector.extract_strided_slice %52 {offsets = [1, 0], sizes = [1, 32], strides = [1, 1]} : vector<6x32xf32> to vector<1x32xf32>
    %203 = vector.broadcast %202 : vector<1x32xf32> to vector<32x32xf32>
    %204 = arith.addf %201, %203 : vector<32x32xf32>
    %205 = arith.addf %181, %204 : vector<32x32xf32>
    %206 = vector.extract_strided_slice %52 {offsets = [4, 0], sizes = [1, 32], strides = [1, 1]} : vector<6x32xf32> to vector<1x32xf32>
    %207 = vector.extract_strided_slice %52 {offsets = [5, 0], sizes = [1, 32], strides = [1, 1]} : vector<6x32xf32> to vector<1x32xf32>
    %cst_79 = arith.constant dense<0.000000e+00> : vector<32xf32>
    %208 = vector.multi_reduction <add>, %205, %cst_79 [1] : vector<32x32xf32> to vector<32xf32>
    %209 = vector.shape_cast %208 : vector<32xf32> to vector<32x1xf32>
    %cst_80 = arith.constant 3.200000e+01 : f32
    %210 = vector.broadcast %cst_80 : f32 to vector<32x1xf32>
    %211 = arith.divf %209, %210 : vector<32x1xf32>
    %212 = vector.broadcast %211 : vector<32x1xf32> to vector<32x32xf32>
    %213 = arith.subf %205, %212 : vector<32x32xf32>
    %214 = arith.mulf %213, %213 : vector<32x32xf32>
    %cst_81 = arith.constant dense<0.000000e+00> : vector<32xf32>
    %215 = vector.multi_reduction <add>, %214, %cst_81 [1] : vector<32x32xf32> to vector<32xf32>
    %216 = vector.shape_cast %215 : vector<32xf32> to vector<32x1xf32>
    %cst_82 = arith.constant 3.200000e+01 : f32
    %217 = vector.broadcast %cst_82 : f32 to vector<32x1xf32>
    %218 = arith.divf %216, %217 : vector<32x1xf32>
    %219 = vector.broadcast %211 : vector<32x1xf32> to vector<32x32xf32>
    %220 = arith.subf %205, %219 : vector<32x32xf32>
    %cst_83 = arith.constant 9.99999996E-13 : f32
    %221 = vector.broadcast %cst_83 : f32 to vector<32x1xf32>
    %222 = arith.addf %218, %221 : vector<32x1xf32>
    %223 = math.rsqrt %222 : vector<32x1xf32>
    %224 = vector.broadcast %223 : vector<32x1xf32> to vector<32x32xf32>
    %225 = arith.mulf %220, %224 : vector<32x32xf32>
    %226 = vector.broadcast %206 : vector<1x32xf32> to vector<32x32xf32>
    %227 = arith.mulf %225, %226 : vector<32x32xf32>
    %228 = vector.broadcast %207 : vector<1x32xf32> to vector<32x32xf32>
    %229 = arith.addf %227, %228 : vector<32x32xf32>
    %c1_84 = arith.constant 1 : index
    %c0_85 = arith.constant 0 : index
    %c0_86 = arith.constant 0 : index
    %230 = vector.load %arg15[%c1_84, %c0_85, %c0_86] : memref<2x6x32xf32, #tpu.memory_space<vmem>>, vector<1x6x32xf32>
    %231 = vector.shape_cast %230 : vector<1x6x32xf32> to vector<6x32xf32>
    %c1_87 = arith.constant 1 : index
    %c0_88 = arith.constant 0 : index
    %c0_89 = arith.constant 0 : index
    %232 = vector.load %arg9[%c1_87, %c0_88, %c0_89] : memref<2x32x96xbf16, #tpu.memory_space<vmem>>, vector<1x32x96xbf16>
    %233 = vector.shape_cast %232 : vector<1x32x96xbf16> to vector<32x96xbf16>
    %234 = arith.truncf %229 : vector<32x32xf32> to vector<32x32xbf16>
    %cst_90 = arith.constant dense<0.000000e+00> : vector<32x96xf32>
    %235 = tpu.matmul %234, %233, %cst_90 {dimension_numbers = #tpu.dot_dimension_numbers<[1], [0], [0], [1], [0, 0, 1, 1], [], []>} : vector<32x32xbf16>, vector<32x96xbf16>, vector<32x96xf32> -> vector<32x96xf32>
    %c1_91 = arith.constant 1 : index
    %c0_92 = arith.constant 0 : index
    %c0_93 = arith.constant 0 : index
    %236 = vector.load %arg10[%c1_91, %c0_92, %c0_93] : memref<2x1x96xf32, #tpu.memory_space<vmem>>, vector<1x1x96xf32>
    %237 = vector.shape_cast %236 : vector<1x1x96xf32> to vector<1x96xf32>
    %238 = vector.broadcast %237 : vector<1x96xf32> to vector<32x96xf32>
    %239 = arith.addf %235, %238 : vector<32x96xf32>
    %240 = vector.extract_strided_slice %239 {offsets = [0, 0], sizes = [32, 8], strides = [1, 1]} : vector<32x96xf32> to vector<32x8xf32>
    %241 = vector.extract_strided_slice %239 {offsets = [0, 32], sizes = [32, 8], strides = [1, 1]} : vector<32x96xf32> to vector<32x8xf32>
    %242 = vector.extract_strided_slice %239 {offsets = [0, 64], sizes = [32, 8], strides = [1, 1]} : vector<32x96xf32> to vector<32x8xf32>
    %243 = arith.truncf %240 : vector<32x8xf32> to vector<32x8xbf16>
    %244 = arith.truncf %241 : vector<32x8xf32> to vector<32x8xbf16>
    %cst_94 = arith.constant dense<0.000000e+00> : vector<32x32xf32>
    %245 = tpu.matmul %243, %244, %cst_94 {dimension_numbers = #tpu.dot_dimension_numbers<[1], [1], [0], [0], [0, 0, 1, 0], [], []>} : vector<32x8xbf16>, vector<32x8xbf16>, vector<32x32xf32> -> vector<32x32xf32>
    %cst_95 = arith.constant 0.353553385 : f32
    %246 = vector.broadcast %cst_95 : f32 to vector<32x32xf32>
    %247 = arith.mulf %245, %246 : vector<32x32xf32>
    %248 = arith.addf %247, %50 : vector<32x32xf32>
    %cst_96 = arith.constant dense<0xFF800000> : vector<32xf32>
    %249 = vector.multi_reduction <maximumf>, %248, %cst_96 [1] : vector<32x32xf32> to vector<32xf32>
    %250 = vector.shape_cast %249 : vector<32xf32> to vector<32x1xf32>
    %251 = vector.broadcast %250 : vector<32x1xf32> to vector<32x32xf32>
    %252 = arith.subf %248, %251 : vector<32x32xf32>
    %253 = math.exp %252 : vector<32x32xf32>
    %cst_97 = arith.constant dense<0.000000e+00> : vector<32xf32>
    %254 = vector.multi_reduction <add>, %253, %cst_97 [1] : vector<32x32xf32> to vector<32xf32>
    %255 = vector.shape_cast %254 : vector<32xf32> to vector<32x1xf32>
    %256 = tpu.reciprocal %255 {approx = true} : vector<32x1xf32> -> vector<32x1xf32>
    %257 = vector.broadcast %256 : vector<32x1xf32> to vector<32x32xf32>
    %258 = arith.mulf %253, %257 : vector<32x32xf32>
    %259 = arith.truncf %258 : vector<32x32xf32> to vector<32x32xbf16>
    %260 = arith.truncf %242 : vector<32x8xf32> to vector<32x8xbf16>
    %cst_98 = arith.constant dense<0.000000e+00> : vector<32x8xf32>
    %261 = tpu.matmul %259, %260, %cst_98 {dimension_numbers = #tpu.dot_dimension_numbers<[1], [0], [0], [1], [0, 0, 1, 1], [], []>} : vector<32x32xbf16>, vector<32x8xbf16>, vector<32x8xf32> -> vector<32x8xf32>
    %262 = vector.extract_strided_slice %239 {offsets = [0, 8], sizes = [32, 8], strides = [1, 1]} : vector<32x96xf32> to vector<32x8xf32>
    %263 = vector.extract_strided_slice %239 {offsets = [0, 40], sizes = [32, 8], strides = [1, 1]} : vector<32x96xf32> to vector<32x8xf32>
    %264 = vector.extract_strided_slice %239 {offsets = [0, 72], sizes = [32, 8], strides = [1, 1]} : vector<32x96xf32> to vector<32x8xf32>
    %265 = arith.truncf %262 : vector<32x8xf32> to vector<32x8xbf16>
    %266 = arith.truncf %263 : vector<32x8xf32> to vector<32x8xbf16>
    %cst_99 = arith.constant dense<0.000000e+00> : vector<32x32xf32>
    %267 = tpu.matmul %265, %266, %cst_99 {dimension_numbers = #tpu.dot_dimension_numbers<[1], [1], [0], [0], [0, 0, 1, 0], [], []>} : vector<32x8xbf16>, vector<32x8xbf16>, vector<32x32xf32> -> vector<32x32xf32>
    %cst_100 = arith.constant 0.353553385 : f32
    %268 = vector.broadcast %cst_100 : f32 to vector<32x32xf32>
    %269 = arith.mulf %267, %268 : vector<32x32xf32>
    %270 = arith.addf %269, %50 : vector<32x32xf32>
    %cst_101 = arith.constant dense<0xFF800000> : vector<32xf32>
    %271 = vector.multi_reduction <maximumf>, %270, %cst_101 [1] : vector<32x32xf32> to vector<32xf32>
    %272 = vector.shape_cast %271 : vector<32xf32> to vector<32x1xf32>
    %273 = vector.broadcast %272 : vector<32x1xf32> to vector<32x32xf32>
    %274 = arith.subf %270, %273 : vector<32x32xf32>
    %275 = math.exp %274 : vector<32x32xf32>
    %cst_102 = arith.constant dense<0.000000e+00> : vector<32xf32>
    %276 = vector.multi_reduction <add>, %275, %cst_102 [1] : vector<32x32xf32> to vector<32xf32>
    %277 = vector.shape_cast %276 : vector<32xf32> to vector<32x1xf32>
    %278 = tpu.reciprocal %277 {approx = true} : vector<32x1xf32> -> vector<32x1xf32>
    %279 = vector.broadcast %278 : vector<32x1xf32> to vector<32x32xf32>
    %280 = arith.mulf %275, %279 : vector<32x32xf32>
    %281 = arith.truncf %280 : vector<32x32xf32> to vector<32x32xbf16>
    %282 = arith.truncf %264 : vector<32x8xf32> to vector<32x8xbf16>
    %cst_103 = arith.constant dense<0.000000e+00> : vector<32x8xf32>
    %283 = tpu.matmul %281, %282, %cst_103 {dimension_numbers = #tpu.dot_dimension_numbers<[1], [0], [0], [1], [0, 0, 1, 1], [], []>} : vector<32x32xbf16>, vector<32x8xbf16>, vector<32x8xf32> -> vector<32x8xf32>
    %284 = vector.extract_strided_slice %239 {offsets = [0, 16], sizes = [32, 8], strides = [1, 1]} : vector<32x96xf32> to vector<32x8xf32>
    %285 = vector.extract_strided_slice %239 {offsets = [0, 48], sizes = [32, 8], strides = [1, 1]} : vector<32x96xf32> to vector<32x8xf32>
    %286 = vector.extract_strided_slice %239 {offsets = [0, 80], sizes = [32, 8], strides = [1, 1]} : vector<32x96xf32> to vector<32x8xf32>
    %287 = arith.truncf %284 : vector<32x8xf32> to vector<32x8xbf16>
    %288 = arith.truncf %285 : vector<32x8xf32> to vector<32x8xbf16>
    %cst_104 = arith.constant dense<0.000000e+00> : vector<32x32xf32>
    %289 = tpu.matmul %287, %288, %cst_104 {dimension_numbers = #tpu.dot_dimension_numbers<[1], [1], [0], [0], [0, 0, 1, 0], [], []>} : vector<32x8xbf16>, vector<32x8xbf16>, vector<32x32xf32> -> vector<32x32xf32>
    %cst_105 = arith.constant 0.353553385 : f32
    %290 = vector.broadcast %cst_105 : f32 to vector<32x32xf32>
    %291 = arith.mulf %289, %290 : vector<32x32xf32>
    %292 = arith.addf %291, %50 : vector<32x32xf32>
    %cst_106 = arith.constant dense<0xFF800000> : vector<32xf32>
    %293 = vector.multi_reduction <maximumf>, %292, %cst_106 [1] : vector<32x32xf32> to vector<32xf32>
    %294 = vector.shape_cast %293 : vector<32xf32> to vector<32x1xf32>
    %295 = vector.broadcast %294 : vector<32x1xf32> to vector<32x32xf32>
    %296 = arith.subf %292, %295 : vector<32x32xf32>
    %297 = math.exp %296 : vector<32x32xf32>
    %cst_107 = arith.constant dense<0.000000e+00> : vector<32xf32>
    %298 = vector.multi_reduction <add>, %297, %cst_107 [1] : vector<32x32xf32> to vector<32xf32>
    %299 = vector.shape_cast %298 : vector<32xf32> to vector<32x1xf32>
    %300 = tpu.reciprocal %299 {approx = true} : vector<32x1xf32> -> vector<32x1xf32>
    %301 = vector.broadcast %300 : vector<32x1xf32> to vector<32x32xf32>
    %302 = arith.mulf %297, %301 : vector<32x32xf32>
    %303 = arith.truncf %302 : vector<32x32xf32> to vector<32x32xbf16>
    %304 = arith.truncf %286 : vector<32x8xf32> to vector<32x8xbf16>
    %cst_108 = arith.constant dense<0.000000e+00> : vector<32x8xf32>
    %305 = tpu.matmul %303, %304, %cst_108 {dimension_numbers = #tpu.dot_dimension_numbers<[1], [0], [0], [1], [0, 0, 1, 1], [], []>} : vector<32x32xbf16>, vector<32x8xbf16>, vector<32x8xf32> -> vector<32x8xf32>
    %306 = vector.extract_strided_slice %239 {offsets = [0, 24], sizes = [32, 8], strides = [1, 1]} : vector<32x96xf32> to vector<32x8xf32>
    %307 = vector.extract_strided_slice %239 {offsets = [0, 56], sizes = [32, 8], strides = [1, 1]} : vector<32x96xf32> to vector<32x8xf32>
    %308 = vector.extract_strided_slice %239 {offsets = [0, 88], sizes = [32, 8], strides = [1, 1]} : vector<32x96xf32> to vector<32x8xf32>
    %309 = arith.truncf %306 : vector<32x8xf32> to vector<32x8xbf16>
    %310 = arith.truncf %307 : vector<32x8xf32> to vector<32x8xbf16>
    %cst_109 = arith.constant dense<0.000000e+00> : vector<32x32xf32>
    %311 = tpu.matmul %309, %310, %cst_109 {dimension_numbers = #tpu.dot_dimension_numbers<[1], [1], [0], [0], [0, 0, 1, 0], [], []>} : vector<32x8xbf16>, vector<32x8xbf16>, vector<32x32xf32> -> vector<32x32xf32>
    %cst_110 = arith.constant 0.353553385 : f32
    %312 = vector.broadcast %cst_110 : f32 to vector<32x32xf32>
    %313 = arith.mulf %311, %312 : vector<32x32xf32>
    %314 = arith.addf %313, %50 : vector<32x32xf32>
    %cst_111 = arith.constant dense<0xFF800000> : vector<32xf32>
    %315 = vector.multi_reduction <maximumf>, %314, %cst_111 [1] : vector<32x32xf32> to vector<32xf32>
    %316 = vector.shape_cast %315 : vector<32xf32> to vector<32x1xf32>
    %317 = vector.broadcast %316 : vector<32x1xf32> to vector<32x32xf32>
    %318 = arith.subf %314, %317 : vector<32x32xf32>
    %319 = math.exp %318 : vector<32x32xf32>
    %cst_112 = arith.constant dense<0.000000e+00> : vector<32xf32>
    %320 = vector.multi_reduction <add>, %319, %cst_112 [1] : vector<32x32xf32> to vector<32xf32>
    %321 = vector.shape_cast %320 : vector<32xf32> to vector<32x1xf32>
    %322 = tpu.reciprocal %321 {approx = true} : vector<32x1xf32> -> vector<32x1xf32>
    %323 = vector.broadcast %322 : vector<32x1xf32> to vector<32x32xf32>
    %324 = arith.mulf %319, %323 : vector<32x32xf32>
    %325 = arith.truncf %324 : vector<32x32xf32> to vector<32x32xbf16>
    %326 = arith.truncf %308 : vector<32x8xf32> to vector<32x8xbf16>
    %cst_113 = arith.constant dense<0.000000e+00> : vector<32x8xf32>
    %327 = tpu.matmul %325, %326, %cst_113 {dimension_numbers = #tpu.dot_dimension_numbers<[1], [0], [0], [1], [0, 0, 1, 1], [], []>} : vector<32x32xbf16>, vector<32x8xbf16>, vector<32x8xf32> -> vector<32x8xf32>
    %328 = tpu.concatenate %261, %283, %305, %327 in 1 : vector<32x8xf32>, vector<32x8xf32>, vector<32x8xf32>, vector<32x8xf32> -> vector<32x32xf32>
    %c1_114 = arith.constant 1 : index
    %c0_115 = arith.constant 0 : index
    %c0_116 = arith.constant 0 : index
    %329 = vector.load %arg11[%c1_114, %c0_115, %c0_116] : memref<2x32x32xbf16, #tpu.memory_space<vmem>>, vector<1x32x32xbf16>
    %330 = vector.shape_cast %329 : vector<1x32x32xbf16> to vector<32x32xbf16>
    %331 = arith.truncf %328 : vector<32x32xf32> to vector<32x32xbf16>
    %cst_117 = arith.constant dense<0.000000e+00> : vector<32x32xf32>
    %332 = tpu.matmul %331, %330, %cst_117 {dimension_numbers = #tpu.dot_dimension_numbers<[1], [0], [0], [1], [0, 0, 1, 1], [], []>} : vector<32x32xbf16>, vector<32x32xbf16>, vector<32x32xf32> -> vector<32x32xf32>
    %333 = vector.extract_strided_slice %231 {offsets = [0, 0], sizes = [1, 32], strides = [1, 1]} : vector<6x32xf32> to vector<1x32xf32>
    %334 = vector.broadcast %333 : vector<1x32xf32> to vector<32x32xf32>
    %335 = arith.addf %332, %334 : vector<32x32xf32>
    %336 = arith.addf %229, %335 : vector<32x32xf32>
    %337 = vector.extract_strided_slice %231 {offsets = [2, 0], sizes = [1, 32], strides = [1, 1]} : vector<6x32xf32> to vector<1x32xf32>
    %338 = vector.extract_strided_slice %231 {offsets = [3, 0], sizes = [1, 32], strides = [1, 1]} : vector<6x32xf32> to vector<1x32xf32>
    %cst_118 = arith.constant dense<0.000000e+00> : vector<32xf32>
    %339 = vector.multi_reduction <add>, %336, %cst_118 [1] : vector<32x32xf32> to vector<32xf32>
    %340 = vector.shape_cast %339 : vector<32xf32> to vector<32x1xf32>
    %cst_119 = arith.constant 3.200000e+01 : f32
    %341 = vector.broadcast %cst_119 : f32 to vector<32x1xf32>
    %342 = arith.divf %340, %341 : vector<32x1xf32>
    %343 = vector.broadcast %342 : vector<32x1xf32> to vector<32x32xf32>
    %344 = arith.subf %336, %343 : vector<32x32xf32>
    %345 = arith.mulf %344, %344 : vector<32x32xf32>
    %cst_120 = arith.constant dense<0.000000e+00> : vector<32xf32>
    %346 = vector.multi_reduction <add>, %345, %cst_120 [1] : vector<32x32xf32> to vector<32xf32>
    %347 = vector.shape_cast %346 : vector<32xf32> to vector<32x1xf32>
    %cst_121 = arith.constant 3.200000e+01 : f32
    %348 = vector.broadcast %cst_121 : f32 to vector<32x1xf32>
    %349 = arith.divf %347, %348 : vector<32x1xf32>
    %350 = vector.broadcast %342 : vector<32x1xf32> to vector<32x32xf32>
    %351 = arith.subf %336, %350 : vector<32x32xf32>
    %cst_122 = arith.constant 9.99999996E-13 : f32
    %352 = vector.broadcast %cst_122 : f32 to vector<32x1xf32>
    %353 = arith.addf %349, %352 : vector<32x1xf32>
    %354 = math.rsqrt %353 : vector<32x1xf32>
    %355 = vector.broadcast %354 : vector<32x1xf32> to vector<32x32xf32>
    %356 = arith.mulf %351, %355 : vector<32x32xf32>
    %357 = vector.broadcast %337 : vector<1x32xf32> to vector<32x32xf32>
    %358 = arith.mulf %356, %357 : vector<32x32xf32>
    %359 = vector.broadcast %338 : vector<1x32xf32> to vector<32x32xf32>
    %360 = arith.addf %358, %359 : vector<32x32xf32>
    %c1_123 = arith.constant 1 : index
    %c0_124 = arith.constant 0 : index
    %c0_125 = arith.constant 0 : index
    %361 = vector.load %arg12[%c1_123, %c0_124, %c0_125] : memref<2x32x64xbf16, #tpu.memory_space<vmem>>, vector<1x32x64xbf16>
    %362 = vector.shape_cast %361 : vector<1x32x64xbf16> to vector<32x64xbf16>
    %363 = arith.truncf %360 : vector<32x32xf32> to vector<32x32xbf16>
    %cst_126 = arith.constant dense<0.000000e+00> : vector<32x64xf32>
    %364 = tpu.matmul %363, %362, %cst_126 {dimension_numbers = #tpu.dot_dimension_numbers<[1], [0], [0], [1], [0, 0, 1, 1], [], []>} : vector<32x32xbf16>, vector<32x64xbf16>, vector<32x64xf32> -> vector<32x64xf32>
    %c1_127 = arith.constant 1 : index
    %c0_128 = arith.constant 0 : index
    %c0_129 = arith.constant 0 : index
    %365 = vector.load %arg13[%c1_127, %c0_128, %c0_129] : memref<2x1x64xf32, #tpu.memory_space<vmem>>, vector<1x1x64xf32>
    %366 = vector.shape_cast %365 : vector<1x1x64xf32> to vector<1x64xf32>
    %367 = vector.broadcast %366 : vector<1x64xf32> to vector<32x64xf32>
    %368 = arith.addf %364, %367 : vector<32x64xf32>
    %cst_130 = arith.constant 5.000000e-01 : f32
    %369 = vector.broadcast %cst_130 : f32 to vector<32x64xf32>
    %370 = arith.mulf %369, %368 : vector<32x64xf32>
    %cst_131 = arith.constant 0.707106769 : f32
    %371 = vector.broadcast %cst_131 : f32 to vector<32x64xf32>
    %372 = arith.mulf %368, %371 : vector<32x64xf32>
    %373 = math.erf %372 : vector<32x64xf32>
    %cst_132 = arith.constant 1.000000e+00 : f32
    %374 = vector.broadcast %cst_132 : f32 to vector<32x64xf32>
    %375 = arith.addf %374, %373 : vector<32x64xf32>
    %376 = arith.mulf %370, %375 : vector<32x64xf32>
    %c1_133 = arith.constant 1 : index
    %c0_134 = arith.constant 0 : index
    %c0_135 = arith.constant 0 : index
    %377 = vector.load %arg14[%c1_133, %c0_134, %c0_135] : memref<2x64x32xbf16, #tpu.memory_space<vmem>>, vector<1x64x32xbf16>
    %378 = vector.shape_cast %377 : vector<1x64x32xbf16> to vector<64x32xbf16>
    %379 = arith.truncf %376 : vector<32x64xf32> to vector<32x64xbf16>
    %cst_136 = arith.constant dense<0.000000e+00> : vector<32x32xf32>
    %380 = tpu.matmul %379, %378, %cst_136 {dimension_numbers = #tpu.dot_dimension_numbers<[1], [0], [0], [1], [0, 0, 1, 1], [], []>} : vector<32x64xbf16>, vector<64x32xbf16>, vector<32x32xf32> -> vector<32x32xf32>
    %381 = vector.extract_strided_slice %231 {offsets = [1, 0], sizes = [1, 32], strides = [1, 1]} : vector<6x32xf32> to vector<1x32xf32>
    %382 = vector.broadcast %381 : vector<1x32xf32> to vector<32x32xf32>
    %383 = arith.addf %380, %382 : vector<32x32xf32>
    %384 = arith.addf %360, %383 : vector<32x32xf32>
    %385 = vector.extract_strided_slice %231 {offsets = [4, 0], sizes = [1, 32], strides = [1, 1]} : vector<6x32xf32> to vector<1x32xf32>
    %386 = vector.extract_strided_slice %231 {offsets = [5, 0], sizes = [1, 32], strides = [1, 1]} : vector<6x32xf32> to vector<1x32xf32>
    %cst_137 = arith.constant dense<0.000000e+00> : vector<32xf32>
    %387 = vector.multi_reduction <add>, %384, %cst_137 [1] : vector<32x32xf32> to vector<32xf32>
    %388 = vector.shape_cast %387 : vector<32xf32> to vector<32x1xf32>
    %cst_138 = arith.constant 3.200000e+01 : f32
    %389 = vector.broadcast %cst_138 : f32 to vector<32x1xf32>
    %390 = arith.divf %388, %389 : vector<32x1xf32>
    %391 = vector.broadcast %390 : vector<32x1xf32> to vector<32x32xf32>
    %392 = arith.subf %384, %391 : vector<32x32xf32>
    %393 = arith.mulf %392, %392 : vector<32x32xf32>
    %cst_139 = arith.constant dense<0.000000e+00> : vector<32xf32>
    %394 = vector.multi_reduction <add>, %393, %cst_139 [1] : vector<32x32xf32> to vector<32xf32>
    %395 = vector.shape_cast %394 : vector<32xf32> to vector<32x1xf32>
    %cst_140 = arith.constant 3.200000e+01 : f32
    %396 = vector.broadcast %cst_140 : f32 to vector<32x1xf32>
    %397 = arith.divf %395, %396 : vector<32x1xf32>
    %398 = vector.broadcast %390 : vector<32x1xf32> to vector<32x32xf32>
    %399 = arith.subf %384, %398 : vector<32x32xf32>
    %cst_141 = arith.constant 9.99999996E-13 : f32
    %400 = vector.broadcast %cst_141 : f32 to vector<32x1xf32>
    %401 = arith.addf %397, %400 : vector<32x1xf32>
    %402 = math.rsqrt %401 : vector<32x1xf32>
    %403 = vector.broadcast %402 : vector<32x1xf32> to vector<32x32xf32>
    %404 = arith.mulf %399, %403 : vector<32x32xf32>
    %405 = vector.broadcast %385 : vector<1x32xf32> to vector<32x32xf32>
    %406 = arith.mulf %404, %405 : vector<32x32xf32>
    %407 = vector.broadcast %386 : vector<1x32xf32> to vector<32x32xf32>
    %408 = arith.addf %406, %407 : vector<32x32xf32>
    %409 = vector.extract_strided_slice %408 {offsets = [0, 0], sizes = [1, 32], strides = [1, 1]} : vector<32x32xf32> to vector<1x32xf32>
    %410 = vector.extract_strided_slice %408 {offsets = [8, 0], sizes = [1, 32], strides = [1, 1]} : vector<32x32xf32> to vector<1x32xf32>
    %411 = vector.extract_strided_slice %408 {offsets = [16, 0], sizes = [1, 32], strides = [1, 1]} : vector<32x32xf32> to vector<1x32xf32>
    %412 = vector.extract_strided_slice %408 {offsets = [24, 0], sizes = [1, 32], strides = [1, 1]} : vector<32x32xf32> to vector<1x32xf32>
    %413 = tpu.concatenate %409, %410, %411, %412 in 0 : vector<1x32xf32>, vector<1x32xf32>, vector<1x32xf32>, vector<1x32xf32> -> vector<4x32xf32>
    %c0_142 = arith.constant 0 : index
    %c0_143 = arith.constant 0 : index
    %414 = vector.load %arg16[%c0_142, %c0_143] : memref<32x32xbf16, #tpu.memory_space<vmem>>, vector<32x32xbf16>
    %415 = arith.truncf %413 : vector<4x32xf32> to vector<4x32xbf16>
    %cst_144 = arith.constant dense<0.000000e+00> : vector<4x32xf32>
    %416 = tpu.matmul %415, %414, %cst_144 {dimension_numbers = #tpu.dot_dimension_numbers<[1], [0], [0], [1], [0, 0, 1, 1], [], []>} : vector<4x32xbf16>, vector<32x32xbf16>, vector<4x32xf32> -> vector<4x32xf32>
    %c0_145 = arith.constant 0 : index
    %c0_146 = arith.constant 0 : index
    %417 = vector.load %arg17[%c0_145, %c0_146] : memref<1x32xf32, #tpu.memory_space<vmem>>, vector<1x32xf32>
    %418 = vector.broadcast %417 : vector<1x32xf32> to vector<4x32xf32>
    %419 = arith.addf %416, %418 : vector<4x32xf32>
    %cst_147 = arith.constant 5.000000e-01 : f32
    %420 = vector.broadcast %cst_147 : f32 to vector<4x32xf32>
    %421 = arith.mulf %420, %419 : vector<4x32xf32>
    %cst_148 = arith.constant 0.707106769 : f32
    %422 = vector.broadcast %cst_148 : f32 to vector<4x32xf32>
    %423 = arith.mulf %419, %422 : vector<4x32xf32>
    %424 = math.erf %423 : vector<4x32xf32>
    %cst_149 = arith.constant 1.000000e+00 : f32
    %425 = vector.broadcast %cst_149 : f32 to vector<4x32xf32>
    %426 = arith.addf %425, %424 : vector<4x32xf32>
    %427 = arith.mulf %421, %426 : vector<4x32xf32>
    %c0_150 = arith.constant 0 : index
    %c0_151 = arith.constant 0 : index
    %428 = vector.load %arg18[%c0_150, %c0_151] : memref<32x2xbf16, #tpu.memory_space<vmem>>, vector<32x2xbf16>
    %429 = arith.truncf %427 : vector<4x32xf32> to vector<4x32xbf16>
    %cst_152 = arith.constant dense<0.000000e+00> : vector<4x2xf32>
    %430 = tpu.matmul %429, %428, %cst_152 {dimension_numbers = #tpu.dot_dimension_numbers<[1], [0], [0], [1], [0, 0, 1, 1], [], []>} : vector<4x32xbf16>, vector<32x2xbf16>, vector<4x2xf32> -> vector<4x2xf32>
    %c0_153 = arith.constant 0 : index
    %c0_154 = arith.constant 0 : index
    %431 = vector.load %arg19[%c0_153, %c0_154] : memref<1x2xf32, #tpu.memory_space<vmem>>, vector<1x2xf32>
    %432 = vector.broadcast %431 : vector<1x2xf32> to vector<4x2xf32>
    %433 = arith.addf %430, %432 : vector<4x2xf32>
    %cst_155 = arith.constant dense<0xFF800000> : vector<4xf32>
    %434 = vector.multi_reduction <maximumf>, %433, %cst_155 [1] : vector<4x2xf32> to vector<4xf32>
    %435 = vector.shape_cast %434 : vector<4xf32> to vector<4x1xf32>
    %436 = vector.broadcast %435 : vector<4x1xf32> to vector<4x2xf32>
    %437 = arith.subf %433, %436 : vector<4x2xf32>
    %438 = math.exp %437 : vector<4x2xf32>
    %cst_156 = arith.constant dense<0.000000e+00> : vector<4xf32>
    %439 = vector.multi_reduction <add>, %438, %cst_156 [1] : vector<4x2xf32> to vector<4xf32>
    %440 = vector.shape_cast %439 : vector<4xf32> to vector<4x1xf32>
    %441 = vector.broadcast %440 : vector<4x1xf32> to vector<4x2xf32>
    %442 = arith.divf %438, %441 : vector<4x2xf32>
    %c0_157 = arith.constant 0 : index
    %c0_158 = arith.constant 0 : index
    %c0_159 = arith.constant 0 : index
    %443 = vector.load %arg20[%c0_157, %c0_158, %c0_159] : memref<1x4x2xf32, #tpu.memory_space<vmem>>, vector<1x4x2xf32>
    %444 = vector.shape_cast %443 : vector<1x4x2xf32> to vector<4x2xf32>
    %445 = vector.shape_cast %442 : vector<4x2xf32> to vector<1x4x2xf32>
    tpu.vector_store %arg20[%c0_157, %c0_158, %c0_159], %445 {strides = array<i32>} : memref<1x4x2xf32, #tpu.memory_space<vmem>>, vector<1x4x2xf32>,
    return
  }
  func.func @transform_0(%arg0: i32) -> (i32, i32, i32) {
    %c0_i32 = arith.constant 0 : i32
    %c0_i32_0 = arith.constant 0 : i32
    %c0_i32_1 = arith.constant 0 : i32
    return %arg0, %c0_i32, %c0_i32_0 : i32, i32, i32
  }
  func.func @transform_1(%arg0: i32) -> (i32, i32, i32) {
    %c0_i32 = arith.constant 0 : i32
    %c0_i32_0 = arith.constant 0 : i32
    %c0_i32_1 = arith.constant 0 : i32
    return %arg0, %c0_i32, %c0_i32_0 : i32, i32, i32
  }
  func.func @transform_2(%arg0: i32) -> (i32, i32) {
    %c0_i32 = arith.constant 0 : i32
    %c0_i32_0 = arith.constant 0 : i32
    %c0_i32_1 = arith.constant 0 : i32
    return %c0_i32, %c0_i32_0 : i32, i32
  }
  func.func @transform_3(%arg0: i32) -> (i32, i32) {
    %c0_i32 = arith.constant 0 : i32
    %c0_i32_0 = arith.constant 0 : i32
    %c0_i32_1 = arith.constant 0 : i32
    return %c0_i32, %c0_i32_0 : i32, i32
  }
  func.func @transform_4(%arg0: i32) -> (i32, i32) {
    %c0_i32 = arith.constant 0 : i32
    %c0_i32_0 = arith.constant 0 : i32
    %c0_i32_1 = arith.constant 0 : i32
    return %c0_i32, %c0_i32_0 : i32, i32
  }
  func.func @transform_5(%arg0: i32) -> (i32, i32) {
    %c0_i32 = arith.constant 0 : i32
    %c0_i32_0 = arith.constant 0 : i32
    %c0_i32_1 = arith.constant 0 : i32
    return %c0_i32, %c0_i32_0 : i32, i32
  }
  func.func @transform_6(%arg0: i32) -> (i32, i32) {
    %c0_i32 = arith.constant 0 : i32
    %c0_i32_0 = arith.constant 0 : i32
    %c0_i32_1 = arith.constant 0 : i32
    return %c0_i32, %c0_i32_0 : i32, i32
  }
  func.func @transform_7(%arg0: i32) -> (i32, i32) {
    %c0_i32 = arith.constant 0 : i32
    %c0_i32_0 = arith.constant 0 : i32
    %c0_i32_1 = arith.constant 0 : i32
    return %c0_i32, %c0_i32_0 : i32, i32
  }
  func.func @transform_8(%arg0: i32) -> (i32, i32, i32) {
    %c0_i32 = arith.constant 0 : i32
    %c0_i32_0 = arith.constant 0 : i32
    %c0_i32_1 = arith.constant 0 : i32
    %c0_i32_2 = arith.constant 0 : i32
    return %c0_i32, %c0_i32_0, %c0_i32_1 : i32, i32, i32
  }
  func.func @transform_9(%arg0: i32) -> (i32, i32, i32) {
    %c0_i32 = arith.constant 0 : i32
    %c0_i32_0 = arith.constant 0 : i32
    %c0_i32_1 = arith.constant 0 : i32
    %c0_i32_2 = arith.constant 0 : i32
    return %c0_i32, %c0_i32_0, %c0_i32_1 : i32, i32, i32
  }
  func.func @transform_10(%arg0: i32) -> (i32, i32, i32) {
    %c0_i32 = arith.constant 0 : i32
    %c0_i32_0 = arith.constant 0 : i32
    %c0_i32_1 = arith.constant 0 : i32
    %c0_i32_2 = arith.constant 0 : i32
    return %c0_i32, %c0_i32_0, %c0_i32_1 : i32, i32, i32
  }
  func.func @transform_11(%arg0: i32) -> (i32, i32, i32) {
    %c0_i32 = arith.constant 0 : i32
    %c0_i32_0 = arith.constant 0 : i32
    %c0_i32_1 = arith.constant 0 : i32
    %c0_i32_2 = arith.constant 0 : i32
    return %c0_i32, %c0_i32_0, %c0_i32_1 : i32, i32, i32
  }
  func.func @transform_12(%arg0: i32) -> (i32, i32, i32) {
    %c0_i32 = arith.constant 0 : i32
    %c0_i32_0 = arith.constant 0 : i32
    %c0_i32_1 = arith.constant 0 : i32
    %c0_i32_2 = arith.constant 0 : i32
    return %c0_i32, %c0_i32_0, %c0_i32_1 : i32, i32, i32
  }
  func.func @transform_13(%arg0: i32) -> (i32, i32, i32) {
    %c0_i32 = arith.constant 0 : i32
    %c0_i32_0 = arith.constant 0 : i32
    %c0_i32_1 = arith.constant 0 : i32
    %c0_i32_2 = arith.constant 0 : i32
    return %c0_i32, %c0_i32_0, %c0_i32_1 : i32, i32, i32
  }
  func.func @transform_14(%arg0: i32) -> (i32, i32, i32) {
    %c0_i32 = arith.constant 0 : i32
    %c0_i32_0 = arith.constant 0 : i32
    %c0_i32_1 = arith.constant 0 : i32
    %c0_i32_2 = arith.constant 0 : i32
    return %c0_i32, %c0_i32_0, %c0_i32_1 : i32, i32, i32
  }
  func.func @transform_15(%arg0: i32) -> (i32, i32) {
    %c0_i32 = arith.constant 0 : i32
    %c0_i32_0 = arith.constant 0 : i32
    %c0_i32_1 = arith.constant 0 : i32
    return %c0_i32, %c0_i32_0 : i32, i32
  }
  func.func @transform_16(%arg0: i32) -> (i32, i32) {
    %c0_i32 = arith.constant 0 : i32
    %c0_i32_0 = arith.constant 0 : i32
    %c0_i32_1 = arith.constant 0 : i32
    return %c0_i32, %c0_i32_0 : i32, i32
  }
  func.func @transform_17(%arg0: i32) -> (i32, i32) {
    %c0_i32 = arith.constant 0 : i32
    %c0_i32_0 = arith.constant 0 : i32
    %c0_i32_1 = arith.constant 0 : i32
    return %c0_i32, %c0_i32_0 : i32, i32
  }
  func.func @transform_18(%arg0: i32) -> (i32, i32) {
    %c0_i32 = arith.constant 0 : i32
    %c0_i32_0 = arith.constant 0 : i32
    %c0_i32_1 = arith.constant 0 : i32
    return %c0_i32, %c0_i32_0 : i32, i32
  }
  func.func @transform_19(%arg0: i32) -> (i32, i32, i32) {
    %c0_i32 = arith.constant 0 : i32
    %c0_i32_0 = arith.constant 0 : i32
    %c0_i32_1 = arith.constant 0 : i32
    return %arg0, %c0_i32, %c0_i32_0 : i32, i32, i32
  }
}

</mosaic_0001>

<llo_original>
// kernel: electra_classifier_forward.1
$region0: #{electra_classifier_forward.1}
  #allocation0 [shape = 'u32[]', space=smem, size = 0x4, offset = 0x4, fixed_abs, tag = 'smem constant byte address 0x4 - core index']
  #allocation1 [shape = 'u32[72,128]{1,0:T(1,128)}', space=vmem, size = 0x9000, scoped, tag = 'internal scratch']
  %s0 = inlined_call_operand.vmem [shape: s32[2,32,1], index: 0, kind: input, shape index: {}]
  %s1 = inlined_call_operand.vmem [shape: f32[2,1,32], index: 1, kind: input, shape index: {}]
  %s2 = inlined_call_operand.vmem [shape: bf16[100,16], index: 2, kind: input, shape index: {}]
  %s3 = inlined_call_operand.vmem [shape: f32[32,16], index: 3, kind: input, shape index: {}]
  %s4 = inlined_call_operand.vmem [shape: f32[32,32], index: 4, kind: input, shape index: {}]
  %s5 = inlined_call_operand.vmem [shape: f32[2,16], index: 5, kind: input, shape index: {}]
  %s6 = inlined_call_operand.vmem [shape: bf16[16,32], index: 6, kind: input, shape index: {}]
  %s7 = inlined_call_operand.vmem [shape: f32[1,32], index: 7, kind: input, shape index: {}]
  %s8 = inlined_call_operand.vmem [shape: bf16[2,32,96], index: 8, kind: input, shape index: {}]
  %s9 = inlined_call_operand.vmem [shape: f32[2,1,96], index: 9, kind: input, shape index: {}]
  %s10 = inlined_call_operand.vmem [shape: bf16[2,32,32], index: 10, kind: input, shape index: {}]
  %s11 = inlined_call_operand.vmem [shape: bf16[2,32,64], index: 11, kind: input, shape index: {}]
  %s12 = inlined_call_operand.vmem [shape: f32[2,1,64], index: 12, kind: input, shape index: {}]
  %s13 = inlined_call_operand.vmem [shape: bf16[2,64,32], index: 13, kind: input, shape index: {}]
  %s14 = inlined_call_operand.vmem [shape: f32[2,6,32], index: 14, kind: input, shape index: {}]
  %s15 = inlined_call_operand.vmem [shape: bf16[32,32], index: 15, kind: input, shape index: {}]
  %s16 = inlined_call_operand.vmem [shape: f32[1,32], index: 16, kind: input, shape index: {}]
  %s17 = inlined_call_operand.vmem [shape: bf16[32,2], index: 17, kind: input, shape index: {}]
  %s18 = inlined_call_operand.vmem [shape: f32[1,2], index: 18, kind: input, shape index: {}]
  %s19 = inlined_call_operand.vmem [shape: f32[2,4,2], index: 19, kind: output, shape index: {}]
  %s20 = sld [smem:[#allocation0]]
  $region109: #{electra_classifier_forward.1} parent=0
    _
  %s22 = ssub.s32 1, %s20
  %s23 = scalar_select 0, %s22, %s20
  loop: start=0, step=1, limit=4
  $region2: #{electra_classifier_forward.1} parent=0 // loop_pre_header
    _
  $region3: #{electra_classifier_forward.1} parent=0 // loop_header
    %s25 = sphi 0, %s29
    %p26 = scmp.ge.s32.totalorder %s25, 4
    %s35 = sphi 0, %s37
    %s38 = sphi 0, %s35
    %s39 = sphi 0, %s38
    %s55 = sphi 0, %s39
    %s61 = sphi 0, %s63
    %s64 = sphi 0, %s61
    %s65 = sphi 0, %s64
    %s81 = sphi 0, %s65
    %s85 = sphi 0, %s85
    %s87 = sphi 0, %s85
    %s88 = sphi 0, %s87
    %s102 = sphi 0, %s88
    %s106 = sphi 0, %s106
    %s108 = sphi 0, %s106
    %s109 = sphi 0, %s108
    %s123 = sphi 0, %s109
    %s127 = sphi 0, %s127
    %s129 = sphi 0, %s127
    %s130 = sphi 0, %s129
    %s144 = sphi 0, %s130
    %s148 = sphi 0, %s148
    %s150 = sphi 0, %s148
    %s151 = sphi 0, %s150
    %s165 = sphi 0, %s151
    %s169 = sphi 0, %s169
    %s171 = sphi 0, %s169
    %s172 = sphi 0, %s171
    %s186 = sphi 0, %s172
    %s190 = sphi 0, %s190
    %s192 = sphi 0, %s190
    %s193 = sphi 0, %s192
    %s207 = sphi 0, %s193
    %s211 = sphi 0, %s211
    %s213 = sphi 0, %s211
    %s214 = sphi 0, %s213
    %s228 = sphi 0, %s214
    %s232 = sphi 0, %s232
    %s234 = sphi 0, %s232
    %s235 = sphi 0, %s234
    %s249 = sphi 0, %s235
    %s253 = sphi 0, %s253
    %s255 = sphi 0, %s253
    %s256 = sphi 0, %s255
    %s270 = sphi 0, %s256
    %s274 = sphi 0, %s274
    %s276 = sphi 0, %s274
    %s277 = sphi 0, %s276
    %s291 = sphi 0, %s277
    %s295 = sphi 0, %s295
    %s297 = sphi 0, %s295
    %s298 = sphi 0, %s297
    %s312 = sphi 0, %s298
    %s316 = sphi 0, %s316
    %s318 = sphi 0, %s316
    %s319 = sphi 0, %s318
    %s333 = sphi 0, %s319
    %s337 = sphi 0, %s337
    %s339 = sphi 0, %s337
    %s340 = sphi 0, %s339
    %s354 = sphi 0, %s340
    %s358 = sphi 0, %s358
    %s360 = sphi 0, %s358
    %s361 = sphi 0, %s360
    %s375 = sphi 0, %s361
    %s379 = sphi 0, %s379
    %s381 = sphi 0, %s379
    %s382 = sphi 0, %s381
    %s396 = sphi 0, %s382
    %s400 = sphi 0, %s400
    %s402 = sphi 0, %s400
    %s403 = sphi 0, %s402
    %s417 = sphi 0, %s403
    %s421 = sphi 0, %s421
    %s423 = sphi 0, %s421
    %s424 = sphi 0, %s423
    %s438 = sphi 0, %s424
    %s444 = sphi 0, %s446
    %s447 = sphi 0, %s444
    %s448 = sphi 0, %s447
    %s464 = sphi 0, %s448
  $region4: #{electra_classifier_forward.1} parent=0 // loop_header_branch
    %28 = sbr.rel (%p26) target = $region8
  $region5: #{electra_classifier_forward.1} parent=0 // loop_body
    %s30 = ssub.s32 %s25, 1
    %s31 = ssub.s32 %s25, 2
    %s32 = sadd.s32 %s25, 1
    %s33 = ssub.s32 %s25, %s32
    %p34 = scmp.eq.s32.totalorder %s33, 0
    %s36 = sadd.s32 %s35, 1
    %s37 = scalar_select %p34, %s35, %s36
    %p40 = pneg %p34
    %p41 = scmp.eq.s32.totalorder %s25, 1
    %p42 = por %p40, %p41
    %p43 = scmp.ne.s32.totalorder %s35, %s38
    %p44 = scmp.eq.s32.totalorder %s25, 0
    %p45 = por %p43, %p44
    %p46 = scmp.ne.s32.totalorder %s35, %s38
    %p47 = scmp.eq.s32.totalorder %s30, 1
    %p48 = por %p46, %p47
    %p49 = scmp.ne.s32.totalorder %s38, %s39
    %p50 = scmp.eq.s32.totalorder %s30, 0
    %p51 = por %p49, %p50
    %p52 = scmp.ne.s32.totalorder %s38, %s39
    %p53 = scmp.eq.s32.totalorder %s31, 1
    %p54 = por %p52, %p53
    %p56 = scmp.ne.s32.totalorder %s39, %s55
    %p57 = scmp.eq.s32.totalorder %s31, 0
    %p58 = por %p56, %p57
    %s59 = ssub.s32 %s25, %s32
    %p60 = scmp.eq.s32.totalorder %s59, 0
    %s62 = sadd.s32 %s61, 1
    %s63 = scalar_select %p60, %s61, %s62
    %p66 = pneg %p60
    %p67 = scmp.eq.s32.totalorder %s25, 1
    %p68 = por %p66, %p67
    %p69 = scmp.ne.s32.totalorder %s61, %s64
    %p70 = scmp.eq.s32.totalorder %s25, 0
    %p71 = por %p69, %p70
    %p72 = scmp.ne.s32.totalorder %s61, %s64
    %p73 = scmp.eq.s32.totalorder %s30, 1
    %p74 = por %p72, %p73
    %p75 = scmp.ne.s32.totalorder %s64, %s65
    %p76 = scmp.eq.s32.totalorder %s30, 0
    %p77 = por %p75, %p76
    %p78 = scmp.ne.s32.totalorder %s64, %s65
    %p79 = scmp.eq.s32.totalorder %s31, 1
    %p80 = por %p78, %p79
    %p82 = scmp.ne.s32.totalorder %s65, %s81
    %p83 = scmp.eq.s32.totalorder %s31, 0
    %p84 = por %p82, %p83
    %s86 = sadd.s32 %s85, 1
    %p89 = scmp.eq.s32.totalorder %s25, 1
    %p90 = scmp.ne.s32.totalorder %s85, %s87
    %p91 = scmp.eq.s32.totalorder %s25, 0
    %p92 = por %p90, %p91
    %p93 = scmp.ne.s32.totalorder %s85, %s87
    %p94 = scmp.eq.s32.totalorder %s30, 1
    %p95 = por %p93, %p94
    %p96 = scmp.ne.s32.totalorder %s87, %s88
    %p97 = scmp.eq.s32.totalorder %s30, 0
    %p98 = por %p96, %p97
    %p99 = scmp.ne.s32.totalorder %s87, %s88
    %p100 = scmp.eq.s32.totalorder %s31, 1
    %p101 = por %p99, %p100
    %p103 = scmp.ne.s32.totalorder %s88, %s102
    %p104 = scmp.eq.s32.totalorder %s31, 0
    %p105 = por %p103, %p104
    %s107 = sadd.s32 %s106, 1
    %p110 = scmp.eq.s32.totalorder %s25, 1
    %p111 = scmp.ne.s32.totalorder %s106, %s108
    %p112 = scmp.eq.s32.totalorder %s25, 0
    %p113 = por %p111, %p112
    %p114 = scmp.ne.s32.totalorder %s106, %s108
    %p115 = scmp.eq.s32.totalorder %s30, 1
    %p116 = por %p114, %p115
    %p117 = scmp.ne.s32.totalorder %s108, %s109
    %p118 = scmp.eq.s32.totalorder %s30, 0
    %p119 = por %p117, %p118
    %p120 = scmp.ne.s32.totalorder %s108, %s109
    %p121 = scmp.eq.s32.totalorder %s31, 1
    %p122 = por %p120, %p121
    %p124 = scmp.ne.s32.totalorder %s109, %s123
    %p125 = scmp.eq.s32.totalorder %s31, 0
    %p126 = por %p124, %p125
    %s128 = sadd.s32 %s127, 1
    %p131 = scmp.eq.s32.totalorder %s25, 1
    %p132 = scmp.ne.s32.totalorder %s127, %s129
    %p133 = scmp.eq.s32.totalorder %s25, 0
    %p134 = por %p132, %p133
    %p135 = scmp.ne.s32.totalorder %s127, %s129
    %p136 = scmp.eq.s32.totalorder %s30, 1
    %p137 = por %p135, %p136
    %p138 = scmp.ne.s32.totalorder %s129, %s130
    %p139 = scmp.eq.s32.totalorder %s30, 0
    %p140 = por %p138, %p139
    %p141 = scmp.ne.s32.totalorder %s129, %s130
    %p142 = scmp.eq.s32.totalorder %s31, 1
    %p143 = por %p141, %p142
    %p145 = scmp.ne.s32.totalorder %s130, %s144
    %p146 = scmp.eq.s32.totalorder %s31, 0
    %p147 = por %p145, %p146
    %s149 = sadd.s32 %s148, 1
    %p152 = scmp.eq.s32.totalorder %s25, 1
    %p153 = scmp.ne.s32.totalorder %s148, %s150
    %p154 = scmp.eq.s32.totalorder %s25, 0
    %p155 = por %p153, %p154
    %p156 = scmp.ne.s32.totalorder %s148, %s150
    %p157 = scmp.eq.s32.totalorder %s30, 1
    %p158 = por %p156, %p157
    %p159 = scmp.ne.s32.totalorder %s150, %s151
    %p160 = scmp.eq.s32.totalorder %s30, 0
    %p161 = por %p159, %p160
    %p162 = scmp.ne.s32.totalorder %s150, %s151
    %p163 = scmp.eq.s32.totalorder %s31, 1
    %p164 = por %p162, %p163
    %p166 = scmp.ne.s32.totalorder %s151, %s165
    %p167 = scmp.eq.s32.totalorder %s31, 0
    %p168 = por %p166, %p167
    %s170 = sadd.s32 %s169, 1
    %p173 = scmp.eq.s32.totalorder %s25, 1
    %p174 = scmp.ne.s32.totalorder %s169, %s171
    %p175 = scmp.eq.s32.totalorder %s25, 0
    %p176 = por %p174, %p175
    %p177 = scmp.ne.s32.totalorder %s169, %s171
    %p178 = scmp.eq.s32.totalorder %s30, 1
    %p179 = por %p177, %p178
    %p180 = scmp.ne.s32.totalorder %s171, %s172
    %p181 = scmp.eq.s32.totalorder %s30, 0
    %p182 = por %p180, %p181
    %p183 = scmp.ne.s32.totalorder %s171, %s172
    %p184 = scmp.eq.s32.totalorder %s31, 1
    %p185 = por %p183, %p184
    %p187 = scmp.ne.s32.totalorder %s172, %s186
    %p188 = scmp.eq.s32.totalorder %s31, 0
    %p189 = por %p187, %p188
    %s191 = sadd.s32 %s190, 1
    %p194 = scmp.eq.s32.totalorder %s25, 1
    %p195 = scmp.ne.s32.totalorder %s190, %s192
    %p196 = scmp.eq.s32.totalorder %s25, 0
    %p197 = por %p195, %p196
    %p198 = scmp.ne.s32.totalorder %s190, %s192
    %p199 = scmp.eq.s32.totalorder %s30, 1
    %p200 = por %p198, %p199
    %p201 = scmp.ne.s32.totalorder %s192, %s193
    %p202 = scmp.eq.s32.totalorder %s30, 0
    %p203 = por %p201, %p202
    %p204 = scmp.ne.s32.totalorder %s192, %s193
    %p205 = scmp.eq.s32.totalorder %s31, 1
    %p206 = por %p204, %p205
    %p208 = scmp.ne.s32.totalorder %s193, %s207
    %p209 = scmp.eq.s32.totalorder %s31, 0
    %p210 = por %p208, %p209
    %s212 = sadd.s32 %s211, 1
    %p215 = scmp.eq.s32.totalorder %s25, 1
    %p216 = scmp.ne.s32.totalorder %s211, %s213
    %p217 = scmp.eq.s32.totalorder %s25, 0
    %p218 = por %p216, %p217
    %p219 = scmp.ne.s32.totalorder %s211, %s213
    %p220 = scmp.eq.s32.totalorder %s30, 1
    %p221 = por %p219, %p220
    %p222 = scmp.ne.s32.totalorder %s213, %s214
    %p223 = scmp.eq.s32.totalorder %s30, 0
    %p224 = por %p222, %p223
    %p225 = scmp.ne.s32.totalorder %s213, %s214
    %p226 = scmp.eq.s32.totalorder %s31, 1
    %p227 = por %p225, %p226
    %p229 = scmp.ne.s32.totalorder %s214, %s228
    %p230 = scmp.eq.s32.totalorder %s31, 0
    %p231 = por %p229, %p230
    %s233 = sadd.s32 %s232, 1
    %p236 = scmp.eq.s32.totalorder %s25, 1
    %p237 = scmp.ne.s32.totalorder %s232, %s234
    %p238 = scmp.eq.s32.totalorder %s25, 0
    %p239 = por %p237, %p238
    %p240 = scmp.ne.s32.totalorder %s232, %s234
    %p241 = scmp.eq.s32.totalorder %s30, 1
    %p242 = por %p240, %p241
    %p243 = scmp.ne.s32.totalorder %s234, %s235
    %p244 = scmp.eq.s32.totalorder %s30, 0
    %p245 = por %p243, %p244
    %p246 = scmp.ne.s32.totalorder %s234, %s235
    %p247 = scmp.eq.s32.totalorder %s31, 1
    %p248 = por %p246, %p247
    %p250 = scmp.ne.s32.totalorder %s235, %s249
    %p251 = scmp.eq.s32.totalorder %s31, 0
    %p252 = por %p250, %p251
    %s254 = sadd.s32 %s253, 1
    %p257 = scmp.eq.s32.totalorder %s25, 1
    %p258 = scmp.ne.s32.totalorder %s253, %s255
    %p259 = scmp.eq.s32.totalorder %s25, 0
    %p260 = por %p258, %p259
    %p261 = scmp.ne.s32.totalorder %s253, %s255
    %p262 = scmp.eq.s32.totalorder %s30, 1
    %p263 = por %p261, %p262
    %p264 = scmp.ne.s32.totalorder %s255, %s256
    %p265 = scmp.eq.s32.totalorder %s30, 0
    %p266 = por %p264, %p265
    %p267 = scmp.ne.s32.totalorder %s255, %s256
    %p268 = scmp.eq.s32.totalorder %s31, 1
    %p269 = por %p267, %p268
    %p271 = scmp.ne.s32.totalorder %s256, %s270
    %p272 = scmp.eq.s32.totalorder %s31, 0
    %p273 = por %p271, %p272
    %s275 = sadd.s32 %s274, 1
    %p278 = scmp.eq.s32.totalorder %s25, 1
    %p279 = scmp.ne.s32.totalorder %s274, %s276
    %p280 = scmp.eq.s32.totalorder %s25, 0
    %p281 = por %p279, %p280
    %p282 = scmp.ne.s32.totalorder %s274, %s276
    %p283 = scmp.eq.s32.totalorder %s30, 1
    %p284 = por %p282, %p283
    %p285 = scmp.ne.s32.totalorder %s276, %s277
    %p286 = scmp.eq.s32.totalorder %s30, 0
    %p287 = por %p285, %p286
    %p288 = scmp.ne.s32.totalorder %s276, %s277
    %p289 = scmp.eq.s32.totalorder %s31, 1
    %p290 = por %p288, %p289
    %p292 = scmp.ne.s32.totalorder %s277, %s291
    %p293 = scmp.eq.s32.totalorder %s31, 0
    %p294 = por %p292, %p293
    %s296 = sadd.s32 %s295, 1
    %p299 = scmp.eq.s32.totalorder %s25, 1
    %p300 = scmp.ne.s32.totalorder %s295, %s297
    %p301 = scmp.eq.s32.totalorder %s25, 0
    %p302 = por %p300, %p301
    %p303 = scmp.ne.s32.totalorder %s295, %s297
    %p304 = scmp.eq.s32.totalorder %s30, 1
    %p305 = por %p303, %p304
    %p306 = scmp.ne.s32.totalorder %s297, %s298
    %p307 = scmp.eq.s32.totalorder %s30, 0
    %p308 = por %p306, %p307
    %p309 = scmp.ne.s32.totalorder %s297, %s298
    %p310 = scmp.eq.s32.totalorder %s31, 1
    %p311 = por %p309, %p310
    %p313 = scmp.ne.s32.totalorder %s298, %s312
    %p314 = scmp.eq.s32.totalorder %s31, 0
    %p315 = por %p313, %p314
    %s317 = sadd.s32 %s316, 1
    %p320 = scmp.eq.s32.totalorder %s25, 1
    %p321 = scmp.ne.s32.totalorder %s316, %s318
    %p322 = scmp.eq.s32.totalorder %s25, 0
    %p323 = por %p321, %p322
    %p324 = scmp.ne.s32.totalorder %s316, %s318
    %p325 = scmp.eq.s32.totalorder %s30, 1
    %p326 = por %p324, %p325
    %p327 = scmp.ne.s32.totalorder %s318, %s319
    %p328 = scmp.eq.s32.totalorder %s30, 0
    %p329 = por %p327, %p328
    %p330 = scmp.ne.s32.totalorder %s318, %s319
    %p331 = scmp.eq.s32.totalorder %s31, 1
    %p332 = por %p330, %p331
    %p334 = scmp.ne.s32.totalorder %s319, %s333
    %p335 = scmp.eq.s32.totalorder %s31, 0
    %p336 = por %p334, %p335
    %s338 = sadd.s32 %s337, 1
    %p341 = scmp.eq.s32.totalorder %s25, 1
    %p342 = scmp.ne.s32.totalorder %s337, %s339
    %p343 = scmp.eq.s32.totalorder %s25, 0
    %p344 = por %p342, %p343
    %p345 = scmp.ne.s32.totalorder %s337, %s339
    %p346 = scmp.eq.s32.totalorder %s30, 1
    %p347 = por %p345, %p346
    %p348 = scmp.ne.s32.totalorder %s339, %s340
    %p349 = scmp.eq.s32.totalorder %s30, 0
    %p350 = por %p348, %p349
    %p351 = scmp.ne.s32.totalorder %s339, %s340
    %p352 = scmp.eq.s32.totalorder %s31, 1
    %p353 = por %p351, %p352
    %p355 = scmp.ne.s32.totalorder %s340, %s354
    %p356 = scmp.eq.s32.totalorder %s31, 0
    %p357 = por %p355, %p356
    %s359 = sadd.s32 %s358, 1
    %p362 = scmp.eq.s32.totalorder %s25, 1
    %p363 = scmp.ne.s32.totalorder %s358, %s360
    %p364 = scmp.eq.s32.totalorder %s25, 0
    %p365 = por %p363, %p364
    %p366 = scmp.ne.s32.totalorder %s358, %s360
    %p367 = scmp.eq.s32.totalorder %s30, 1
    %p368 = por %p366, %p367
    %p369 = scmp.ne.s32.totalorder %s360, %s361
    %p370 = scmp.eq.s32.totalorder %s30, 0
    %p371 = por %p369, %p370
    %p372 = scmp.ne.s32.totalorder %s360, %s361
    %p373 = scmp.eq.s32.totalorder %s31, 1
    %p374 = por %p372, %p373
    %p376 = scmp.ne.s32.totalorder %s361, %s375
    %p377 = scmp.eq.s32.totalorder %s31, 0
    %p378 = por %p376, %p377
    %s380 = sadd.s32 %s379, 1
    %p383 = scmp.eq.s32.totalorder %s25, 1
    %p384 = scmp.ne.s32.totalorder %s379, %s381
    %p385 = scmp.eq.s32.totalorder %s25, 0
    %p386 = por %p384, %p385
    %p387 = scmp.ne.s32.totalorder %s379, %s381
    %p388 = scmp.eq.s32.totalorder %s30, 1
    %p389 = por %p387, %p388
    %p390 = scmp.ne.s32.totalorder %s381, %s382
    %p391 = scmp.eq.s32.totalorder %s30, 0
    %p392 = por %p390, %p391
    %p393 = scmp.ne.s32.totalorder %s381, %s382
    %p394 = scmp.eq.s32.totalorder %s31, 1
    %p395 = por %p393, %p394
    %p397 = scmp.ne.s32.totalorder %s382, %s396
    %p398 = scmp.eq.s32.totalorder %s31, 0
    %p399 = por %p397, %p398
    %s401 = sadd.s32 %s400, 1
    %p404 = scmp.eq.s32.totalorder %s25, 1
    %p405 = scmp.ne.s32.totalorder %s400, %s402
    %p406 = scmp.eq.s32.totalorder %s25, 0
    %p407 = por %p405, %p406
    %p408 = scmp.ne.s32.totalorder %s400, %s402
    %p409 = scmp.eq.s32.totalorder %s30, 1
    %p410 = por %p408, %p409
    %p411 = scmp.ne.s32.totalorder %s402, %s403
    %p412 = scmp.eq.s32.totalorder %s30, 0
    %p413 = por %p411, %p412
    %p414 = scmp.ne.s32.totalorder %s402, %s403
    %p415 = scmp.eq.s32.totalorder %s31, 1
    %p416 = por %p414, %p415
    %p418 = scmp.ne.s32.totalorder %s403, %s417
    %p419 = scmp.eq.s32.totalorder %s31, 0
    %p420 = por %p418, %p419
    %s422 = sadd.s32 %s421, 1
    %p425 = scmp.eq.s32.totalorder %s25, 1
    %p426 = scmp.ne.s32.totalorder %s421, %s423
    %p427 = scmp.eq.s32.totalorder %s25, 0
    %p428 = por %p426, %p427
    %p429 = scmp.ne.s32.totalorder %s421, %s423
    %p430 = scmp.eq.s32.totalorder %s30, 1
    %p431 = por %p429, %p430
    %p432 = scmp.ne.s32.totalorder %s423, %s424
    %p433 = scmp.eq.s32.totalorder %s30, 0
    %p434 = por %p432, %p433
    %p435 = scmp.ne.s32.totalorder %s423, %s424
    %p436 = scmp.eq.s32.totalorder %s31, 1
    %p437 = por %p435, %p436
    %p439 = scmp.ne.s32.totalorder %s424, %s438
    %p440 = scmp.eq.s32.totalorder %s31, 0
    %p441 = por %p439, %p440
    %s442 = ssub.s32 %s25, %s32
    %p443 = scmp.eq.s32.totalorder %s442, 0
    %s445 = sadd.s32 %s444, 1
    %s446 = scalar_select %p443, %s444, %s445
    %p449 = pneg %p443
    %p450 = scmp.eq.s32.totalorder %s25, 1
    %p451 = por %p449, %p450
    %p452 = scmp.ne.s32.totalorder %s444, %s447
    %p453 = scmp.eq.s32.totalorder %s25, 0
    %p454 = por %p452, %p453
    %p455 = scmp.ne.s32.totalorder %s444, %s447
    %p456 = scmp.eq.s32.totalorder %s30, 1
    %p457 = por %p455, %p456
    %p458 = scmp.ne.s32.totalorder %s447, %s448
    %p459 = scmp.eq.s32.totalorder %s30, 0
    %p460 = por %p458, %p459
    %p461 = scmp.ne.s32.totalorder %s447, %s448
    %p462 = scmp.eq.s32.totalorder %s31, 1
    %p463 = por %p461, %p462
    %p465 = scmp.ne.s32.totalorder %s448, %s464
    %p466 = scmp.eq.s32.totalorder %s31, 0
    %p467 = por %p465, %p466
    %p468 = scmp.le.s32.totalorder 1, %s25
    %p469 = scmp.lt.s32.totalorder %s25, 3
    %p470 = pnand %p468, %p469
    %p471 = pneg %p470
    // Predicated region
    $region9: #{electra_classifier_forward.1} parent=5 // pred_check
      _
    $region10: #{electra_classifier_forward.1} parent=5 // pred_check_branch
      %473 = sbr.rel (%p470) target = $region12
    $region11: #{electra_classifier_forward.1} parent=5 // pred_region
      %s474 = ssub.s32 %s25, 1
      // Predicated region
      $region13: #{electra_classifier_forward.1} parent=11 // pred_check
        %p475 = pneg %p98
      $region14: #{electra_classifier_forward.1} parent=11 // pred_check_branch
        %477 = sbr.rel (%p475) target = $region16
      $region15: #{electra_classifier_forward.1} parent=11 // pred_region
        _
      $region16: #{electra_classifier_forward.1} parent=11 // pred_fallthru
        _
      // Predicated region
      $region17: #{electra_classifier_forward.1} parent=11 // pred_check
        %p478 = pneg %p119
      $region18: #{electra_classifier_forward.1} parent=11 // pred_check_branch
        %480 = sbr.rel (%p478) target = $region20
      $region19: #{electra_classifier_forward.1} parent=11 // pred_region
        _
      $region20: #{electra_classifier_forward.1} parent=11 // pred_fallthru
        _
      // Predicated region
      $region21: #{electra_classifier_forward.1} parent=11 // pred_check
        %p481 = pneg %p140
      $region22: #{electra_classifier_forward.1} parent=11 // pred_check_branch
        %483 = sbr.rel (%p481) target = $region24
      $region23: #{electra_classifier_forward.1} parent=11 // pred_region
        _
      $region24: #{electra_classifier_forward.1} parent=11 // pred_fallthru
        _
      // Predicated region
      $region25: #{electra_classifier_forward.1} parent=11 // pred_check
        %p484 = pneg %p161
      $region26: #{electra_classifier_forward.1} parent=11 // pred_check_branch
        %486 = sbr.rel (%p484) target = $region28
      $region27: #{electra_classifier_forward.1} parent=11 // pred_region
        _
      $region28: #{electra_classifier_forward.1} parent=11 // pred_fallthru
        _
      // Predicated region
      $region29: #{electra_classifier_forward.1} parent=11 // pred_check
        %p487 = pneg %p182
      $region30: #{electra_classifier_forward.1} parent=11 // pred_check_branch
        %489 = sbr.rel (%p487) target = $region32
      $region31: #{electra_classifier_forward.1} parent=11 // pred_region
        _
      $region32: #{electra_classifier_forward.1} parent=11 // pred_fallthru
        _
      // Predicated region
      $region33: #{electra_classifier_forward.1} parent=11 // pred_check
        %p490 = pneg %p203
      $region34: #{electra_classifier_forward.1} parent=11 // pred_check_branch
        %492 = sbr.rel (%p490) target = $region36
      $region35: #{electra_classifier_forward.1} parent=11 // pred_region
        _
      $region36: #{electra_classifier_forward.1} parent=11 // pred_fallthru
        _
      // Predicated region
      $region37: #{electra_classifier_forward.1} parent=11 // pred_check
        %p493 = pneg %p224
      $region38: #{electra_classifier_forward.1} parent=11 // pred_check_branch
        %495 = sbr.rel (%p493) target = $region40
      $region39: #{electra_classifier_forward.1} parent=11 // pred_region
        _
      $region40: #{electra_classifier_forward.1} parent=11 // pred_fallthru
        _
      // Predicated region
      $region41: #{electra_classifier_forward.1} parent=11 // pred_check
        %p496 = pneg %p245
      $region42: #{electra_classifier_forward.1} parent=11 // pred_check_branch
        %498 = sbr.rel (%p496) target = $region44
      $region43: #{electra_classifier_forward.1} parent=11 // pred_region
        _
      $region44: #{electra_classifier_forward.1} parent=11 // pred_fallthru
        _
      // Predicated region
      $region45: #{electra_classifier_forward.1} parent=11 // pred_check
        %p499 = pneg %p266
      $region46: #{electra_classifier_forward.1} parent=11 // pred_check_branch
        %501 = sbr.rel (%p499) target = $region48
      $region47: #{electra_classifier_forward.1} parent=11 // pred_region
        _
      $region48: #{electra_classifier_forward.1} parent=11 // pred_fallthru
        _
      // Predicated region
      $region49: #{electra_classifier_forward.1} parent=11 // pred_check
        %p502 = pneg %p287
      $region50: #{electra_classifier_forward.1} parent=11 // pred_check_branch
        %504 = sbr.rel (%p502) target = $region52
      $region51: #{electra_classifier_forward.1} parent=11 // pred_region
        _
      $region52: #{electra_classifier_forward.1} parent=11 // pred_fallthru
        _
      // Predicated region
      $region53: #{electra_classifier_forward.1} parent=11 // pred_check
        %p505 = pneg %p308
      $region54: #{electra_classifier_forward.1} parent=11 // pred_check_branch
        %507 = sbr.rel (%p505) target = $region56
      $region55: #{electra_classifier_forward.1} parent=11 // pred_region
        _
      $region56: #{electra_classifier_forward.1} parent=11 // pred_fallthru
        _
      // Predicated region
      $region57: #{electra_classifier_forward.1} parent=11 // pred_check
        %p508 = pneg %p329
      $region58: #{electra_classifier_forward.1} parent=11 // pred_check_branch
        %510 = sbr.rel (%p508) target = $region60
      $region59: #{electra_classifier_forward.1} parent=11 // pred_region
        _
      $region60: #{electra_classifier_forward.1} parent=11 // pred_fallthru
        _
      // Predicated region
      $region61: #{electra_classifier_forward.1} parent=11 // pred_check
        %p511 = pneg %p350
      $region62: #{electra_classifier_forward.1} parent=11 // pred_check_branch
        %513 = sbr.rel (%p511) target = $region64
      $region63: #{electra_classifier_forward.1} parent=11 // pred_region
        _
      $region64: #{electra_classifier_forward.1} parent=11 // pred_fallthru
        _
      // Predicated region
      $region65: #{electra_classifier_forward.1} parent=11 // pred_check
        %p514 = pneg %p371
      $region66: #{electra_classifier_forward.1} parent=11 // pred_check_branch
        %516 = sbr.rel (%p514) target = $region68
      $region67: #{electra_classifier_forward.1} parent=11 // pred_region
        _
      $region68: #{electra_classifier_forward.1} parent=11 // pred_fallthru
        _
      // Predicated region
      $region69: #{electra_classifier_forward.1} parent=11 // pred_check
        %p517 = pneg %p392
      $region70: #{electra_classifier_forward.1} parent=11 // pred_check_branch
        %519 = sbr.rel (%p517) target = $region72
      $region71: #{electra_classifier_forward.1} parent=11 // pred_region
        _
      $region72: #{electra_classifier_forward.1} parent=11 // pred_fallthru
        _
      // Predicated region
      $region73: #{electra_classifier_forward.1} parent=11 // pred_check
        %p520 = pneg %p413
      $region74: #{electra_classifier_forward.1} parent=11 // pred_check_branch
        %522 = sbr.rel (%p520) target = $region76
      $region75: #{electra_classifier_forward.1} parent=11 // pred_region
        _
      $region76: #{electra_classifier_forward.1} parent=11 // pred_fallthru
        _
      // Predicated region
      $region77: #{electra_classifier_forward.1} parent=11 // pred_check
        %p523 = pneg %p434
      $region78: #{electra_classifier_forward.1} parent=11 // pred_check_branch
        %525 = sbr.rel (%p523) target = $region80
      $region79: #{electra_classifier_forward.1} parent=11 // pred_region
        _
      $region80: #{electra_classifier_forward.1} parent=11 // pred_fallthru
        _
    $region12: #{electra_classifier_forward.1} parent=5 // pred_fallthru
      _
    %p526 = scmp.lt.s32.totalorder %s25, 2
    // Predicated region
    $region81: #{electra_classifier_forward.1} parent=5 // pred_check
      %p527 = pneg %p526
    $region82: #{electra_classifier_forward.1} parent=5 // pred_check_branch
      %529 = sbr.rel (%p527) target = $region84
    $region83: #{electra_classifier_forward.1} parent=5 // pred_region
      // Predicated region
      $region85: #{electra_classifier_forward.1} parent=83 // pred_check
        %p530 = pneg %p45
      $region86: #{electra_classifier_forward.1} parent=83 // pred_check_branch
        %532 = sbr.rel (%p530) target = $region88
      $region87: #{electra_classifier_forward.1} parent=83 // pred_region
        %p533 = scmp.lt.s32.totalorder %s25, 1
        %s534 = scalar_select %p533, %s25, 1
        %s535 = smul.addr %s534, 4
        %s536 = smul.addr %s535, 8
        %s537 = scalar_lea.vmem %s0, %s536
      $region88: #{electra_classifier_forward.1} parent=83 // pred_fallthru
        _
      // Predicated region
      $region89: #{electra_classifier_forward.1} parent=83 // pred_check
        %p538 = pneg %p71
      $region90: #{electra_classifier_forward.1} parent=83 // pred_check_branch
        %540 = sbr.rel (%p538) target = $region92
      $region91: #{electra_classifier_forward.1} parent=83 // pred_region
        %p541 = scmp.lt.s32.totalorder %s25, 1
        %s542 = scalar_select %p541, %s25, 1
        %s543 = scalar_lea.vmem %s1, %s542
      $region92: #{electra_classifier_forward.1} parent=83 // pred_fallthru
        _
    $region84: #{electra_classifier_forward.1} parent=5 // pred_fallthru
      _
    %p544 = scmp.le.s32.totalorder 1, %s25
    %p545 = scmp.lt.s32.totalorder %s25, 3
    %p546 = pnand %p544, %p545
    %p547 = pneg %p546
    // Predicated region
    $region93: #{electra_classifier_forward.1} parent=5 // pred_check
      _
    $region94: #{electra_classifier_forward.1} parent=5 // pred_check_branch
      %549 = sbr.rel (%p546) target = $region96
    $region95: #{electra_classifier_forward.1} parent=5 // pred_region
      %s550 = ssub.s32 %s25, 1
      %p551 = scmp.lt.s32.totalorder %s30, 1
      %s552 = scalar_select %p551, %s30, 1
      %s553 = smul.addr %s552, 4
      %s554 = smul.addr %s553, 8
      %s555 = scalar_lea.vmem %s0, %s554
      %p556 = pneg %p51
      %p557 = pneg %p48
      %p558 = scmp.lt.s32.totalorder %s30, 1
      %s559 = scalar_select %p558, %s30, 1
      %s560 = scalar_lea.vmem %s1, %s559
      %p561 = pneg %p77
      %p562 = pneg %p74
      %p563 = pneg %p98
      %p564 = pneg %p95
      %p565 = pneg %p119
      %p566 = pneg %p116
      %p567 = pneg %p140
      %p568 = pneg %p137
      %p569 = pneg %p161
      %p570 = pneg %p158
      %p571 = pneg %p182
      %p572 = pneg %p179
      %p573 = pneg %p203
      %p574 = pneg %p200
      %p575 = pneg %p224
      %p576 = pneg %p221
      %p577 = pneg %p245
      %p578 = pneg %p242
      %p579 = pneg %p266
      %p580 = pneg %p263
      %p581 = pneg %p287
      %p582 = pneg %p284
      %p583 = pneg %p308
      %p584 = pneg %p305
      %p585 = pneg %p329
      %p586 = pneg %p326
      %p587 = pneg %p350
      %p588 = pneg %p347
      %p589 = pneg %p371
      %p590 = pneg %p368
      %p591 = pneg %p392
      %p592 = pneg %p389
      %p593 = pneg %p413
      %p594 = pneg %p410
      %p595 = pneg %p434
      %p596 = pneg %p431
      %p597 = pneg %p460
      %p598 = pneg %p457
      %p599 = scmp.lt.s32.totalorder %s30, 1
      %s600 = scalar_select %p599, %s30, 1
      %s601 = smul.addr %s600, 4
      %s602 = scalar_lea.vmem %s19, %s601
      %p603 = scmp.lt.s32.totalorder %s30, 1
      %s604 = scalar_select %p603, %s30, 1
      %s605 = smul.addr %s604, 4
      %s606 = smul.addr %s605, 8
      %s607 = scalar_lea.vmem %s0, %s606
      %p608 = scmp.lt.s32.totalorder %s30, 1
      %s609 = scalar_select %p608, %s30, 1
      %s610 = scalar_lea.vmem %s1, %s609
      %p611 = scmp.lt.s32.totalorder %s30, 1
      %s612 = scalar_select %p611, %s30, 1
      %s613 = smul.addr %s612, 4
      %s614 = scalar_lea.vmem %s19, %s613
      %v616 = vld [vmem:[%s607] sm:$0xff]
      %v617 = vld [vmem:[%s607 + $0x8] sm:$0xff]
      %v618 = vld [vmem:[%s607 + $0x10] sm:$0xff]
      %v619 = vld [vmem:[%s607 + $0x18] sm:$0xff]
      %v620 = vlaneseq
      %v621 = vand.u32 %v620, 127
      %622 = vset.pattern.permute.xlu0 0
      %623 = vperm.xlu0 %622, %v616
      %v624 = vpop.permute.xlu0 %623
      %625 = vset.pattern.permute.xlu0 0
      %626 = vperm.xlu0 %625, %v617
      %v627 = vpop.permute.xlu0 %626
      %628 = vset.pattern.permute.xlu0 0
      %629 = vperm.xlu0 %628, %v618
      %v630 = vpop.permute.xlu0 %629
      %631 = vset.pattern.permute.xlu0 0
      %632 = vperm.xlu0 %631, %v619
      %v633 = vpop.permute.xlu0 %632
      %vm634 = vcmp.eq.s32.totalorder %v621, %v624
      %vm635 = vcmp.eq.s32.totalorder %v621, %v627
      %vm636 = vcmp.eq.s32.totalorder %v621, %v630
      %vm637 = vcmp.eq.s32.totalorder %v621, %v633
      %v638 = vsel %vm634, 1, 0
      %v639 = vsel %vm635, 1, 0
      %v640 = vsel %vm636, 1, 0
      %v641 = vsel %vm637, 1, 0
      %v642 = vcvt.s32.f32 %v638
      %v643 = vcvt.s32.f32 %v639
      %v644 = vcvt.s32.f32 %v640
      %v645 = vcvt.s32.f32 %v641
      %v646 = vpack.c.bf16 %v643, %v642
      %v647 = vpack.c.bf16 %v645, %v644
      %v648 = vld [vmem:[%s2] sm:$0xf]
      %v649 = vld [vmem:[%s2 + $0x4] sm:$0xf]
      %v650 = vld [vmem:[%s2 + $0x8] sm:$0xf]
      %v651 = vld [vmem:[%s2 + $0xc] sm:$0xf]
      %v652 = vld [vmem:[%s2 + $0x10] sm:$0xf]
      %v653 = vld [vmem:[%s2 + $0x14] sm:$0xf]
      %v654 = vld [vmem:[%s2 + $0x18] sm:$0xf]
      %v655 = vld [vmem:[%s2 + $0x1c] sm:$0xf]
      %v656 = vld [vmem:[%s2 + $0x20] sm:$0xf]
      %v657 = vld [vmem:[%s2 + $0x24] sm:$0xf]
      %v658 = vld [vmem:[%s2 + $0x28] sm:$0xf]
      %v659 = vld [vmem:[%s2 + $0x2c] sm:$0xf]
      %v660 = vld [vmem:[%s2 + $0x30] sm:$0x3]
      %v661 = vld [vmem:[%s3] sm:$0xff]
      %v662 = vld [vmem:[%s3 + $0x8] sm:$0xff]
      %v663 = vld [vmem:[%s3 + $0x10] sm:$0xff]
      %v664 = vld [vmem:[%s3 + $0x18] sm:$0xff]
      %v678 = vunpack.c.l.b16 %v648
      %v679 = vunpack.c.l.b16 %v649
      %v680 = vunpack.c.l.b16 %v650
      %v681 = vunpack.c.l.b16 %v651
      %v682 = vunpack.c.l.b16 %v652
      %v683 = vunpack.c.l.b16 %v653
      %v684 = vunpack.c.l.b16 %v654
      %v685 = vunpack.c.l.b16 %v655
      %v686 = vunpack.c.l.b16 %v656
      %v687 = vunpack.c.l.b16 %v657
      %v688 = vunpack.c.l.b16 %v658
      %v689 = vunpack.c.l.b16 %v659
      %v690 = vunpack.c.l.b16 %v660
      %v691 = vpack.c.b16 %v679, %v678
      %v692 = vpack.c.b16 %v681, %v680
      %v693 = vpack.c.b16 %v683, %v682
      %v694 = vpack.c.b16 %v685, %v684
      %v695 = vpack.c.b16 %v687, %v686
      %v696 = vpack.c.b16 %v689, %v688
      %v697 = vpack.c.b16 %v690, %v690
      %vm704 = vcmask 818176
      %v706 = vsel %vm704, %v646, 0
      %v709 = vsel %vm704, %v647, 0
      %vm711 = vcmask 1041408
      %v713 = vsel %vm711, %v697, 0
      %715 = vmatpush.bf16.msra.mxu0 0
      %716 = vmatpush.bf16.msra.mxu0 %v713
      %717 = vmatpush.bf16.msra.mxu0 %v696
      %718 = vmatpush.bf16.msra.mxu0 %v695
      %719 = vmatpush.bf16.msra.mxu0 %v694
      %720 = vmatpush.bf16.msra.mxu0 %v693
      %721 = vmatpush.bf16.msra.mxu0 %v692
      %722 = vmatpush.bf16.msra.mxu0 %v691
      %723 = vmatmul.bf16.gmra.mxu0 %v706
      %v724 = vpop.f32.mrf.mxu0
      %v725 = vadd.f32 %v661, %v724
      %v726 = vpop.f32.mrf.mxu0
      %v727 = vadd.f32 %v662, %v726
      %728 = vmatmul.bf16.gmra.mxu0 %v709
      %v729 = vpop.f32.mrf.mxu0
      %v730 = vadd.f32 %v663, %v729
      %v731 = vpop.f32.mrf.mxu0
      %v732 = vadd.f32 %v664, %v731
      %733 = vdwg.mxu0
      %v734 = vld [vmem:[%s5] sm:$0x1]
      %v735 = vld [vmem:[%s5 + $0x1] sm:$0x1]
      %vm736 = vcmask 130048
      %v737 = vsel %vm736, %v725, 0.0
      %738 = vadd.xlane.f32.xlu0 %v737
      %v739 = vpop.xlane.xlu0 %738
      %v740 = vsel %vm736, %v727, 0.0
      %741 = vadd.xlane.f32.xlu0 %v740
      %v742 = vpop.xlane.xlu0 %741
      %v743 = vsel %vm736, %v730, 0.0
      %744 = vadd.xlane.f32.xlu0 %v743
      %v745 = vpop.xlane.xlu0 %744
      %v746 = vsel %vm736, %v732, 0.0
      %747 = vadd.xlane.f32.xlu0 %v746
      %v748 = vpop.xlane.xlu0 %747
      %v749 = vrcp.pop 16.0
      %v750 = vmul.f32 16.0, %v749
      %v751 = vsub.f32 1.0, %v750
      %v752 = vmul.f32 %v749, %v751
      %v753 = vadd.f32 %v749, %v752
      %vm754 = vweird.f32 %v749
      %v755 = vsel %vm754, %v749, %v753
      %v756 = vmul.f32 %v739, %v755
      %v757 = vmul.f32 %v742, %v755
      %v758 = vmul.f32 %v745, %v755
      %v759 = vmul.f32 %v748, %v755
      %v760 = vsub.f32 %v725, %v756
      %v761 = vsub.f32 %v727, %v757
      %v762 = vsub.f32 %v730, %v758
      %v763 = vsub.f32 %v732, %v759
      %v764 = vmul.f32 %v760, %v760
      %v765 = vmul.f32 %v761, %v761
      %v766 = vmul.f32 %v762, %v762
      %v767 = vmul.f32 %v763, %v763
      %v768 = vsel %vm736, %v764, 0.0
      %769 = vadd.xlane.f32.xlu0 %v768
      %v770 = vpop.xlane.xlu0 %769
      %v771 = vsel %vm736, %v765, 0.0
      %772 = vadd.xlane.f32.xlu0 %v771
      %v773 = vpop.xlane.xlu0 %772
      %v774 = vsel %vm736, %v766, 0.0
      %775 = vadd.xlane.f32.xlu0 %v774
      %v776 = vpop.xlane.xlu0 %775
      %v777 = vsel %vm736, %v767, 0.0
      %778 = vadd.xlane.f32.xlu0 %v777
      %v779 = vpop.xlane.xlu0 %778
      %v780 = vmul.f32 %v770, %v755
      %v781 = vmul.f32 %v773, %v755
      %v782 = vmul.f32 %v776, %v755
      %v783 = vmul.f32 %v779, %v755
      %v784 = vadd.f32 %v780, 1e-12
      %v785 = vadd.f32 %v781, 1e-12
      %v786 = vadd.f32 %v782, 1e-12
      %v787 = vadd.f32 %v783, 1e-12
      %v788 = vrsqrt.pop %v784
      %v789 = vmul.f32 %v788, %v784
      %v790 = vmul.f32 %v789, %v788
      %v791 = vmul.f32 0.5, %v790
      %v792 = vsub.f32 1.5, %v791
      %v793 = vmul.f32 %v788, %v792
      %vm794 = vweird.f32 %v784
      %vm795 = vweird.f32 %v788
      %vm796 = vmor %vm794, %vm795
      %v797 = vsel %vm796, %v788, %v793
      %v798 = vrsqrt.pop %v785
      %v799 = vmul.f32 %v798, %v785
      %v800 = vmul.f32 %v799, %v798
      %v801 = vmul.f32 0.5, %v800
      %v802 = vsub.f32 1.5, %v801
      %v803 = vmul.f32 %v798, %v802
      %vm804 = vweird.f32 %v785
      %vm805 = vweird.f32 %v798
      %vm806 = vmor %vm804, %vm805
      %v807 = vsel %vm806, %v798, %v803
      %v808 = vrsqrt.pop %v786
      %v809 = vmul.f32 %v808, %v786
      %v810 = vmul.f32 %v809, %v808
      %v811 = vmul.f32 0.5, %v810
      %v812 = vsub.f32 1.5, %v811
      %v813 = vmul.f32 %v808, %v812
      %vm814 = vweird.f32 %v786
      %vm815 = vweird.f32 %v808
      %vm816 = vmor %vm814, %vm815
      %v817 = vsel %vm816, %v808, %v813
      %v818 = vrsqrt.pop %v787
      %v819 = vmul.f32 %v818, %v787
      %v820 = vmul.f32 %v819, %v818
      %v821 = vmul.f32 0.5, %v820
      %v822 = vsub.f32 1.5, %v821
      %v823 = vmul.f32 %v818, %v822
      %vm824 = vweird.f32 %v787
      %vm825 = vweird.f32 %v818
      %vm826 = vmor %vm824, %vm825
      %v827 = vsel %vm826, %v818, %v823
      %v828 = vmul.f32 %v760, %v797
      %v829 = vmul.f32 %v761, %v807
      %v830 = vmul.f32 %v762, %v817
      %v831 = vmul.f32 %v763, %v827
      %v832 = vperm.slane %v734, 0
      %v833 = vmul.f32 %v828, %v832
      %v834 = vmul.f32 %v829, %v832
      %v835 = vmul.f32 %v830, %v832
      %v836 = vmul.f32 %v831, %v832
      %v837 = vperm.slane %v735, 0
      %v838 = vadd.f32 %v833, %v837
      %v839 = vadd.f32 %v834, %v837
      %v840 = vadd.f32 %v835, %v837
      %v841 = vadd.f32 %v836, %v837
      %v842 = vld [vmem:[%s6] sm:$0xf]
      %v843 = vld [vmem:[%s6 + $0x4] sm:$0xf]
      %v844 = vpack.c.bf16 %v839, %v838
      %v845 = vpack.c.bf16 %v841, %v840
      %v846 = vld [vmem:[%s7] sm:$0x1]
      %v848 = vperm.slane %v846, 0
      %v852 = vunpack.c.l.b16 %v842
      %v853 = vunpack.c.l.b16 %v843
      %v854 = vpack.c.b16 %v853, %v852
      %v857 = vsel %vm736, %v844, 0
      %v860 = vsel %vm736, %v845, 0
      %862 = vmatpush.bf16.msra.mxu0 0
      %863 = vmatpush.bf16.msra.mxu0 0
      %864 = vmatpush.bf16.msra.mxu0 0
      %865 = vmatpush.bf16.msra.mxu0 0
      %866 = vmatpush.bf16.msra.mxu0 0
      %867 = vmatpush.bf16.msra.mxu0 0
      %868 = vmatpush.bf16.msra.mxu0 0
      %869 = vmatpush.bf16.msra.mxu0 %v854
      %870 = vmatmul.bf16.gmra.mxu0 %v857
      %v871 = vpop.f32.mrf.mxu0
      %v872 = vadd.f32 %v848, %v871
      %v873 = vpop.f32.mrf.mxu0
      %v874 = vadd.f32 %v848, %v873
      %875 = vmatmul.bf16.gmra.mxu0 %v860
      %v876 = vpop.f32.mrf.mxu0
      %v877 = vadd.f32 %v848, %v876
      %v878 = vpop.f32.mrf.mxu0
      %v879 = vadd.f32 %v848, %v878
      %880 = vdwg.mxu0
      %v881 = vld [vmem:[%s4] sm:$0xff]
      %v882 = vld [vmem:[%s4 + $0x8] sm:$0xff]
      %v883 = vld [vmem:[%s4 + $0x10] sm:$0xff]
      %v884 = vld [vmem:[%s4 + $0x18] sm:$0xff]
      %v885 = vld [vmem:[%s610] sm:$0x1]
      %v886 = vsub.f32 1.0, %v885
      %v887 = vmul.f32 %v886, -10000.0
      %v889 = vperm.slane %v887, 0
      %v891 = vadd.f32 %v881, %v889
      %v892 = vadd.f32 %v882, %v889
      %v893 = vadd.f32 %v883, %v889
      %v894 = vadd.f32 %v884, %v889
      %v895 = vld [vmem:[%s14] sm:$0x3f]
      %v896 = vld [vmem:[%s8] sm:$0xf]
      %v897 = vld [vmem:[%s8 + $0x4] sm:$0xf]
      %v898 = vld [vmem:[%s8 + $0x8] sm:$0xf]
      %v899 = vld [vmem:[%s8 + $0xc] sm:$0xf]
      %v900 = vpack.c.bf16 %v874, %v872
      %v901 = vpack.c.bf16 %v879, %v877
      %v902 = vld [vmem:[%s9] sm:$0x1]
      %v904 = vperm.slane %v902, 0
      %v910 = vunpack.c.l.b16 %v896
      %v911 = vunpack.c.l.b16 %v897
      %v912 = vunpack.c.l.b16 %v898
      %v913 = vunpack.c.l.b16 %v899
      %v914 = vpack.c.b16 %v911, %v910
      %v915 = vpack.c.b16 %v913, %v912
      %vm918 = vcmask 261120
      %v920 = vsel %vm918, %v900, 0
      %v923 = vsel %vm918, %v901, 0
      %925 = vmatpush.bf16.msra.mxu0 0
      %926 = vmatpush.bf16.msra.mxu0 0
      %927 = vmatpush.bf16.msra.mxu0 0
      %928 = vmatpush.bf16.msra.mxu0 0
      %929 = vmatpush.bf16.msra.mxu0 0
      %930 = vmatpush.bf16.msra.mxu0 0
      %931 = vmatpush.bf16.msra.mxu0 %v915
      %932 = vmatpush.bf16.msra.mxu0 %v914
      %933 = vmatmul.bf16.gmra.mxu0 %v920
      %v934 = vpop.f32.mrf.mxu0
      %v935 = vadd.f32 %v904, %v934
      %v936 = vpop.f32.mrf.mxu0
      %v937 = vadd.f32 %v904, %v936
      %938 = vmatmul.bf16.gmra.mxu0 %v923
      %v939 = vpop.f32.mrf.mxu0
      %v940 = vadd.f32 %v904, %v939
      %v941 = vpop.f32.mrf.mxu0
      %v942 = vadd.f32 %v904, %v941
      %943 = vdwg.mxu0
      %v944 = vpack.c.bf16 %v937, %v935
      %v945 = vpack.c.bf16 %v942, %v940
      %948 = vrot.lane.b32.xlu0 %v944, 96
      %v949 = vpop.permute.xlu0 %948
      %950 = vrot.lane.b32.xlu0 %v945, 96
      %v951 = vpop.permute.xlu0 %950
      %vm952 = vcmask 64512
      %v954 = vsel %vm952, %v944, 0
      %v957 = vsel %vm952, %v945, 0
      %v960 = vsel %vm952, %v949, 0
      %v963 = vsel %vm952, %v951, 0
      %965 = vmatpush.bf16.xpose.msra.mxu0 0
      %966 = vmatpush.bf16.xpose.msra.mxu0 0
      %967 = vmatpush.bf16.xpose.msra.mxu0 0
      %968 = vmatpush.bf16.xpose.msra.mxu0 0
      %969 = vmatpush.bf16.xpose.msra.mxu0 0
      %970 = vmatpush.bf16.xpose.msra.mxu0 0
      %971 = vmatpush.bf16.xpose.msra.mxu0 %v963
      %972 = vmatpush.bf16.xpose.msra.mxu0 %v960
      %973 = vmatmul.bf16.gmra.mxu0 %v954
      %v974 = vpop.f32.mrf.mxu0
      %v975 = vadd.f32 0.0, %v974
      %v976 = vpop.f32.mrf.mxu0
      %v977 = vadd.f32 0.0, %v976
      %978 = vmatmul.bf16.gmra.mxu0 %v957
      %v979 = vpop.f32.mrf.mxu0
      %v980 = vadd.f32 0.0, %v979
      %v981 = vpop.f32.mrf.mxu0
      %v982 = vadd.f32 0.0, %v981
      %983 = vdwg.mxu0
      %v984 = vmul.f32 %v975, 0.35355338
      %v985 = vmul.f32 %v977, 0.35355338
      %v986 = vmul.f32 %v980, 0.35355338
      %v987 = vmul.f32 %v982, 0.35355338
      %v988 = vadd.f32 %v984, %v891
      %v989 = vadd.f32 %v985, %v892
      %v990 = vadd.f32 %v986, %v893
      %v991 = vadd.f32 %v987, %v894
      %v992 = vsel %vm918, %v988, -inf
      %993 = vmax.xlane.f32.xlu0 %v992
      %v994 = vpop.xlane.xlu0 %993
      %v995 = vsel %vm918, %v989, -inf
      %996 = vmax.xlane.f32.xlu0 %v995
      %v997 = vpop.xlane.xlu0 %996
      %v998 = vsel %vm918, %v990, -inf
      %999 = vmax.xlane.f32.xlu0 %v998
      %v1000 = vpop.xlane.xlu0 %999
      %v1001 = vsel %vm918, %v991, -inf
      %1002 = vmax.xlane.f32.xlu0 %v1001
      %v1003 = vpop.xlane.xlu0 %1002
      %v1004 = vsub.f32 %v988, %v994
      %v1005 = vsub.f32 %v989, %v997
      %v1006 = vsub.f32 %v990, %v1000
      %v1007 = vsub.f32 %v991, %v1003
      %v1008 = vmul.f32 %v1004, 1.442695
      %v1009 = vpow.pop %v1008
      %v1010 = vmul.f32 %v1005, 1.442695
      %v1011 = vpow.pop %v1010
      %v1012 = vmul.f32 %v1006, 1.442695
      %v1013 = vpow.pop %v1012
      %v1014 = vmul.f32 %v1007, 1.442695
      %v1015 = vpow.pop %v1014
      %v1016 = vsel %vm918, %v1009, 0.0
      %1017 = vadd.xlane.f32.xlu0 %v1016
      %v1018 = vpop.xlane.xlu0 %1017
      %v1019 = vsel %vm918, %v1011, 0.0
      %1020 = vadd.xlane.f32.xlu0 %v1019
      %v1021 = vpop.xlane.xlu0 %1020
      %v1022 = vsel %vm918, %v1013, 0.0
      %1023 = vadd.xlane.f32.xlu0 %v1022
      %v1024 = vpop.xlane.xlu0 %1023
      %v1025 = vsel %vm918, %v1015, 0.0
      %1026 = vadd.xlane.f32.xlu0 %v1025
      %v1027 = vpop.xlane.xlu0 %1026
      %v1028 = vrcp.pop %v1018
      %v1029 = vrcp.pop %v1021
      %v1030 = vrcp.pop %v1024
      %v1031 = vrcp.pop %v1027
      %v1032 = vmul.f32 %v1009, %v1028
      %v1033 = vmul.f32 %v1011, %v1029
      %v1034 = vmul.f32 %v1013, %v1030
      %v1035 = vmul.f32 %v1015, %v1031
      %v1036 = vpack.c.bf16 %v1033, %v1032
      %v1037 = vpack.c.bf16 %v1035, %v1034
      %1038 = vrot.lane.b32.xlu0 %v944, 64
      %v1039 = vpop.permute.xlu0 %1038
      %1040 = vrot.lane.b32.xlu0 %v945, 64
      %v1041 = vpop.permute.xlu0 %1040
      %v1045 = vsel %vm918, %v1036, 0
      %v1048 = vsel %vm918, %v1037, 0
      %1050 = vmatpush.bf16.msra.mxu0 0
      %1051 = vmatpush.bf16.msra.mxu0 0
      %1052 = vmatpush.bf16.msra.mxu0 0
      %1053 = vmatpush.bf16.msra.mxu0 0
      %1054 = vmatpush.bf16.msra.mxu0 0
      %1055 = vmatpush.bf16.msra.mxu0 0
      %1056 = vmatpush.bf16.msra.mxu0 %v1041
      %1057 = vmatpush.bf16.msra.mxu0 %v1039
      %1058 = vmatmul.bf16.gmra.mxu0 %v1045
      %v1059 = vpop.f32.mrf.mxu0
      %v1060 = vadd.f32 0.0, %v1059
      %v1061 = vpop.f32.mrf.mxu0
      %v1062 = vadd.f32 0.0, %v1061
      %1063 = vmatmul.bf16.gmra.mxu0 %v1048
      %v1064 = vpop.f32.mrf.mxu0
      %v1065 = vadd.f32 0.0, %v1064
      %v1066 = vpop.f32.mrf.mxu0
      %v1067 = vadd.f32 0.0, %v1066
      %1068 = vdwg.mxu0
      %1069 = vrot.lane.b32.xlu0 %v944, 120
      %v1070 = vpop.permute.xlu0 %1069
      %1071 = vrot.lane.b32.xlu0 %v945, 120
      %v1072 = vpop.permute.xlu0 %1071
      %1073 = vrot.lane.b32.xlu0 %v944, 88
      %v1074 = vpop.permute.xlu0 %1073
      %1075 = vrot.lane.b32.xlu0 %v945, 88
      %v1076 = vpop.permute.xlu0 %1075
      %v1078 = vsel %vm952, %v1070, 0
      %v1081 = vsel %vm952, %v1072, 0
      %v1084 = vsel %vm952, %v1074, 0
      %v1087 = vsel %vm952, %v1076, 0
      %1089 = vmatpush.bf16.xpose.msra.mxu0 0
      %1090 = vmatpush.bf16.xpose.msra.mxu0 0
      %1091 = vmatpush.bf16.xpose.msra.mxu0 0
      %1092 = vmatpush.bf16.xpose.msra.mxu0 0
      %1093 = vmatpush.bf16.xpose.msra.mxu0 0
      %1094 = vmatpush.bf16.xpose.msra.mxu0 0
      %1095 = vmatpush.bf16.xpose.msra.mxu0 %v1087
      %1096 = vmatpush.bf16.xpose.msra.mxu0 %v1084
      %1097 = vmatmul.bf16.gmra.mxu0 %v1078
      %v1098 = vpop.f32.mrf.mxu0
      %v1099 = vadd.f32 0.0, %v1098
      %v1100 = vpop.f32.mrf.mxu0
      %v1101 = vadd.f32 0.0, %v1100
      %1102 = vmatmul.bf16.gmra.mxu0 %v1081
      %v1103 = vpop.f32.mrf.mxu0
      %v1104 = vadd.f32 0.0, %v1103
      %v1105 = vpop.f32.mrf.mxu0
      %v1106 = vadd.f32 0.0, %v1105
      %1107 = vdwg.mxu0
      %v1108 = vmul.f32 %v1099, 0.35355338
      %v1109 = vmul.f32 %v1101, 0.35355338
      %v1110 = vmul.f32 %v1104, 0.35355338
      %v1111 = vmul.f32 %v1106, 0.35355338
      %v1112 = vadd.f32 %v1108, %v891
      %v1113 = vadd.f32 %v1109, %v892
      %v1114 = vadd.f32 %v1110, %v893
      %v1115 = vadd.f32 %v1111, %v894
      %v1116 = vsel %vm918, %v1112, -inf
      %1117 = vmax.xlane.f32.xlu0 %v1116
      %v1118 = vpop.xlane.xlu0 %1117
      %v1119 = vsel %vm918, %v1113, -inf
      %1120 = vmax.xlane.f32.xlu0 %v1119
      %v1121 = vpop.xlane.xlu0 %1120
      %v1122 = vsel %vm918, %v1114, -inf
      %1123 = vmax.xlane.f32.xlu0 %v1122
      %v1124 = vpop.xlane.xlu0 %1123
      %v1125 = vsel %vm918, %v1115, -inf
      %1126 = vmax.xlane.f32.xlu0 %v1125
      %v1127 = vpop.xlane.xlu0 %1126
      %v1128 = vsub.f32 %v1112, %v1118
      %v1129 = vsub.f32 %v1113, %v1121
      %v1130 = vsub.f32 %v1114, %v1124
      %v1131 = vsub.f32 %v1115, %v1127
      %v1132 = vmul.f32 %v1128, 1.442695
      %v1133 = vpow.pop %v1132
      %v1134 = vmul.f32 %v1129, 1.442695
      %v1135 = vpow.pop %v1134
      %v1136 = vmul.f32 %v1130, 1.442695
      %v1137 = vpow.pop %v1136
      %v1138 = vmul.f32 %v1131, 1.442695
      %v1139 = vpow.pop %v1138
      %v1140 = vsel %vm918, %v1133, 0.0
      %1141 = vadd.xlane.f32.xlu0 %v1140
      %v1142 = vpop.xlane.xlu0 %1141
      %v1143 = vsel %vm918, %v1135, 0.0
      %1144 = vadd.xlane.f32.xlu0 %v1143
      %v1145 = vpop.xlane.xlu0 %1144
      %v1146 = vsel %vm918, %v1137, 0.0
      %1147 = vadd.xlane.f32.xlu0 %v1146
      %v1148 = vpop.xlane.xlu0 %1147
      %v1149 = vsel %vm918, %v1139, 0.0
      %1150 = vadd.xlane.f32.xlu0 %v1149
      %v1151 = vpop.xlane.xlu0 %1150
      %v1152 = vrcp.pop %v1142
      %v1153 = vrcp.pop %v1145
      %v1154 = vrcp.pop %v1148
      %v1155 = vrcp.pop %v1151
      %v1156 = vmul.f32 %v1133, %v1152
      %v1157 = vmul.f32 %v1135, %v1153
      %v1158 = vmul.f32 %v1137, %v1154
      %v1159 = vmul.f32 %v1139, %v1155
      %v1160 = vpack.c.bf16 %v1157, %v1156
      %v1161 = vpack.c.bf16 %v1159, %v1158
      %1162 = vrot.lane.b32.xlu0 %v944, 56
      %v1163 = vpop.permute.xlu0 %1162
      %1164 = vrot.lane.b32.xlu0 %v945, 56
      %v1165 = vpop.permute.xlu0 %1164
      %v1169 = vsel %vm918, %v1160, 0
      %v1172 = vsel %vm918, %v1161, 0
      %1174 = vmatpush.bf16.msra.mxu0 0
      %1175 = vmatpush.bf16.msra.mxu0 0
      %1176 = vmatpush.bf16.msra.mxu0 0
      %1177 = vmatpush.bf16.msra.mxu0 0
      %1178 = vmatpush.bf16.msra.mxu0 0
      %1179 = vmatpush.bf16.msra.mxu0 0
      %1180 = vmatpush.bf16.msra.mxu0 %v1165
      %1181 = vmatpush.bf16.msra.mxu0 %v1163
      %1182 = vmatmul.bf16.gmra.mxu0 %v1169
      %v1183 = vpop.f32.mrf.mxu0
      %v1184 = vadd.f32 0.0, %v1183
      %v1185 = vpop.f32.mrf.mxu0
      %v1186 = vadd.f32 0.0, %v1185
      %1187 = vmatmul.bf16.gmra.mxu0 %v1172
      %v1188 = vpop.f32.mrf.mxu0
      %v1189 = vadd.f32 0.0, %v1188
      %v1190 = vpop.f32.mrf.mxu0
      %v1191 = vadd.f32 0.0, %v1190
      %1192 = vdwg.mxu0
      %1193 = vrot.lane.b32.xlu0 %v944, 112
      %v1194 = vpop.permute.xlu0 %1193
      %1195 = vrot.lane.b32.xlu0 %v945, 112
      %v1196 = vpop.permute.xlu0 %1195
      %1197 = vrot.lane.b32.xlu0 %v944, 80
      %v1198 = vpop.permute.xlu0 %1197
      %1199 = vrot.lane.b32.xlu0 %v945, 80
      %v1200 = vpop.permute.xlu0 %1199
      %v1202 = vsel %vm952, %v1194, 0
      %v1205 = vsel %vm952, %v1196, 0
      %v1208 = vsel %vm952, %v1198, 0
      %v1211 = vsel %vm952, %v1200, 0
      %1213 = vmatpush.bf16.xpose.msra.mxu0 0
      %1214 = vmatpush.bf16.xpose.msra.mxu0 0
      %1215 = vmatpush.bf16.xpose.msra.mxu0 0
      %1216 = vmatpush.bf16.xpose.msra.mxu0 0
      %1217 = vmatpush.bf16.xpose.msra.mxu0 0
      %1218 = vmatpush.bf16.xpose.msra.mxu0 0
      %1219 = vmatpush.bf16.xpose.msra.mxu0 %v1211
      %1220 = vmatpush.bf16.xpose.msra.mxu0 %v1208
      %1221 = vmatmul.bf16.gmra.mxu0 %v1202
      %v1222 = vpop.f32.mrf.mxu0
      %v1223 = vadd.f32 0.0, %v1222
      %v1224 = vpop.f32.mrf.mxu0
      %v1225 = vadd.f32 0.0, %v1224
      %1226 = vmatmul.bf16.gmra.mxu0 %v1205
      %v1227 = vpop.f32.mrf.mxu0
      %v1228 = vadd.f32 0.0, %v1227
      %v1229 = vpop.f32.mrf.mxu0
      %v1230 = vadd.f32 0.0, %v1229
      %1231 = vdwg.mxu0
      %v1232 = vmul.f32 %v1223, 0.35355338
      %v1233 = vmul.f32 %v1225, 0.35355338
      %v1234 = vmul.f32 %v1228, 0.35355338
      %v1235 = vmul.f32 %v1230, 0.35355338
      %v1236 = vadd.f32 %v1232, %v891
      %v1237 = vadd.f32 %v1233, %v892
      %v1238 = vadd.f32 %v1234, %v893
      %v1239 = vadd.f32 %v1235, %v894
      %v1240 = vsel %vm918, %v1236, -inf
      %1241 = vmax.xlane.f32.xlu0 %v1240
      %v1242 = vpop.xlane.xlu0 %1241
      %v1243 = vsel %vm918, %v1237, -inf
      %1244 = vmax.xlane.f32.xlu0 %v1243
      %v1245 = vpop.xlane.xlu0 %1244
      %v1246 = vsel %vm918, %v1238, -inf
      %1247 = vmax.xlane.f32.xlu0 %v1246
      %v1248 = vpop.xlane.xlu0 %1247
      %v1249 = vsel %vm918, %v1239, -inf
      %1250 = vmax.xlane.f32.xlu0 %v1249
      %v1251 = vpop.xlane.xlu0 %1250
      %v1252 = vsub.f32 %v1236, %v1242
      %v1253 = vsub.f32 %v1237, %v1245
      %v1254 = vsub.f32 %v1238, %v1248
      %v1255 = vsub.f32 %v1239, %v1251
      %v1256 = vmul.f32 %v1252, 1.442695
      %v1257 = vpow.pop %v1256
      %v1258 = vmul.f32 %v1253, 1.442695
      %v1259 = vpow.pop %v1258
      %v1260 = vmul.f32 %v1254, 1.442695
      %v1261 = vpow.pop %v1260
      %v1262 = vmul.f32 %v1255, 1.442695
      %v1263 = vpow.pop %v1262
      %v1264 = vsel %vm918, %v1257, 0.0
      %1265 = vadd.xlane.f32.xlu0 %v1264
      %v1266 = vpop.xlane.xlu0 %1265
      %v1267 = vsel %vm918, %v1259, 0.0
      %1268 = vadd.xlane.f32.xlu0 %v1267
      %v1269 = vpop.xlane.xlu0 %1268
      %v1270 = vsel %vm918, %v1261, 0.0
      %1271 = vadd.xlane.f32.xlu0 %v1270
      %v1272 = vpop.xlane.xlu0 %1271
      %v1273 = vsel %vm918, %v1263, 0.0
      %1274 = vadd.xlane.f32.xlu0 %v1273
      %v1275 = vpop.xlane.xlu0 %1274
      %v1276 = vrcp.pop %v1266
      %v1277 = vrcp.pop %v1269
      %v1278 = vrcp.pop %v1272
      %v1279 = vrcp.pop %v1275
      %v1280 = vmul.f32 %v1257, %v1276
      %v1281 = vmul.f32 %v1259, %v1277
      %v1282 = vmul.f32 %v1261, %v1278
      %v1283 = vmul.f32 %v1263, %v1279
      %v1284 = vpack.c.bf16 %v1281, %v1280
      %v1285 = vpack.c.bf16 %v1283, %v1282
      %1286 = vrot.lane.b32.xlu0 %v944, 48
      %v1287 = vpop.permute.xlu0 %1286
      %1288 = vrot.lane.b32.xlu0 %v945, 48
      %v1289 = vpop.permute.xlu0 %1288
      %v1293 = vsel %vm918, %v1284, 0
      %v1296 = vsel %vm918, %v1285, 0
      %1298 = vmatpush.bf16.msra.mxu0 0
      %1299 = vmatpush.bf16.msra.mxu0 0
      %1300 = vmatpush.bf16.msra.mxu0 0
      %1301 = vmatpush.bf16.msra.mxu0 0
      %1302 = vmatpush.bf16.msra.mxu0 0
      %1303 = vmatpush.bf16.msra.mxu0 0
      %1304 = vmatpush.bf16.msra.mxu0 %v1289
      %1305 = vmatpush.bf16.msra.mxu0 %v1287
      %1306 = vmatmul.bf16.gmra.mxu0 %v1293
      %v1307 = vpop.f32.mrf.mxu0
      %v1308 = vadd.f32 0.0, %v1307
      %v1309 = vpop.f32.mrf.mxu0
      %v1310 = vadd.f32 0.0, %v1309
      %1311 = vmatmul.bf16.gmra.mxu0 %v1296
      %v1312 = vpop.f32.mrf.mxu0
      %v1313 = vadd.f32 0.0, %v1312
      %v1314 = vpop.f32.mrf.mxu0
      %v1315 = vadd.f32 0.0, %v1314
      %1316 = vdwg.mxu0
      %1317 = vrot.lane.b32.xlu0 %v944, 104
      %v1318 = vpop.permute.xlu0 %1317
      %1319 = vrot.lane.b32.xlu0 %v945, 104
      %v1320 = vpop.permute.xlu0 %1319
      %1321 = vrot.lane.b32.xlu0 %v944, 72
      %v1322 = vpop.permute.xlu0 %1321
      %1323 = vrot.lane.b32.xlu0 %v945, 72
      %v1324 = vpop.permute.xlu0 %1323
      %v1326 = vsel %vm952, %v1318, 0
      %v1329 = vsel %vm952, %v1320, 0
      %v1332 = vsel %vm952, %v1322, 0
      %v1335 = vsel %vm952, %v1324, 0
      %1337 = vmatpush.bf16.xpose.msra.mxu0 0
      %1338 = vmatpush.bf16.xpose.msra.mxu0 0
      %1339 = vmatpush.bf16.xpose.msra.mxu0 0
      %1340 = vmatpush.bf16.xpose.msra.mxu0 0
      %1341 = vmatpush.bf16.xpose.msra.mxu0 0
      %1342 = vmatpush.bf16.xpose.msra.mxu0 0
      %1343 = vmatpush.bf16.xpose.msra.mxu0 %v1335
      %1344 = vmatpush.bf16.xpose.msra.mxu0 %v1332
      %1345 = vmatmul.bf16.gmra.mxu0 %v1326
      %v1346 = vpop.f32.mrf.mxu0
      %v1347 = vadd.f32 0.0, %v1346
      %v1348 = vpop.f32.mrf.mxu0
      %v1349 = vadd.f32 0.0, %v1348
      %1350 = vmatmul.bf16.gmra.mxu0 %v1329
      %v1351 = vpop.f32.mrf.mxu0
      %v1352 = vadd.f32 0.0, %v1351
      %v1353 = vpop.f32.mrf.mxu0
      %v1354 = vadd.f32 0.0, %v1353
      %1355 = vdwg.mxu0
      %v1356 = vmul.f32 %v1347, 0.35355338
      %v1357 = vmul.f32 %v1349, 0.35355338
      %v1358 = vmul.f32 %v1352, 0.35355338
      %v1359 = vmul.f32 %v1354, 0.35355338
      %v1360 = vadd.f32 %v1356, %v891
      %v1361 = vadd.f32 %v1357, %v892
      %v1362 = vadd.f32 %v1358, %v893
      %v1363 = vadd.f32 %v1359, %v894
      %v1364 = vsel %vm918, %v1360, -inf
      %1365 = vmax.xlane.f32.xlu0 %v1364
      %v1366 = vpop.xlane.xlu0 %1365
      %v1367 = vsel %vm918, %v1361, -inf
      %1368 = vmax.xlane.f32.xlu0 %v1367
      %v1369 = vpop.xlane.xlu0 %1368
      %v1370 = vsel %vm918, %v1362, -inf
      %1371 = vmax.xlane.f32.xlu0 %v1370
      %v1372 = vpop.xlane.xlu0 %1371
      %v1373 = vsel %vm918, %v1363, -inf
      %1374 = vmax.xlane.f32.xlu0 %v1373
      %v1375 = vpop.xlane.xlu0 %1374
      %v1376 = vsub.f32 %v1360, %v1366
      %v1377 = vsub.f32 %v1361, %v1369
      %v1378 = vsub.f32 %v1362, %v1372
      %v1379 = vsub.f32 %v1363, %v1375
      %v1380 = vmul.f32 %v1376, 1.442695
      %v1381 = vpow.pop %v1380
      %v1382 = vmul.f32 %v1377, 1.442695
      %v1383 = vpow.pop %v1382
      %v1384 = vmul.f32 %v1378, 1.442695
      %v1385 = vpow.pop %v1384
      %v1386 = vmul.f32 %v1379, 1.442695
      %v1387 = vpow.pop %v1386
      %v1388 = vsel %vm918, %v1381, 0.0
      %1389 = vadd.xlane.f32.xlu0 %v1388
      %v1390 = vpop.xlane.xlu0 %1389
      %v1391 = vsel %vm918, %v1383, 0.0
      %1392 = vadd.xlane.f32.xlu0 %v1391
      %v1393 = vpop.xlane.xlu0 %1392
      %v1394 = vsel %vm918, %v1385, 0.0
      %1395 = vadd.xlane.f32.xlu0 %v1394
      %v1396 = vpop.xlane.xlu0 %1395
      %v1397 = vsel %vm918, %v1387, 0.0
      %1398 = vadd.xlane.f32.xlu0 %v1397
      %v1399 = vpop.xlane.xlu0 %1398
      %v1400 = vrcp.pop %v1390
      %v1401 = vrcp.pop %v1393
      %v1402 = vrcp.pop %v1396
      %v1403 = vrcp.pop %v1399
      %v1404 = vmul.f32 %v1381, %v1400
      %v1405 = vmul.f32 %v1383, %v1401
      %v1406 = vmul.f32 %v1385, %v1402
      %v1407 = vmul.f32 %v1387, %v1403
      %v1408 = vpack.c.bf16 %v1405, %v1404
      %v1409 = vpack.c.bf16 %v1407, %v1406
      %1410 = vrot.lane.b32.xlu0 %v944, 40
      %v1411 = vpop.permute.xlu0 %1410
      %1412 = vrot.lane.b32.xlu0 %v945, 40
      %v1413 = vpop.permute.xlu0 %1412
      %v1417 = vsel %vm918, %v1408, 0
      %v1420 = vsel %vm918, %v1409, 0
      %1422 = vmatpush.bf16.msra.mxu0 0
      %1423 = vmatpush.bf16.msra.mxu0 0
      %1424 = vmatpush.bf16.msra.mxu0 0
      %1425 = vmatpush.bf16.msra.mxu0 0
      %1426 = vmatpush.bf16.msra.mxu0 0
      %1427 = vmatpush.bf16.msra.mxu0 0
      %1428 = vmatpush.bf16.msra.mxu0 %v1413
      %1429 = vmatpush.bf16.msra.mxu0 %v1411
      %1430 = vmatmul.bf16.gmra.mxu0 %v1417
      %v1431 = vpop.f32.mrf.mxu0
      %v1432 = vadd.f32 0.0, %v1431
      %v1433 = vpop.f32.mrf.mxu0
      %v1434 = vadd.f32 0.0, %v1433
      %1435 = vmatmul.bf16.gmra.mxu0 %v1420
      %v1436 = vpop.f32.mrf.mxu0
      %v1437 = vadd.f32 0.0, %v1436
      %v1438 = vpop.f32.mrf.mxu0
      %v1439 = vadd.f32 0.0, %v1438
      %1440 = vdwg.mxu0
      %1445 = vrot.lane.b32.xlu0 %v1184, 8
      %v1446 = vpop.permute.xlu0 %1445
      %1447 = vrot.lane.b32.xlu0 %v1186, 8
      %v1448 = vpop.permute.xlu0 %1447
      %1449 = vrot.lane.b32.xlu0 %v1189, 8
      %v1450 = vpop.permute.xlu0 %1449
      %1451 = vrot.lane.b32.xlu0 %v1191, 8
      %v1452 = vpop.permute.xlu0 %1451
      %1461 = vrot.lane.b32.xlu0 %v1308, 16
      %v1462 = vpop.permute.xlu0 %1461
      %1463 = vrot.lane.b32.xlu0 %v1310, 16
      %v1464 = vpop.permute.xlu0 %1463
      %1465 = vrot.lane.b32.xlu0 %v1313, 16
      %v1466 = vpop.permute.xlu0 %1465
      %1467 = vrot.lane.b32.xlu0 %v1315, 16
      %v1468 = vpop.permute.xlu0 %1467
      %1477 = vrot.lane.b32.xlu0 %v1432, 24
      %v1478 = vpop.permute.xlu0 %1477
      %1479 = vrot.lane.b32.xlu0 %v1434, 24
      %v1480 = vpop.permute.xlu0 %1479
      %1481 = vrot.lane.b32.xlu0 %v1437, 24
      %v1482 = vpop.permute.xlu0 %1481
      %1483 = vrot.lane.b32.xlu0 %v1439, 24
      %v1484 = vpop.permute.xlu0 %1483
      %v1489 = vsel %vm952, %v1060, %v1446
      %v1490 = vsel %vm952, %v1062, %v1448
      %v1491 = vsel %vm952, %v1065, %v1450
      %v1492 = vsel %vm952, %v1067, %v1452
      %v1493 = vsel %vm736, %v1489, %v1462
      %v1494 = vsel %vm736, %v1490, %v1464
      %v1495 = vsel %vm736, %v1491, %v1466
      %v1496 = vsel %vm736, %v1492, %v1468
      %vm1497 = vcmask 195584
      %v1498 = vsel %vm1497, %v1493, %v1478
      %v1499 = vsel %vm1497, %v1494, %v1480
      %v1500 = vsel %vm1497, %v1495, %v1482
      %v1501 = vsel %vm1497, %v1496, %v1484
      %v1502 = vld [vmem:[%s10] sm:$0xf]
      %v1503 = vld [vmem:[%s10 + $0x4] sm:$0xf]
      %v1504 = vld [vmem:[%s10 + $0x8] sm:$0xf]
      %v1505 = vld [vmem:[%s10 + $0xc] sm:$0xf]
      %v1506 = vpack.c.bf16 %v1499, %v1498
      %v1507 = vpack.c.bf16 %v1501, %v1500
      %v1508 = vperm.slane %v895, 0
      %v1513 = vunpack.c.l.b16 %v1502
      %v1514 = vunpack.c.l.b16 %v1503
      %v1515 = vunpack.c.l.b16 %v1504
      %v1516 = vunpack.c.l.b16 %v1505
      %v1517 = vpack.c.b16 %v1514, %v1513
      %v1518 = vpack.c.b16 %v1516, %v1515
      %v1522 = vsel %vm918, %v1506, 0
      %v1525 = vsel %vm918, %v1507, 0
      %1527 = vmatpush.bf16.msra.mxu0 0
      %1528 = vmatpush.bf16.msra.mxu0 0
      %1529 = vmatpush.bf16.msra.mxu0 0
      %1530 = vmatpush.bf16.msra.mxu0 0
      %1531 = vmatpush.bf16.msra.mxu0 0
      %1532 = vmatpush.bf16.msra.mxu0 0
      %1533 = vmatpush.bf16.msra.mxu0 %v1518
      %1534 = vmatpush.bf16.msra.mxu0 %v1517
      %1535 = vmatmul.bf16.gmra.mxu0 %v1522
      %v1536 = vpop.f32.mrf.mxu0
      %v1537 = vadd.f32 %v1508, %v1536
      %v1538 = vpop.f32.mrf.mxu0
      %v1539 = vadd.f32 %v1508, %v1538
      %1540 = vmatmul.bf16.gmra.mxu0 %v1525
      %v1541 = vpop.f32.mrf.mxu0
      %v1542 = vadd.f32 %v1508, %v1541
      %v1543 = vpop.f32.mrf.mxu0
      %v1544 = vadd.f32 %v1508, %v1543
      %1545 = vdwg.mxu0
      %v1546 = vadd.f32 %v872, %v1537
      %v1547 = vadd.f32 %v874, %v1539
      %v1548 = vadd.f32 %v877, %v1542
      %v1549 = vadd.f32 %v879, %v1544
      %v1550 = vsel %vm918, %v1546, 0.0
      %1551 = vadd.xlane.f32.xlu0 %v1550
      %v1552 = vpop.xlane.xlu0 %1551
      %v1553 = vsel %vm918, %v1547, 0.0
      %1554 = vadd.xlane.f32.xlu0 %v1553
      %v1555 = vpop.xlane.xlu0 %1554
      %v1556 = vsel %vm918, %v1548, 0.0
      %1557 = vadd.xlane.f32.xlu0 %v1556
      %v1558 = vpop.xlane.xlu0 %1557
      %v1559 = vsel %vm918, %v1549, 0.0
      %1560 = vadd.xlane.f32.xlu0 %v1559
      %v1561 = vpop.xlane.xlu0 %1560
      %v1562 = vrcp.pop 32.0
      %v1563 = vmul.f32 32.0, %v1562
      %v1564 = vsub.f32 1.0, %v1563
      %v1565 = vmul.f32 %v1562, %v1564
      %v1566 = vadd.f32 %v1562, %v1565
      %vm1567 = vweird.f32 %v1562
      %v1568 = vsel %vm1567, %v1562, %v1566
      %v1569 = vmul.f32 %v1552, %v1568
      %v1570 = vmul.f32 %v1555, %v1568
      %v1571 = vmul.f32 %v1558, %v1568
      %v1572 = vmul.f32 %v1561, %v1568
      %v1573 = vsub.f32 %v1546, %v1569
      %v1574 = vsub.f32 %v1547, %v1570
      %v1575 = vsub.f32 %v1548, %v1571
      %v1576 = vsub.f32 %v1549, %v1572
      %v1577 = vmul.f32 %v1573, %v1573
      %v1578 = vmul.f32 %v1574, %v1574
      %v1579 = vmul.f32 %v1575, %v1575
      %v1580 = vmul.f32 %v1576, %v1576
      %v1581 = vsel %vm918, %v1577, 0.0
      %1582 = vadd.xlane.f32.xlu0 %v1581
      %v1583 = vpop.xlane.xlu0 %1582
      %v1584 = vsel %vm918, %v1578, 0.0
      %1585 = vadd.xlane.f32.xlu0 %v1584
      %v1586 = vpop.xlane.xlu0 %1585
      %v1587 = vsel %vm918, %v1579, 0.0
      %1588 = vadd.xlane.f32.xlu0 %v1587
      %v1589 = vpop.xlane.xlu0 %1588
      %v1590 = vsel %vm918, %v1580, 0.0
      %1591 = vadd.xlane.f32.xlu0 %v1590
      %v1592 = vpop.xlane.xlu0 %1591
      %v1593 = vmul.f32 %v1583, %v1568
      %v1594 = vmul.f32 %v1586, %v1568
      %v1595 = vmul.f32 %v1589, %v1568
      %v1596 = vmul.f32 %v1592, %v1568
      %v1597 = vadd.f32 %v1593, 1e-12
      %v1598 = vadd.f32 %v1594, 1e-12
      %v1599 = vadd.f32 %v1595, 1e-12
      %v1600 = vadd.f32 %v1596, 1e-12
      %v1601 = vrsqrt.pop %v1597
      %v1602 = vmul.f32 %v1601, %v1597
      %v1603 = vmul.f32 %v1602, %v1601
      %v1604 = vmul.f32 0.5, %v1603
      %v1605 = vsub.f32 1.5, %v1604
      %v1606 = vmul.f32 %v1601, %v1605
      %vm1607 = vweird.f32 %v1597
      %vm1608 = vweird.f32 %v1601
      %vm1609 = vmor %vm1607, %vm1608
      %v1610 = vsel %vm1609, %v1601, %v1606
      %v1611 = vrsqrt.pop %v1598
      %v1612 = vmul.f32 %v1611, %v1598
      %v1613 = vmul.f32 %v1612, %v1611
      %v1614 = vmul.f32 0.5, %v1613
      %v1615 = vsub.f32 1.5, %v1614
      %v1616 = vmul.f32 %v1611, %v1615
      %vm1617 = vweird.f32 %v1598
      %vm1618 = vweird.f32 %v1611
      %vm1619 = vmor %vm1617, %vm1618
      %v1620 = vsel %vm1619, %v1611, %v1616
      %v1621 = vrsqrt.pop %v1599
      %v1622 = vmul.f32 %v1621, %v1599
      %v1623 = vmul.f32 %v1622, %v1621
      %v1624 = vmul.f32 0.5, %v1623
      %v1625 = vsub.f32 1.5, %v1624
      %v1626 = vmul.f32 %v1621, %v1625
      %vm1627 = vweird.f32 %v1599
      %vm1628 = vweird.f32 %v1621
      %vm1629 = vmor %vm1627, %vm1628
      %v1630 = vsel %vm1629, %v1621, %v1626
      %v1631 = vrsqrt.pop %v1600
      %v1632 = vmul.f32 %v1631, %v1600
      %v1633 = vmul.f32 %v1632, %v1631
      %v1634 = vmul.f32 0.5, %v1633
      %v1635 = vsub.f32 1.5, %v1634
      %v1636 = vmul.f32 %v1631, %v1635
      %vm1637 = vweird.f32 %v1600
      %vm1638 = vweird.f32 %v1631
      %vm1639 = vmor %vm1637, %vm1638
      %v1640 = vsel %vm1639, %v1631, %v1636
      %v1641 = vmul.f32 %v1573, %v1610
      %v1642 = vmul.f32 %v1574, %v1620
      %v1643 = vmul.f32 %v1575, %v1630
      %v1644 = vmul.f32 %v1576, %v1640
      %v1645 = vperm.slane %v895, 2
      %v1646 = vmul.f32 %v1641, %v1645
      %v1647 = vmul.f32 %v1642, %v1645
      %v1648 = vmul.f32 %v1643, %v1645
      %v1649 = vmul.f32 %v1644, %v1645
      %v1650 = vperm.slane %v895, 3
      %v1651 = vadd.f32 %v1646, %v1650
      %v1652 = vadd.f32 %v1647, %v1650
      %v1653 = vadd.f32 %v1648, %v1650
      %v1654 = vadd.f32 %v1649, %v1650
      %v1655 = vld [vmem:[%s11] sm:$0xf]
      %v1656 = vld [vmem:[%s11 + $0x4] sm:$0xf]
      %v1657 = vld [vmem:[%s11 + $0x8] sm:$0xf]
      %v1658 = vld [vmem:[%s11 + $0xc] sm:$0xf]
      %v1659 = vpack.c.bf16 %v1652, %v1651
      %v1660 = vpack.c.bf16 %v1654, %v1653
      %v1661 = vld [vmem:[%s12] sm:$0x1]
      %v1663 = vperm.slane %v1661, 0
      %v1669 = vunpack.c.l.b16 %v1655
      %v1670 = vunpack.c.l.b16 %v1656
      %v1671 = vunpack.c.l.b16 %v1657
      %v1672 = vunpack.c.l.b16 %v1658
      %v1673 = vpack.c.b16 %v1670, %v1669
      %v1674 = vpack.c.b16 %v1672, %v1671
      %v1678 = vsel %vm918, %v1659, 0
      %v1681 = vsel %vm918, %v1660, 0
      %1683 = vmatpush.bf16.msra.mxu0 0
      %1684 = vmatpush.bf16.msra.mxu0 0
      %1685 = vmatpush.bf16.msra.mxu0 0
      %1686 = vmatpush.bf16.msra.mxu0 0
      %1687 = vmatpush.bf16.msra.mxu0 0
      %1688 = vmatpush.bf16.msra.mxu0 0
      %1689 = vmatpush.bf16.msra.mxu0 %v1674
      %1690 = vmatpush.bf16.msra.mxu0 %v1673
      %1691 = vmatmul.bf16.gmra.mxu0 %v1678
      %v1692 = vpop.f32.mrf.mxu0
      %v1693 = vadd.f32 %v1663, %v1692
      %v1694 = vpop.f32.mrf.mxu0
      %v1695 = vadd.f32 %v1663, %v1694
      %1696 = vmatmul.bf16.gmra.mxu0 %v1681
      %v1697 = vpop.f32.mrf.mxu0
      %v1698 = vadd.f32 %v1663, %v1697
      %v1699 = vpop.f32.mrf.mxu0
      %v1700 = vadd.f32 %v1663, %v1699
      %1701 = vdwg.mxu0
      %v1702 = vmul.f32 %v1693, 0.5
      %v1703 = vmul.f32 %v1695, 0.5
      %v1704 = vmul.f32 %v1698, 0.5
      %v1705 = vmul.f32 %v1700, 0.5
      %v1706 = vmul.f32 %v1693, 0.70710677
      %v1707 = vmul.f32 %v1695, 0.70710677
      %v1708 = vmul.f32 %v1698, 0.70710677
      %v1709 = vmul.f32 %v1700, 0.70710677
      %v1710 = vmul.f32 %v1706, %v1706
      %v1711 = vmin.f32 16.0, %v1710
      %v1712 = vmul.f32 %v1711, 2.1237322e-06
      %v1713 = vadd.f32 %v1712, 0.00028619796
      %v1714 = vmul.f32 %v1711, %v1713
      %v1715 = vadd.f32 %v1714, 0.0036580483
      %v1716 = vmul.f32 %v1711, %v1715
      %v1717 = vadd.f32 %v1716, 0.05243302
      %v1718 = vmul.f32 %v1711, %v1717
      %v1719 = vadd.f32 %v1718, 0.18741608
      %v1720 = vmul.f32 %v1711, %v1719
      %v1721 = vadd.f32 %v1720, 1.1283791
      %v1722 = vmul.f32 %v1706, %v1721
      %v1723 = vmul.f32 %v1711, 3.8918573e-05
      %v1724 = vadd.f32 %v1723, 0.001143296
      %v1725 = vmul.f32 %v1711, %v1724
      %v1726 = vadd.f32 %v1725, 0.014752088
      %v1727 = vmul.f32 %v1711, %v1726
      %v1728 = vadd.f32 %v1727, 0.112945676
      %v1729 = vmul.f32 %v1711, %v1728
      %v1730 = vadd.f32 %v1729, 0.4994258
      %v1731 = vmul.f32 %v1711, %v1730
      %v1732 = vadd.f32 %v1731, 1.0
      %v1733 = vrcp.pop %v1732
      %v1734 = vmul.f32 %v1732, %v1733
      %v1735 = vsub.f32 1.0, %v1734
      %v1736 = vmul.f32 %v1733, %v1735
      %v1737 = vadd.f32 %v1733, %v1736
      %vm1738 = vweird.f32 %v1732
      %vm1739 = vweird.f32 %v1733
      %vm1740 = vmor %vm1738, %vm1739
      %v1741 = vsel %vm1740, %v1733, %v1737
      %v1742 = vand.u32 2147483647, %v1732
      %vm1743 = vcmp.eq.f32.partialorder %v1742, 8.507059e+37
      %v1744 = vand.u32 %v1732, 2147483648
      %v1745 = vor.u32 1.1754944e-38, %v1744
      %v1746 = vsel %vm1743, %v1745, %v1741
      %v1747 = vmul.f32 %v1722, %v1746
      %v1748 = vmin.f32 %v1747, 1.0
      %v1749 = vmax.f32 %v1748, -1.0
      %v1750 = vmul.f32 %v1707, %v1707
      %v1751 = vmin.f32 16.0, %v1750
      %v1752 = vmul.f32 %v1751, 2.1237322e-06
      %v1753 = vadd.f32 %v1752, 0.00028619796
      %v1754 = vmul.f32 %v1751, %v1753
      %v1755 = vadd.f32 %v1754, 0.0036580483
      %v1756 = vmul.f32 %v1751, %v1755
      %v1757 = vadd.f32 %v1756, 0.05243302
      %v1758 = vmul.f32 %v1751, %v1757
      %v1759 = vadd.f32 %v1758, 0.18741608
      %v1760 = vmul.f32 %v1751, %v1759
      %v1761 = vadd.f32 %v1760, 1.1283791
      %v1762 = vmul.f32 %v1707, %v1761
      %v1763 = vmul.f32 %v1751, 3.8918573e-05
      %v1764 = vadd.f32 %v1763, 0.001143296
      %v1765 = vmul.f32 %v1751, %v1764
      %v1766 = vadd.f32 %v1765, 0.014752088
      %v1767 = vmul.f32 %v1751, %v1766
      %v1768 = vadd.f32 %v1767, 0.112945676
      %v1769 = vmul.f32 %v1751, %v1768
      %v1770 = vadd.f32 %v1769, 0.4994258
      %v1771 = vmul.f32 %v1751, %v1770
      %v1772 = vadd.f32 %v1771, 1.0
      %v1773 = vrcp.pop %v1772
      %v1774 = vmul.f32 %v1772, %v1773
      %v1775 = vsub.f32 1.0, %v1774
      %v1776 = vmul.f32 %v1773, %v1775
      %v1777 = vadd.f32 %v1773, %v1776
      %vm1778 = vweird.f32 %v1772
      %vm1779 = vweird.f32 %v1773
      %vm1780 = vmor %vm1778, %vm1779
      %v1781 = vsel %vm1780, %v1773, %v1777
      %v1782 = vand.u32 2147483647, %v1772
      %vm1783 = vcmp.eq.f32.partialorder %v1782, 8.507059e+37
      %v1784 = vand.u32 %v1772, 2147483648
      %v1785 = vor.u32 1.1754944e-38, %v1784
      %v1786 = vsel %vm1783, %v1785, %v1781
      %v1787 = vmul.f32 %v1762, %v1786
      %v1788 = vmin.f32 %v1787, 1.0
      %v1789 = vmax.f32 %v1788, -1.0
      %v1790 = vmul.f32 %v1708, %v1708
      %v1791 = vmin.f32 16.0, %v1790
      %v1792 = vmul.f32 %v1791, 2.1237322e-06
      %v1793 = vadd.f32 %v1792, 0.00028619796
      %v1794 = vmul.f32 %v1791, %v1793
      %v1795 = vadd.f32 %v1794, 0.0036580483
      %v1796 = vmul.f32 %v1791, %v1795
      %v1797 = vadd.f32 %v1796, 0.05243302
      %v1798 = vmul.f32 %v1791, %v1797
      %v1799 = vadd.f32 %v1798, 0.18741608
      %v1800 = vmul.f32 %v1791, %v1799
      %v1801 = vadd.f32 %v1800, 1.1283791
      %v1802 = vmul.f32 %v1708, %v1801
      %v1803 = vmul.f32 %v1791, 3.8918573e-05
      %v1804 = vadd.f32 %v1803, 0.001143296
      %v1805 = vmul.f32 %v1791, %v1804
      %v1806 = vadd.f32 %v1805, 0.014752088
      %v1807 = vmul.f32 %v1791, %v1806
      %v1808 = vadd.f32 %v1807, 0.112945676
      %v1809 = vmul.f32 %v1791, %v1808
      %v1810 = vadd.f32 %v1809, 0.4994258
      %v1811 = vmul.f32 %v1791, %v1810
      %v1812 = vadd.f32 %v1811, 1.0
      %v1813 = vrcp.pop %v1812
      %v1814 = vmul.f32 %v1812, %v1813
      %v1815 = vsub.f32 1.0, %v1814
      %v1816 = vmul.f32 %v1813, %v1815
      %v1817 = vadd.f32 %v1813, %v1816
      %vm1818 = vweird.f32 %v1812
      %vm1819 = vweird.f32 %v1813
      %vm1820 = vmor %vm1818, %vm1819
      %v1821 = vsel %vm1820, %v1813, %v1817
      %v1822 = vand.u32 2147483647, %v1812
      %vm1823 = vcmp.eq.f32.partialorder %v1822, 8.507059e+37
      %v1824 = vand.u32 %v1812, 2147483648
      %v1825 = vor.u32 1.1754944e-38, %v1824
      %v1826 = vsel %vm1823, %v1825, %v1821
      %v1827 = vmul.f32 %v1802, %v1826
      %v1828 = vmin.f32 %v1827, 1.0
      %v1829 = vmax.f32 %v1828, -1.0
      %v1830 = vmul.f32 %v1709, %v1709
      %v1831 = vmin.f32 16.0, %v1830
      %v1832 = vmul.f32 %v1831, 2.1237322e-06
      %v1833 = vadd.f32 %v1832, 0.00028619796
      %v1834 = vmul.f32 %v1831, %v1833
      %v1835 = vadd.f32 %v1834, 0.0036580483
      %v1836 = vmul.f32 %v1831, %v1835
      %v1837 = vadd.f32 %v1836, 0.05243302
      %v1838 = vmul.f32 %v1831, %v1837
      %v1839 = vadd.f32 %v1838, 0.18741608
      %v1840 = vmul.f32 %v1831, %v1839
      %v1841 = vadd.f32 %v1840, 1.1283791
      %v1842 = vmul.f32 %v1709, %v1841
      %v1843 = vmul.f32 %v1831, 3.8918573e-05
      %v1844 = vadd.f32 %v1843, 0.001143296
      %v1845 = vmul.f32 %v1831, %v1844
      %v1846 = vadd.f32 %v1845, 0.014752088
      %v1847 = vmul.f32 %v1831, %v1846
      %v1848 = vadd.f32 %v1847, 0.112945676
      %v1849 = vmul.f32 %v1831, %v1848
      %v1850 = vadd.f32 %v1849, 0.4994258
      %v1851 = vmul.f32 %v1831, %v1850
      %v1852 = vadd.f32 %v1851, 1.0
      %v1853 = vrcp.pop %v1852
      %v1854 = vmul.f32 %v1852, %v1853
      %v1855 = vsub.f32 1.0, %v1854
      %v1856 = vmul.f32 %v1853, %v1855
      %v1857 = vadd.f32 %v1853, %v1856
      %vm1858 = vweird.f32 %v1852
      %vm1859 = vweird.f32 %v1853
      %vm1860 = vmor %vm1858, %vm1859
      %v1861 = vsel %vm1860, %v1853, %v1857
      %v1862 = vand.u32 2147483647, %v1852
      %vm1863 = vcmp.eq.f32.partialorder %v1862, 8.507059e+37
      %v1864 = vand.u32 %v1852, 2147483648
      %v1865 = vor.u32 1.1754944e-38, %v1864
      %v1866 = vsel %vm1863, %v1865, %v1861
      %v1867 = vmul.f32 %v1842, %v1866
      %v1868 = vmin.f32 %v1867, 1.0
      %v1869 = vmax.f32 %v1868, -1.0
      %v1870 = vadd.f32 %v1749, 1.0
      %v1871 = vadd.f32 %v1789, 1.0
      %v1872 = vadd.f32 %v1829, 1.0
      %v1873 = vadd.f32 %v1869, 1.0
      %v1874 = vmul.f32 %v1702, %v1870
      %v1875 = vmul.f32 %v1703, %v1871
      %v1876 = vmul.f32 %v1704, %v1872
      %v1877 = vmul.f32 %v1705, %v1873
      %v1878 = vld [vmem:[%s13] sm:$0xf]
      %v1879 = vld [vmem:[%s13 + $0x4] sm:$0xf]
      %v1880 = vld [vmem:[%s13 + $0x8] sm:$0xf]
      %v1881 = vld [vmem:[%s13 + $0xc] sm:$0xf]
      %v1882 = vld [vmem:[%s13 + $0x10] sm:$0xf]
      %v1883 = vld [vmem:[%s13 + $0x14] sm:$0xf]
      %v1884 = vld [vmem:[%s13 + $0x18] sm:$0xf]
      %v1885 = vld [vmem:[%s13 + $0x1c] sm:$0xf]
      %v1886 = vpack.c.bf16 %v1875, %v1874
      %v1887 = vpack.c.bf16 %v1877, %v1876
      %v1888 = vperm.slane %v895, 1
      %v1897 = vunpack.c.l.b16 %v1878
      %v1898 = vunpack.c.l.b16 %v1879
      %v1899 = vunpack.c.l.b16 %v1880
      %v1900 = vunpack.c.l.b16 %v1881
      %v1901 = vunpack.c.l.b16 %v1882
      %v1902 = vunpack.c.l.b16 %v1883
      %v1903 = vunpack.c.l.b16 %v1884
      %v1904 = vunpack.c.l.b16 %v1885
      %v1905 = vpack.c.b16 %v1898, %v1897
      %v1906 = vpack.c.b16 %v1900, %v1899
      %v1907 = vpack.c.b16 %v1902, %v1901
      %v1908 = vpack.c.b16 %v1904, %v1903
      %vm1913 = vcmask 523264
      %v1915 = vsel %vm1913, %v1886, 0
      %v1918 = vsel %vm1913, %v1887, 0
      %1920 = vmatpush.bf16.msra.mxu0 0
      %1921 = vmatpush.bf16.msra.mxu0 0
      %1922 = vmatpush.bf16.msra.mxu0 0
      %1923 = vmatpush.bf16.msra.mxu0 0
      %1924 = vmatpush.bf16.msra.mxu0 %v1908
      %1925 = vmatpush.bf16.msra.mxu0 %v1907
      %1926 = vmatpush.bf16.msra.mxu0 %v1906
      %1927 = vmatpush.bf16.msra.mxu0 %v1905
      %1928 = vmatmul.bf16.gmra.mxu0 %v1915
      %v1929 = vpop.f32.mrf.mxu0
      %v1930 = vadd.f32 %v1888, %v1929
      %v1931 = vpop.f32.mrf.mxu0
      %v1932 = vadd.f32 %v1888, %v1931
      %1933 = vmatmul.bf16.gmra.mxu0 %v1918
      %v1934 = vpop.f32.mrf.mxu0
      %v1935 = vadd.f32 %v1888, %v1934
      %v1936 = vpop.f32.mrf.mxu0
      %v1937 = vadd.f32 %v1888, %v1936
      %1938 = vdwg.mxu0
      %v1939 = vadd.f32 %v1651, %v1930
      %v1940 = vadd.f32 %v1652, %v1932
      %v1941 = vadd.f32 %v1653, %v1935
      %v1942 = vadd.f32 %v1654, %v1937
      %v1943 = vsel %vm918, %v1939, 0.0
      %1944 = vadd.xlane.f32.xlu0 %v1943
      %v1945 = vpop.xlane.xlu0 %1944
      %v1946 = vsel %vm918, %v1940, 0.0
      %1947 = vadd.xlane.f32.xlu0 %v1946
      %v1948 = vpop.xlane.xlu0 %1947
      %v1949 = vsel %vm918, %v1941, 0.0
      %1950 = vadd.xlane.f32.xlu0 %v1949
      %v1951 = vpop.xlane.xlu0 %1950
      %v1952 = vsel %vm918, %v1942, 0.0
      %1953 = vadd.xlane.f32.xlu0 %v1952
      %v1954 = vpop.xlane.xlu0 %1953
      %v1955 = vmul.f32 %v1945, %v1568
      %v1956 = vmul.f32 %v1948, %v1568
      %v1957 = vmul.f32 %v1951, %v1568
      %v1958 = vmul.f32 %v1954, %v1568
      %v1959 = vsub.f32 %v1939, %v1955
      %v1960 = vsub.f32 %v1940, %v1956
      %v1961 = vsub.f32 %v1941, %v1957
      %v1962 = vsub.f32 %v1942, %v1958
      %v1963 = vmul.f32 %v1959, %v1959
      %v1964 = vmul.f32 %v1960, %v1960
      %v1965 = vmul.f32 %v1961, %v1961
      %v1966 = vmul.f32 %v1962, %v1962
      %v1967 = vsel %vm918, %v1963, 0.0
      %1968 = vadd.xlane.f32.xlu0 %v1967
      %v1969 = vpop.xlane.xlu0 %1968
      %v1970 = vsel %vm918, %v1964, 0.0
      %1971 = vadd.xlane.f32.xlu0 %v1970
      %v1972 = vpop.xlane.xlu0 %1971
      %v1973 = vsel %vm918, %v1965, 0.0
      %1974 = vadd.xlane.f32.xlu0 %v1973
      %v1975 = vpop.xlane.xlu0 %1974
      %v1976 = vsel %vm918, %v1966, 0.0
      %1977 = vadd.xlane.f32.xlu0 %v1976
      %v1978 = vpop.xlane.xlu0 %1977
      %v1979 = vmul.f32 %v1969, %v1568
      %v1980 = vmul.f32 %v1972, %v1568
      %v1981 = vmul.f32 %v1975, %v1568
      %v1982 = vmul.f32 %v1978, %v1568
      %v1983 = vadd.f32 %v1979, 1e-12
      %v1984 = vadd.f32 %v1980, 1e-12
      %v1985 = vadd.f32 %v1981, 1e-12
      %v1986 = vadd.f32 %v1982, 1e-12
      %v1987 = vrsqrt.pop %v1983
      %v1988 = vmul.f32 %v1987, %v1983
      %v1989 = vmul.f32 %v1988, %v1987
      %v1990 = vmul.f32 0.5, %v1989
      %v1991 = vsub.f32 1.5, %v1990
      %v1992 = vmul.f32 %v1987, %v1991
      %vm1993 = vweird.f32 %v1983
      %vm1994 = vweird.f32 %v1987
      %vm1995 = vmor %vm1993, %vm1994
      %v1996 = vsel %vm1995, %v1987, %v1992
      %v1997 = vrsqrt.pop %v1984
      %v1998 = vmul.f32 %v1997, %v1984
      %v1999 = vmul.f32 %v1998, %v1997
      %v2000 = vmul.f32 0.5, %v1999
      %v2001 = vsub.f32 1.5, %v2000
      %v2002 = vmul.f32 %v1997, %v2001
      %vm2003 = vweird.f32 %v1984
      %vm2004 = vweird.f32 %v1997
      %vm2005 = vmor %vm2003, %vm2004
      %v2006 = vsel %vm2005, %v1997, %v2002
      %v2007 = vrsqrt.pop %v1985
      %v2008 = vmul.f32 %v2007, %v1985
      %v2009 = vmul.f32 %v2008, %v2007
      %v2010 = vmul.f32 0.5, %v2009
      %v2011 = vsub.f32 1.5, %v2010
      %v2012 = vmul.f32 %v2007, %v2011
      %vm2013 = vweird.f32 %v1985
      %vm2014 = vweird.f32 %v2007
      %vm2015 = vmor %vm2013, %vm2014
      %v2016 = vsel %vm2015, %v2007, %v2012
      %v2017 = vrsqrt.pop %v1986
      %v2018 = vmul.f32 %v2017, %v1986
      %v2019 = vmul.f32 %v2018, %v2017
      %v2020 = vmul.f32 0.5, %v2019
      %v2021 = vsub.f32 1.5, %v2020
      %v2022 = vmul.f32 %v2017, %v2021
      %vm2023 = vweird.f32 %v1986
      %vm2024 = vweird.f32 %v2017
      %vm2025 = vmor %vm2023, %vm2024
      %v2026 = vsel %vm2025, %v2017, %v2022
      %v2027 = vmul.f32 %v1959, %v1996
      %v2028 = vmul.f32 %v1960, %v2006
      %v2029 = vmul.f32 %v1961, %v2016
      %v2030 = vmul.f32 %v1962, %v2026
      %v2031 = vperm.slane %v895, 4
      %v2032 = vmul.f32 %v2027, %v2031
      %v2033 = vmul.f32 %v2028, %v2031
      %v2034 = vmul.f32 %v2029, %v2031
      %v2035 = vmul.f32 %v2030, %v2031
      %v2036 = vperm.slane %v895, 5
      %v2037 = vadd.f32 %v2032, %v2036
      %v2038 = vadd.f32 %v2033, %v2036
      %v2039 = vadd.f32 %v2034, %v2036
      %v2040 = vadd.f32 %v2035, %v2036
      %s2041 = scalar_lea.vmem %s14, 8
      %v2042 = vld [vmem:[%s2041] sm:$0x3f]
      %s2043 = scalar_lea.vmem %s8, 16
      %v2044 = vld [vmem:[%s2043] sm:$0xf]
      %v2045 = vld [vmem:[%s2043 + $0x4] sm:$0xf]
      %v2046 = vld [vmem:[%s2043 + $0x8] sm:$0xf]
      %v2047 = vld [vmem:[%s2043 + $0xc] sm:$0xf]
      %v2048 = vpack.c.bf16 %v2038, %v2037
      %v2049 = vpack.c.bf16 %v2040, %v2039
      %s2050 = scalar_lea.vmem %s9, 1
      %v2051 = vld [vmem:[%s2050] sm:$0x1]
      %v2053 = vperm.slane %v2051, 0
      %v2059 = vunpack.c.l.b16 %v2044
      %v2060 = vunpack.c.l.b16 %v2045
      %v2061 = vunpack.c.l.b16 %v2046
      %v2062 = vunpack.c.l.b16 %v2047
      %v2063 = vpack.c.b16 %v2060, %v2059
      %v2064 = vpack.c.b16 %v2062, %v2061
      %v2068 = vsel %vm918, %v2048, 0
      %v2071 = vsel %vm918, %v2049, 0
      %2073 = vmatpush.bf16.msra.mxu0 0
      %2074 = vmatpush.bf16.msra.mxu0 0
      %2075 = vmatpush.bf16.msra.mxu0 0
      %2076 = vmatpush.bf16.msra.mxu0 0
      %2077 = vmatpush.bf16.msra.mxu0 0
      %2078 = vmatpush.bf16.msra.mxu0 0
      %2079 = vmatpush.bf16.msra.mxu0 %v2064
      %2080 = vmatpush.bf16.msra.mxu0 %v2063
      %2081 = vmatmul.bf16.gmra.mxu0 %v2068
      %v2082 = vpop.f32.mrf.mxu0
      %v2083 = vadd.f32 %v2053, %v2082
      %v2084 = vpop.f32.mrf.mxu0
      %v2085 = vadd.f32 %v2053, %v2084
      %2086 = vmatmul.bf16.gmra.mxu0 %v2071
      %v2087 = vpop.f32.mrf.mxu0
      %v2088 = vadd.f32 %v2053, %v2087
      %v2089 = vpop.f32.mrf.mxu0
      %v2090 = vadd.f32 %v2053, %v2089
      %2091 = vdwg.mxu0
      %v2092 = vpack.c.bf16 %v2085, %v2083
      %v2093 = vpack.c.bf16 %v2090, %v2088
      %2096 = vrot.lane.b32.xlu0 %v2092, 96
      %v2097 = vpop.permute.xlu0 %2096
      %2098 = vrot.lane.b32.xlu0 %v2093, 96
      %v2099 = vpop.permute.xlu0 %2098
      %v2101 = vsel %vm952, %v2092, 0
      %v2104 = vsel %vm952, %v2093, 0
      %v2107 = vsel %vm952, %v2097, 0
      %v2110 = vsel %vm952, %v2099, 0
      %2112 = vmatpush.bf16.xpose.msra.mxu0 0
      %2113 = vmatpush.bf16.xpose.msra.mxu0 0
      %2114 = vmatpush.bf16.xpose.msra.mxu0 0
      %2115 = vmatpush.bf16.xpose.msra.mxu0 0
      %2116 = vmatpush.bf16.xpose.msra.mxu0 0
      %2117 = vmatpush.bf16.xpose.msra.mxu0 0
      %2118 = vmatpush.bf16.xpose.msra.mxu0 %v2110
      %2119 = vmatpush.bf16.xpose.msra.mxu0 %v2107
      %2120 = vmatmul.bf16.gmra.mxu0 %v2101
      %v2121 = vpop.f32.mrf.mxu0
      %v2122 = vadd.f32 0.0, %v2121
      %v2123 = vpop.f32.mrf.mxu0
      %v2124 = vadd.f32 0.0, %v2123
      %2125 = vmatmul.bf16.gmra.mxu0 %v2104
      %v2126 = vpop.f32.mrf.mxu0
      %v2127 = vadd.f32 0.0, %v2126
      %v2128 = vpop.f32.mrf.mxu0
      %v2129 = vadd.f32 0.0, %v2128
      %2130 = vdwg.mxu0
      %v2131 = vmul.f32 %v2122, 0.35355338
      %v2132 = vmul.f32 %v2124, 0.35355338
      %v2133 = vmul.f32 %v2127, 0.35355338
      %v2134 = vmul.f32 %v2129, 0.35355338
      %v2135 = vadd.f32 %v2131, %v891
      %v2136 = vadd.f32 %v2132, %v892
      %v2137 = vadd.f32 %v2133, %v893
      %v2138 = vadd.f32 %v2134, %v894
      %v2139 = vsel %vm918, %v2135, -inf
      %2140 = vmax.xlane.f32.xlu0 %v2139
      %v2141 = vpop.xlane.xlu0 %2140
      %v2142 = vsel %vm918, %v2136, -inf
      %2143 = vmax.xlane.f32.xlu0 %v2142
      %v2144 = vpop.xlane.xlu0 %2143
      %v2145 = vsel %vm918, %v2137, -inf
      %2146 = vmax.xlane.f32.xlu0 %v2145
      %v2147 = vpop.xlane.xlu0 %2146
      %v2148 = vsel %vm918, %v2138, -inf
      %2149 = vmax.xlane.f32.xlu0 %v2148
      %v2150 = vpop.xlane.xlu0 %2149
      %v2151 = vsub.f32 %v2135, %v2141
      %v2152 = vsub.f32 %v2136, %v2144
      %v2153 = vsub.f32 %v2137, %v2147
      %v2154 = vsub.f32 %v2138, %v2150
      %v2155 = vmul.f32 %v2151, 1.442695
      %v2156 = vpow.pop %v2155
      %v2157 = vmul.f32 %v2152, 1.442695
      %v2158 = vpow.pop %v2157
      %v2159 = vmul.f32 %v2153, 1.442695
      %v2160 = vpow.pop %v2159
      %v2161 = vmul.f32 %v2154, 1.442695
      %v2162 = vpow.pop %v2161
      %v2163 = vsel %vm918, %v2156, 0.0
      %2164 = vadd.xlane.f32.xlu0 %v2163
      %v2165 = vpop.xlane.xlu0 %2164
      %v2166 = vsel %vm918, %v2158, 0.0
      %2167 = vadd.xlane.f32.xlu0 %v2166
      %v2168 = vpop.xlane.xlu0 %2167
      %v2169 = vsel %vm918, %v2160, 0.0
      %2170 = vadd.xlane.f32.xlu0 %v2169
      %v2171 = vpop.xlane.xlu0 %2170
      %v2172 = vsel %vm918, %v2162, 0.0
      %2173 = vadd.xlane.f32.xlu0 %v2172
      %v2174 = vpop.xlane.xlu0 %2173
      %v2175 = vrcp.pop %v2165
      %v2176 = vrcp.pop %v2168
      %v2177 = vrcp.pop %v2171
      %v2178 = vrcp.pop %v2174
      %v2179 = vmul.f32 %v2156, %v2175
      %v2180 = vmul.f32 %v2158, %v2176
      %v2181 = vmul.f32 %v2160, %v2177
      %v2182 = vmul.f32 %v2162, %v2178
      %v2183 = vpack.c.bf16 %v2180, %v2179
      %v2184 = vpack.c.bf16 %v2182, %v2181
      %2185 = vrot.lane.b32.xlu0 %v2092, 64
      %v2186 = vpop.permute.xlu0 %2185
      %2187 = vrot.lane.b32.xlu0 %v2093, 64
      %v2188 = vpop.permute.xlu0 %2187
      %v2192 = vsel %vm918, %v2183, 0
      %v2195 = vsel %vm918, %v2184, 0
      %2197 = vmatpush.bf16.msra.mxu0 0
      %2198 = vmatpush.bf16.msra.mxu0 0
      %2199 = vmatpush.bf16.msra.mxu0 0
      %2200 = vmatpush.bf16.msra.mxu0 0
      %2201 = vmatpush.bf16.msra.mxu0 0
      %2202 = vmatpush.bf16.msra.mxu0 0
      %2203 = vmatpush.bf16.msra.mxu0 %v2188
      %2204 = vmatpush.bf16.msra.mxu0 %v2186
      %2205 = vmatmul.bf16.gmra.mxu0 %v2192
      %v2206 = vpop.f32.mrf.mxu0
      %v2207 = vadd.f32 0.0, %v2206
      %v2208 = vpop.f32.mrf.mxu0
      %v2209 = vadd.f32 0.0, %v2208
      %2210 = vmatmul.bf16.gmra.mxu0 %v2195
      %v2211 = vpop.f32.mrf.mxu0
      %v2212 = vadd.f32 0.0, %v2211
      %v2213 = vpop.f32.mrf.mxu0
      %v2214 = vadd.f32 0.0, %v2213
      %2215 = vdwg.mxu0
      %2216 = vrot.lane.b32.xlu0 %v2092, 120
      %v2217 = vpop.permute.xlu0 %2216
      %2218 = vrot.lane.b32.xlu0 %v2093, 120
      %v2219 = vpop.permute.xlu0 %2218
      %2220 = vrot.lane.b32.xlu0 %v2092, 88
      %v2221 = vpop.permute.xlu0 %2220
      %2222 = vrot.lane.b32.xlu0 %v2093, 88
      %v2223 = vpop.permute.xlu0 %2222
      %v2225 = vsel %vm952, %v2217, 0
      %v2228 = vsel %vm952, %v2219, 0
      %v2231 = vsel %vm952, %v2221, 0
      %v2234 = vsel %vm952, %v2223, 0
      %2236 = vmatpush.bf16.xpose.msra.mxu0 0
      %2237 = vmatpush.bf16.xpose.msra.mxu0 0
      %2238 = vmatpush.bf16.xpose.msra.mxu0 0
      %2239 = vmatpush.bf16.xpose.msra.mxu0 0
      %2240 = vmatpush.bf16.xpose.msra.mxu0 0
      %2241 = vmatpush.bf16.xpose.msra.mxu0 0
      %2242 = vmatpush.bf16.xpose.msra.mxu0 %v2234
      %2243 = vmatpush.bf16.xpose.msra.mxu0 %v2231
      %2244 = vmatmul.bf16.gmra.mxu0 %v2225
      %v2245 = vpop.f32.mrf.mxu0
      %v2246 = vadd.f32 0.0, %v2245
      %v2247 = vpop.f32.mrf.mxu0
      %v2248 = vadd.f32 0.0, %v2247
      %2249 = vmatmul.bf16.gmra.mxu0 %v2228
      %v2250 = vpop.f32.mrf.mxu0
      %v2251 = vadd.f32 0.0, %v2250
      %v2252 = vpop.f32.mrf.mxu0
      %v2253 = vadd.f32 0.0, %v2252
      %2254 = vdwg.mxu0
      %v2255 = vmul.f32 %v2246, 0.35355338
      %v2256 = vmul.f32 %v2248, 0.35355338
      %v2257 = vmul.f32 %v2251, 0.35355338
      %v2258 = vmul.f32 %v2253, 0.35355338
      %v2259 = vadd.f32 %v2255, %v891
      %v2260 = vadd.f32 %v2256, %v892
      %v2261 = vadd.f32 %v2257, %v893
      %v2262 = vadd.f32 %v2258, %v894
      %v2263 = vsel %vm918, %v2259, -inf
      %2264 = vmax.xlane.f32.xlu0 %v2263
      %v2265 = vpop.xlane.xlu0 %2264
      %v2266 = vsel %vm918, %v2260, -inf
      %2267 = vmax.xlane.f32.xlu0 %v2266
      %v2268 = vpop.xlane.xlu0 %2267
      %v2269 = vsel %vm918, %v2261, -inf
      %2270 = vmax.xlane.f32.xlu0 %v2269
      %v2271 = vpop.xlane.xlu0 %2270
      %v2272 = vsel %vm918, %v2262, -inf
      %2273 = vmax.xlane.f32.xlu0 %v2272
      %v2274 = vpop.xlane.xlu0 %2273
      %v2275 = vsub.f32 %v2259, %v2265
      %v2276 = vsub.f32 %v2260, %v2268
      %v2277 = vsub.f32 %v2261, %v2271
      %v2278 = vsub.f32 %v2262, %v2274
      %v2279 = vmul.f32 %v2275, 1.442695
      %v2280 = vpow.pop %v2279
      %v2281 = vmul.f32 %v2276, 1.442695
      %v2282 = vpow.pop %v2281
      %v2283 = vmul.f32 %v2277, 1.442695
      %v2284 = vpow.pop %v2283
      %v2285 = vmul.f32 %v2278, 1.442695
      %v2286 = vpow.pop %v2285
      %v2287 = vsel %vm918, %v2280, 0.0
      %2288 = vadd.xlane.f32.xlu0 %v2287
      %v2289 = vpop.xlane.xlu0 %2288
      %v2290 = vsel %vm918, %v2282, 0.0
      %2291 = vadd.xlane.f32.xlu0 %v2290
      %v2292 = vpop.xlane.xlu0 %2291
      %v2293 = vsel %vm918, %v2284, 0.0
      %2294 = vadd.xlane.f32.xlu0 %v2293
      %v2295 = vpop.xlane.xlu0 %2294
      %v2296 = vsel %vm918, %v2286, 0.0
      %2297 = vadd.xlane.f32.xlu0 %v2296
      %v2298 = vpop.xlane.xlu0 %2297
      %v2299 = vrcp.pop %v2289
      %v2300 = vrcp.pop %v2292
      %v2301 = vrcp.pop %v2295
      %v2302 = vrcp.pop %v2298
      %v2303 = vmul.f32 %v2280, %v2299
      %v2304 = vmul.f32 %v2282, %v2300
      %v2305 = vmul.f32 %v2284, %v2301
      %v2306 = vmul.f32 %v2286, %v2302
      %v2307 = vpack.c.bf16 %v2304, %v2303
      %v2308 = vpack.c.bf16 %v2306, %v2305
      %2309 = vrot.lane.b32.xlu0 %v2092, 56
      %v2310 = vpop.permute.xlu0 %2309
      %2311 = vrot.lane.b32.xlu0 %v2093, 56
      %v2312 = vpop.permute.xlu0 %2311
      %v2316 = vsel %vm918, %v2307, 0
      %v2319 = vsel %vm918, %v2308, 0
      %2321 = vmatpush.bf16.msra.mxu0 0
      %2322 = vmatpush.bf16.msra.mxu0 0
      %2323 = vmatpush.bf16.msra.mxu0 0
      %2324 = vmatpush.bf16.msra.mxu0 0
      %2325 = vmatpush.bf16.msra.mxu0 0
      %2326 = vmatpush.bf16.msra.mxu0 0
      %2327 = vmatpush.bf16.msra.mxu0 %v2312
      %2328 = vmatpush.bf16.msra.mxu0 %v2310
      %2329 = vmatmul.bf16.gmra.mxu0 %v2316
      %v2330 = vpop.f32.mrf.mxu0
      %v2331 = vadd.f32 0.0, %v2330
      %v2332 = vpop.f32.mrf.mxu0
      %v2333 = vadd.f32 0.0, %v2332
      %2334 = vmatmul.bf16.gmra.mxu0 %v2319
      %v2335 = vpop.f32.mrf.mxu0
      %v2336 = vadd.f32 0.0, %v2335
      %v2337 = vpop.f32.mrf.mxu0
      %v2338 = vadd.f32 0.0, %v2337
      %2339 = vdwg.mxu0
      %2340 = vrot.lane.b32.xlu0 %v2092, 112
      %v2341 = vpop.permute.xlu0 %2340
      %2342 = vrot.lane.b32.xlu0 %v2093, 112
      %v2343 = vpop.permute.xlu0 %2342
      %2344 = vrot.lane.b32.xlu0 %v2092, 80
      %v2345 = vpop.permute.xlu0 %2344
      %2346 = vrot.lane.b32.xlu0 %v2093, 80
      %v2347 = vpop.permute.xlu0 %2346
      %v2349 = vsel %vm952, %v2341, 0
      %v2352 = vsel %vm952, %v2343, 0
      %v2355 = vsel %vm952, %v2345, 0
      %v2358 = vsel %vm952, %v2347, 0
      %2360 = vmatpush.bf16.xpose.msra.mxu0 0
      %2361 = vmatpush.bf16.xpose.msra.mxu0 0
      %2362 = vmatpush.bf16.xpose.msra.mxu0 0
      %2363 = vmatpush.bf16.xpose.msra.mxu0 0
      %2364 = vmatpush.bf16.xpose.msra.mxu0 0
      %2365 = vmatpush.bf16.xpose.msra.mxu0 0
      %2366 = vmatpush.bf16.xpose.msra.mxu0 %v2358
      %2367 = vmatpush.bf16.xpose.msra.mxu0 %v2355
      %2368 = vmatmul.bf16.gmra.mxu0 %v2349
      %v2369 = vpop.f32.mrf.mxu0
      %v2370 = vadd.f32 0.0, %v2369
      %v2371 = vpop.f32.mrf.mxu0
      %v2372 = vadd.f32 0.0, %v2371
      %2373 = vmatmul.bf16.gmra.mxu0 %v2352
      %v2374 = vpop.f32.mrf.mxu0
      %v2375 = vadd.f32 0.0, %v2374
      %v2376 = vpop.f32.mrf.mxu0
      %v2377 = vadd.f32 0.0, %v2376
      %2378 = vdwg.mxu0
      %v2379 = vmul.f32 %v2370, 0.35355338
      %v2380 = vmul.f32 %v2372, 0.35355338
      %v2381 = vmul.f32 %v2375, 0.35355338
      %v2382 = vmul.f32 %v2377, 0.35355338
      %v2383 = vadd.f32 %v2379, %v891
      %v2384 = vadd.f32 %v2380, %v892
      %v2385 = vadd.f32 %v2381, %v893
      %v2386 = vadd.f32 %v2382, %v894
      %v2387 = vsel %vm918, %v2383, -inf
      %2388 = vmax.xlane.f32.xlu0 %v2387
      %v2389 = vpop.xlane.xlu0 %2388
      %v2390 = vsel %vm918, %v2384, -inf
      %2391 = vmax.xlane.f32.xlu0 %v2390
      %v2392 = vpop.xlane.xlu0 %2391
      %v2393 = vsel %vm918, %v2385, -inf
      %2394 = vmax.xlane.f32.xlu0 %v2393
      %v2395 = vpop.xlane.xlu0 %2394
      %v2396 = vsel %vm918, %v2386, -inf
      %2397 = vmax.xlane.f32.xlu0 %v2396
      %v2398 = vpop.xlane.xlu0 %2397
      %v2399 = vsub.f32 %v2383, %v2389
      %v2400 = vsub.f32 %v2384, %v2392
      %v2401 = vsub.f32 %v2385, %v2395
      %v2402 = vsub.f32 %v2386, %v2398
      %v2403 = vmul.f32 %v2399, 1.442695
      %v2404 = vpow.pop %v2403
      %v2405 = vmul.f32 %v2400, 1.442695
      %v2406 = vpow.pop %v2405
      %v2407 = vmul.f32 %v2401, 1.442695
      %v2408 = vpow.pop %v2407
      %v2409 = vmul.f32 %v2402, 1.442695
      %v2410 = vpow.pop %v2409
      %v2411 = vsel %vm918, %v2404, 0.0
      %2412 = vadd.xlane.f32.xlu0 %v2411
      %v2413 = vpop.xlane.xlu0 %2412
      %v2414 = vsel %vm918, %v2406, 0.0
      %2415 = vadd.xlane.f32.xlu0 %v2414
      %v2416 = vpop.xlane.xlu0 %2415
      %v2417 = vsel %vm918, %v2408, 0.0
      %2418 = vadd.xlane.f32.xlu0 %v2417
      %v2419 = vpop.xlane.xlu0 %2418
      %v2420 = vsel %vm918, %v2410, 0.0
      %2421 = vadd.xlane.f32.xlu0 %v2420
      %v2422 = vpop.xlane.xlu0 %2421
      %v2423 = vrcp.pop %v2413
      %v2424 = vrcp.pop %v2416
      %v2425 = vrcp.pop %v2419
      %v2426 = vrcp.pop %v2422
      %v2427 = vmul.f32 %v2404, %v2423
      %v2428 = vmul.f32 %v2406, %v2424
      %v2429 = vmul.f32 %v2408, %v2425
      %v2430 = vmul.f32 %v2410, %v2426
      %v2431 = vpack.c.bf16 %v2428, %v2427
      %v2432 = vpack.c.bf16 %v2430, %v2429
      %2433 = vrot.lane.b32.xlu0 %v2092, 48
      %v2434 = vpop.permute.xlu0 %2433
      %2435 = vrot.lane.b32.xlu0 %v2093, 48
      %v2436 = vpop.permute.xlu0 %2435
      %v2440 = vsel %vm918, %v2431, 0
      %v2443 = vsel %vm918, %v2432, 0
      %2445 = vmatpush.bf16.msra.mxu0 0
      %2446 = vmatpush.bf16.msra.mxu0 0
      %2447 = vmatpush.bf16.msra.mxu0 0
      %2448 = vmatpush.bf16.msra.mxu0 0
      %2449 = vmatpush.bf16.msra.mxu0 0
      %2450 = vmatpush.bf16.msra.mxu0 0
      %2451 = vmatpush.bf16.msra.mxu0 %v2436
      %2452 = vmatpush.bf16.msra.mxu0 %v2434
      %2453 = vmatmul.bf16.gmra.mxu0 %v2440
      %v2454 = vpop.f32.mrf.mxu0
      %v2455 = vadd.f32 0.0, %v2454
      %v2456 = vpop.f32.mrf.mxu0
      %v2457 = vadd.f32 0.0, %v2456
      %2458 = vmatmul.bf16.gmra.mxu0 %v2443
      %v2459 = vpop.f32.mrf.mxu0
      %v2460 = vadd.f32 0.0, %v2459
      %v2461 = vpop.f32.mrf.mxu0
      %v2462 = vadd.f32 0.0, %v2461
      %2463 = vdwg.mxu0
      %2464 = vrot.lane.b32.xlu0 %v2092, 104
      %v2465 = vpop.permute.xlu0 %2464
      %2466 = vrot.lane.b32.xlu0 %v2093, 104
      %v2467 = vpop.permute.xlu0 %2466
      %2468 = vrot.lane.b32.xlu0 %v2092, 72
      %v2469 = vpop.permute.xlu0 %2468
      %2470 = vrot.lane.b32.xlu0 %v2093, 72
      %v2471 = vpop.permute.xlu0 %2470
      %v2473 = vsel %vm952, %v2465, 0
      %v2476 = vsel %vm952, %v2467, 0
      %v2479 = vsel %vm952, %v2469, 0
      %v2482 = vsel %vm952, %v2471, 0
      %2484 = vmatpush.bf16.xpose.msra.mxu0 0
      %2485 = vmatpush.bf16.xpose.msra.mxu0 0
      %2486 = vmatpush.bf16.xpose.msra.mxu0 0
      %2487 = vmatpush.bf16.xpose.msra.mxu0 0
      %2488 = vmatpush.bf16.xpose.msra.mxu0 0
      %2489 = vmatpush.bf16.xpose.msra.mxu0 0
      %2490 = vmatpush.bf16.xpose.msra.mxu0 %v2482
      %2491 = vmatpush.bf16.xpose.msra.mxu0 %v2479
      %2492 = vmatmul.bf16.gmra.mxu0 %v2473
      %v2493 = vpop.f32.mrf.mxu0
      %v2494 = vadd.f32 0.0, %v2493
      %v2495 = vpop.f32.mrf.mxu0
      %v2496 = vadd.f32 0.0, %v2495
      %2497 = vmatmul.bf16.gmra.mxu0 %v2476
      %v2498 = vpop.f32.mrf.mxu0
      %v2499 = vadd.f32 0.0, %v2498
      %v2500 = vpop.f32.mrf.mxu0
      %v2501 = vadd.f32 0.0, %v2500
      %2502 = vdwg.mxu0
      %v2503 = vmul.f32 %v2494, 0.35355338
      %v2504 = vmul.f32 %v2496, 0.35355338
      %v2505 = vmul.f32 %v2499, 0.35355338
      %v2506 = vmul.f32 %v2501, 0.35355338
      %v2507 = vadd.f32 %v2503, %v891
      %v2508 = vadd.f32 %v2504, %v892
      %v2509 = vadd.f32 %v2505, %v893
      %v2510 = vadd.f32 %v2506, %v894
      %v2511 = vsel %vm918, %v2507, -inf
      %2512 = vmax.xlane.f32.xlu0 %v2511
      %v2513 = vpop.xlane.xlu0 %2512
      %v2514 = vsel %vm918, %v2508, -inf
      %2515 = vmax.xlane.f32.xlu0 %v2514
      %v2516 = vpop.xlane.xlu0 %2515
      %v2517 = vsel %vm918, %v2509, -inf
      %2518 = vmax.xlane.f32.xlu0 %v2517
      %v2519 = vpop.xlane.xlu0 %2518
      %v2520 = vsel %vm918, %v2510, -inf
      %2521 = vmax.xlane.f32.xlu0 %v2520
      %v2522 = vpop.xlane.xlu0 %2521
      %v2523 = vsub.f32 %v2507, %v2513
      %v2524 = vsub.f32 %v2508, %v2516
      %v2525 = vsub.f32 %v2509, %v2519
      %v2526 = vsub.f32 %v2510, %v2522
      %v2527 = vmul.f32 %v2523, 1.442695
      %v2528 = vpow.pop %v2527
      %v2529 = vmul.f32 %v2524, 1.442695
      %v2530 = vpow.pop %v2529
      %v2531 = vmul.f32 %v2525, 1.442695
      %v2532 = vpow.pop %v2531
      %v2533 = vmul.f32 %v2526, 1.442695
      %v2534 = vpow.pop %v2533
      %v2535 = vsel %vm918, %v2528, 0.0
      %2536 = vadd.xlane.f32.xlu0 %v2535
      %v2537 = vpop.xlane.xlu0 %2536
      %v2538 = vsel %vm918, %v2530, 0.0
      %2539 = vadd.xlane.f32.xlu0 %v2538
      %v2540 = vpop.xlane.xlu0 %2539
      %v2541 = vsel %vm918, %v2532, 0.0
      %2542 = vadd.xlane.f32.xlu0 %v2541
      %v2543 = vpop.xlane.xlu0 %2542
      %v2544 = vsel %vm918, %v2534, 0.0
      %2545 = vadd.xlane.f32.xlu0 %v2544
      %v2546 = vpop.xlane.xlu0 %2545
      %v2547 = vrcp.pop %v2537
      %v2548 = vrcp.pop %v2540
      %v2549 = vrcp.pop %v2543
      %v2550 = vrcp.pop %v2546
      %v2551 = vmul.f32 %v2528, %v2547
      %v2552 = vmul.f32 %v2530, %v2548
      %v2553 = vmul.f32 %v2532, %v2549
      %v2554 = vmul.f32 %v2534, %v2550
      %v2555 = vpack.c.bf16 %v2552, %v2551
      %v2556 = vpack.c.bf16 %v2554, %v2553
      %2557 = vrot.lane.b32.xlu0 %v2092, 40
      %v2558 = vpop.permute.xlu0 %2557
      %2559 = vrot.lane.b32.xlu0 %v2093, 40
      %v2560 = vpop.permute.xlu0 %2559
      %v2564 = vsel %vm918, %v2555, 0
      %v2567 = vsel %vm918, %v2556, 0
      %2569 = vmatpush.bf16.msra.mxu0 0
      %2570 = vmatpush.bf16.msra.mxu0 0
      %2571 = vmatpush.bf16.msra.mxu0 0
      %2572 = vmatpush.bf16.msra.mxu0 0
      %2573 = vmatpush.bf16.msra.mxu0 0
      %2574 = vmatpush.bf16.msra.mxu0 0
      %2575 = vmatpush.bf16.msra.mxu0 %v2560
      %2576 = vmatpush.bf16.msra.mxu0 %v2558
      %2577 = vmatmul.bf16.gmra.mxu0 %v2564
      %v2578 = vpop.f32.mrf.mxu0
      %v2579 = vadd.f32 0.0, %v2578
      %v2580 = vpop.f32.mrf.mxu0
      %v2581 = vadd.f32 0.0, %v2580
      %2582 = vmatmul.bf16.gmra.mxu0 %v2567
      %v2583 = vpop.f32.mrf.mxu0
      %v2584 = vadd.f32 0.0, %v2583
      %v2585 = vpop.f32.mrf.mxu0
      %v2586 = vadd.f32 0.0, %v2585
      %2587 = vdwg.mxu0
      %2592 = vrot.lane.b32.xlu0 %v2331, 8
      %v2593 = vpop.permute.xlu0 %2592
      %2594 = vrot.lane.b32.xlu0 %v2333, 8
      %v2595 = vpop.permute.xlu0 %2594
      %2596 = vrot.lane.b32.xlu0 %v2336, 8
      %v2597 = vpop.permute.xlu0 %2596
      %2598 = vrot.lane.b32.xlu0 %v2338, 8
      %v2599 = vpop.permute.xlu0 %2598
      %2608 = vrot.lane.b32.xlu0 %v2455, 16
      %v2609 = vpop.permute.xlu0 %2608
      %2610 = vrot.lane.b32.xlu0 %v2457, 16
      %v2611 = vpop.permute.xlu0 %2610
      %2612 = vrot.lane.b32.xlu0 %v2460, 16
      %v2613 = vpop.permute.xlu0 %2612
      %2614 = vrot.lane.b32.xlu0 %v2462, 16
      %v2615 = vpop.permute.xlu0 %2614
      %2624 = vrot.lane.b32.xlu0 %v2579, 24
      %v2625 = vpop.permute.xlu0 %2624
      %2626 = vrot.lane.b32.xlu0 %v2581, 24
      %v2627 = vpop.permute.xlu0 %2626
      %2628 = vrot.lane.b32.xlu0 %v2584, 24
      %v2629 = vpop.permute.xlu0 %2628
      %2630 = vrot.lane.b32.xlu0 %v2586, 24
      %v2631 = vpop.permute.xlu0 %2630
      %v2636 = vsel %vm952, %v2207, %v2593
      %v2637 = vsel %vm952, %v2209, %v2595
      %v2638 = vsel %vm952, %v2212, %v2597
      %v2639 = vsel %vm952, %v2214, %v2599
      %v2640 = vsel %vm736, %v2636, %v2609
      %v2641 = vsel %vm736, %v2637, %v2611
      %v2642 = vsel %vm736, %v2638, %v2613
      %v2643 = vsel %vm736, %v2639, %v2615
      %v2644 = vsel %vm1497, %v2640, %v2625
      %v2645 = vsel %vm1497, %v2641, %v2627
      %v2646 = vsel %vm1497, %v2642, %v2629
      %v2647 = vsel %vm1497, %v2643, %v2631
      %s2648 = scalar_lea.vmem %s10, 16
      %v2649 = vld [vmem:[%s2648] sm:$0xf]
      %v2650 = vld [vmem:[%s2648 + $0x4] sm:$0xf]
      %v2651 = vld [vmem:[%s2648 + $0x8] sm:$0xf]
      %v2652 = vld [vmem:[%s2648 + $0xc] sm:$0xf]
      %v2653 = vpack.c.bf16 %v2645, %v2644
      %v2654 = vpack.c.bf16 %v2647, %v2646
      %v2655 = vperm.slane %v2042, 0
      %v2660 = vunpack.c.l.b16 %v2649
      %v2661 = vunpack.c.l.b16 %v2650
      %v2662 = vunpack.c.l.b16 %v2651
      %v2663 = vunpack.c.l.b16 %v2652
      %v2664 = vpack.c.b16 %v2661, %v2660
      %v2665 = vpack.c.b16 %v2663, %v2662
      %v2669 = vsel %vm918, %v2653, 0
      %v2672 = vsel %vm918, %v2654, 0
      %2674 = vmatpush.bf16.msra.mxu0 0
      %2675 = vmatpush.bf16.msra.mxu0 0
      %2676 = vmatpush.bf16.msra.mxu0 0
      %2677 = vmatpush.bf16.msra.mxu0 0
      %2678 = vmatpush.bf16.msra.mxu0 0
      %2679 = vmatpush.bf16.msra.mxu0 0
      %2680 = vmatpush.bf16.msra.mxu0 %v2665
      %2681 = vmatpush.bf16.msra.mxu0 %v2664
      %2682 = vmatmul.bf16.gmra.mxu0 %v2669
      %v2683 = vpop.f32.mrf.mxu0
      %v2684 = vadd.f32 %v2655, %v2683
      %v2685 = vpop.f32.mrf.mxu0
      %v2686 = vadd.f32 %v2655, %v2685
      %2687 = vmatmul.bf16.gmra.mxu0 %v2672
      %v2688 = vpop.f32.mrf.mxu0
      %v2689 = vadd.f32 %v2655, %v2688
      %v2690 = vpop.f32.mrf.mxu0
      %v2691 = vadd.f32 %v2655, %v2690
      %2692 = vdwg.mxu0
      %v2693 = vadd.f32 %v2037, %v2684
      %v2694 = vadd.f32 %v2038, %v2686
      %v2695 = vadd.f32 %v2039, %v2689
      %v2696 = vadd.f32 %v2040, %v2691
      %v2697 = vsel %vm918, %v2693, 0.0
      %2698 = vadd.xlane.f32.xlu0 %v2697
      %v2699 = vpop.xlane.xlu0 %2698
      %v2700 = vsel %vm918, %v2694, 0.0
      %2701 = vadd.xlane.f32.xlu0 %v2700
      %v2702 = vpop.xlane.xlu0 %2701
      %v2703 = vsel %vm918, %v2695, 0.0
      %2704 = vadd.xlane.f32.xlu0 %v2703
      %v2705 = vpop.xlane.xlu0 %2704
      %v2706 = vsel %vm918, %v2696, 0.0
      %2707 = vadd.xlane.f32.xlu0 %v2706
      %v2708 = vpop.xlane.xlu0 %2707
      %v2709 = vmul.f32 %v2699, %v1568
      %v2710 = vmul.f32 %v2702, %v1568
      %v2711 = vmul.f32 %v2705, %v1568
      %v2712 = vmul.f32 %v2708, %v1568
      %v2713 = vsub.f32 %v2693, %v2709
      %v2714 = vsub.f32 %v2694, %v2710
      %v2715 = vsub.f32 %v2695, %v2711
      %v2716 = vsub.f32 %v2696, %v2712
      %v2717 = vmul.f32 %v2713, %v2713
      %v2718 = vmul.f32 %v2714, %v2714
      %v2719 = vmul.f32 %v2715, %v2715
      %v2720 = vmul.f32 %v2716, %v2716
      %v2721 = vsel %vm918, %v2717, 0.0
      %2722 = vadd.xlane.f32.xlu0 %v2721
      %v2723 = vpop.xlane.xlu0 %2722
      %v2724 = vsel %vm918, %v2718, 0.0
      %2725 = vadd.xlane.f32.xlu0 %v2724
      %v2726 = vpop.xlane.xlu0 %2725
      %v2727 = vsel %vm918, %v2719, 0.0
      %2728 = vadd.xlane.f32.xlu0 %v2727
      %v2729 = vpop.xlane.xlu0 %2728
      %v2730 = vsel %vm918, %v2720, 0.0
      %2731 = vadd.xlane.f32.xlu0 %v2730
      %v2732 = vpop.xlane.xlu0 %2731
      %v2733 = vmul.f32 %v2723, %v1568
      %v2734 = vmul.f32 %v2726, %v1568
      %v2735 = vmul.f32 %v2729, %v1568
      %v2736 = vmul.f32 %v2732, %v1568
      %v2737 = vadd.f32 %v2733, 1e-12
      %v2738 = vadd.f32 %v2734, 1e-12
      %v2739 = vadd.f32 %v2735, 1e-12
      %v2740 = vadd.f32 %v2736, 1e-12
      %v2741 = vrsqrt.pop %v2737
      %v2742 = vmul.f32 %v2741, %v2737
      %v2743 = vmul.f32 %v2742, %v2741
      %v2744 = vmul.f32 0.5, %v2743
      %v2745 = vsub.f32 1.5, %v2744
      %v2746 = vmul.f32 %v2741, %v2745
      %vm2747 = vweird.f32 %v2737
      %vm2748 = vweird.f32 %v2741
      %vm2749 = vmor %vm2747, %vm2748
      %v2750 = vsel %vm2749, %v2741, %v2746
      %v2751 = vrsqrt.pop %v2738
      %v2752 = vmul.f32 %v2751, %v2738
      %v2753 = vmul.f32 %v2752, %v2751
      %v2754 = vmul.f32 0.5, %v2753
      %v2755 = vsub.f32 1.5, %v2754
      %v2756 = vmul.f32 %v2751, %v2755
      %vm2757 = vweird.f32 %v2738
      %vm2758 = vweird.f32 %v2751
      %vm2759 = vmor %vm2757, %vm2758
      %v2760 = vsel %vm2759, %v2751, %v2756
      %v2761 = vrsqrt.pop %v2739
      %v2762 = vmul.f32 %v2761, %v2739
      %v2763 = vmul.f32 %v2762, %v2761
      %v2764 = vmul.f32 0.5, %v2763
      %v2765 = vsub.f32 1.5, %v2764
      %v2766 = vmul.f32 %v2761, %v2765
      %vm2767 = vweird.f32 %v2739
      %vm2768 = vweird.f32 %v2761
      %vm2769 = vmor %vm2767, %vm2768
      %v2770 = vsel %vm2769, %v2761, %v2766
      %v2771 = vrsqrt.pop %v2740
      %v2772 = vmul.f32 %v2771, %v2740
      %v2773 = vmul.f32 %v2772, %v2771
      %v2774 = vmul.f32 0.5, %v2773
      %v2775 = vsub.f32 1.5, %v2774
      %v2776 = vmul.f32 %v2771, %v2775
      %vm2777 = vweird.f32 %v2740
      %vm2778 = vweird.f32 %v2771
      %vm2779 = vmor %vm2777, %vm2778
      %v2780 = vsel %vm2779, %v2771, %v2776
      %v2781 = vmul.f32 %v2713, %v2750
      %v2782 = vmul.f32 %v2714, %v2760
      %v2783 = vmul.f32 %v2715, %v2770
      %v2784 = vmul.f32 %v2716, %v2780
      %v2785 = vperm.slane %v2042, 2
      %v2786 = vmul.f32 %v2781, %v2785
      %v2787 = vmul.f32 %v2782, %v2785
      %v2788 = vmul.f32 %v2783, %v2785
      %v2789 = vmul.f32 %v2784, %v2785
      %v2790 = vperm.slane %v2042, 3
      %v2791 = vadd.f32 %v2786, %v2790
      %v2792 = vadd.f32 %v2787, %v2790
      %v2793 = vadd.f32 %v2788, %v2790
      %v2794 = vadd.f32 %v2789, %v2790
      %s2795 = scalar_lea.vmem %s11, 16
      %v2796 = vld [vmem:[%s2795] sm:$0xf]
      %v2797 = vld [vmem:[%s2795 + $0x4] sm:$0xf]
      %v2798 = vld [vmem:[%s2795 + $0x8] sm:$0xf]
      %v2799 = vld [vmem:[%s2795 + $0xc] sm:$0xf]
      %v2800 = vpack.c.bf16 %v2792, %v2791
      %v2801 = vpack.c.bf16 %v2794, %v2793
      %s2802 = scalar_lea.vmem %s12, 1
      %v2803 = vld [vmem:[%s2802] sm:$0x1]
      %v2805 = vperm.slane %v2803, 0
      %v2811 = vunpack.c.l.b16 %v2796
      %v2812 = vunpack.c.l.b16 %v2797
      %v2813 = vunpack.c.l.b16 %v2798
      %v2814 = vunpack.c.l.b16 %v2799
      %v2815 = vpack.c.b16 %v2812, %v2811
      %v2816 = vpack.c.b16 %v2814, %v2813
      %v2820 = vsel %vm918, %v2800, 0
      %v2823 = vsel %vm918, %v2801, 0
      %2825 = vmatpush.bf16.msra.mxu0 0
      %2826 = vmatpush.bf16.msra.mxu0 0
      %2827 = vmatpush.bf16.msra.mxu0 0
      %2828 = vmatpush.bf16.msra.mxu0 0
      %2829 = vmatpush.bf16.msra.mxu0 0
      %2830 = vmatpush.bf16.msra.mxu0 0
      %2831 = vmatpush.bf16.msra.mxu0 %v2816
      %2832 = vmatpush.bf16.msra.mxu0 %v2815
      %2833 = vmatmul.bf16.gmra.mxu0 %v2820
      %v2834 = vpop.f32.mrf.mxu0
      %v2835 = vadd.f32 %v2805, %v2834
      %v2836 = vpop.f32.mrf.mxu0
      %v2837 = vadd.f32 %v2805, %v2836
      %2838 = vmatmul.bf16.gmra.mxu0 %v2823
      %v2839 = vpop.f32.mrf.mxu0
      %v2840 = vadd.f32 %v2805, %v2839
      %v2841 = vpop.f32.mrf.mxu0
      %v2842 = vadd.f32 %v2805, %v2841
      %2843 = vdwg.mxu0
      %v2844 = vmul.f32 %v2835, 0.5
      %v2845 = vmul.f32 %v2837, 0.5
      %v2846 = vmul.f32 %v2840, 0.5
      %v2847 = vmul.f32 %v2842, 0.5
      %v2848 = vmul.f32 %v2835, 0.70710677
      %v2849 = vmul.f32 %v2837, 0.70710677
      %v2850 = vmul.f32 %v2840, 0.70710677
      %v2851 = vmul.f32 %v2842, 0.70710677
      %v2852 = vmul.f32 %v2848, %v2848
      %v2853 = vmin.f32 16.0, %v2852
      %v2854 = vmul.f32 %v2853, 2.1237322e-06
      %v2855 = vadd.f32 %v2854, 0.00028619796
      %v2856 = vmul.f32 %v2853, %v2855
      %v2857 = vadd.f32 %v2856, 0.0036580483
      %v2858 = vmul.f32 %v2853, %v2857
      %v2859 = vadd.f32 %v2858, 0.05243302
      %v2860 = vmul.f32 %v2853, %v2859
      %v2861 = vadd.f32 %v2860, 0.18741608
      %v2862 = vmul.f32 %v2853, %v2861
      %v2863 = vadd.f32 %v2862, 1.1283791
      %v2864 = vmul.f32 %v2848, %v2863
      %v2865 = vmul.f32 %v2853, 3.8918573e-05
      %v2866 = vadd.f32 %v2865, 0.001143296
      %v2867 = vmul.f32 %v2853, %v2866
      %v2868 = vadd.f32 %v2867, 0.014752088
      %v2869 = vmul.f32 %v2853, %v2868
      %v2870 = vadd.f32 %v2869, 0.112945676
      %v2871 = vmul.f32 %v2853, %v2870
      %v2872 = vadd.f32 %v2871, 0.4994258
      %v2873 = vmul.f32 %v2853, %v2872
      %v2874 = vadd.f32 %v2873, 1.0
      %v2875 = vrcp.pop %v2874
      %v2876 = vmul.f32 %v2874, %v2875
      %v2877 = vsub.f32 1.0, %v2876
      %v2878 = vmul.f32 %v2875, %v2877
      %v2879 = vadd.f32 %v2875, %v2878
      %vm2880 = vweird.f32 %v2874
      %vm2881 = vweird.f32 %v2875
      %vm2882 = vmor %vm2880, %vm2881
      %v2883 = vsel %vm2882, %v2875, %v2879
      %v2884 = vand.u32 2147483647, %v2874
      %vm2885 = vcmp.eq.f32.partialorder %v2884, 8.507059e+37
      %v2886 = vand.u32 %v2874, 2147483648
      %v2887 = vor.u32 1.1754944e-38, %v2886
      %v2888 = vsel %vm2885, %v2887, %v2883
      %v2889 = vmul.f32 %v2864, %v2888
      %v2890 = vmin.f32 %v2889, 1.0
      %v2891 = vmax.f32 %v2890, -1.0
      %v2892 = vmul.f32 %v2849, %v2849
      %v2893 = vmin.f32 16.0, %v2892
      %v2894 = vmul.f32 %v2893, 2.1237322e-06
      %v2895 = vadd.f32 %v2894, 0.00028619796
      %v2896 = vmul.f32 %v2893, %v2895
      %v2897 = vadd.f32 %v2896, 0.0036580483
      %v2898 = vmul.f32 %v2893, %v2897
      %v2899 = vadd.f32 %v2898, 0.05243302
      %v2900 = vmul.f32 %v2893, %v2899
      %v2901 = vadd.f32 %v2900, 0.18741608
      %v2902 = vmul.f32 %v2893, %v2901
      %v2903 = vadd.f32 %v2902, 1.1283791
      %v2904 = vmul.f32 %v2849, %v2903
      %v2905 = vmul.f32 %v2893, 3.8918573e-05
      %v2906 = vadd.f32 %v2905, 0.001143296
      %v2907 = vmul.f32 %v2893, %v2906
      %v2908 = vadd.f32 %v2907, 0.014752088
      %v2909 = vmul.f32 %v2893, %v2908
      %v2910 = vadd.f32 %v2909, 0.112945676
      %v2911 = vmul.f32 %v2893, %v2910
      %v2912 = vadd.f32 %v2911, 0.4994258
      %v2913 = vmul.f32 %v2893, %v2912
      %v2914 = vadd.f32 %v2913, 1.0
      %v2915 = vrcp.pop %v2914
      %v2916 = vmul.f32 %v2914, %v2915
      %v2917 = vsub.f32 1.0, %v2916
      %v2918 = vmul.f32 %v2915, %v2917
      %v2919 = vadd.f32 %v2915, %v2918
      %vm2920 = vweird.f32 %v2914
      %vm2921 = vweird.f32 %v2915
      %vm2922 = vmor %vm2920, %vm2921
      %v2923 = vsel %vm2922, %v2915, %v2919
      %v2924 = vand.u32 2147483647, %v2914
      %vm2925 = vcmp.eq.f32.partialorder %v2924, 8.507059e+37
      %v2926 = vand.u32 %v2914, 2147483648
      %v2927 = vor.u32 1.1754944e-38, %v2926
      %v2928 = vsel %vm2925, %v2927, %v2923
      %v2929 = vmul.f32 %v2904, %v2928
      %v2930 = vmin.f32 %v2929, 1.0
      %v2931 = vmax.f32 %v2930, -1.0
      %v2932 = vmul.f32 %v2850, %v2850
      %v2933 = vmin.f32 16.0, %v2932
      %v2934 = vmul.f32 %v2933, 2.1237322e-06
      %v2935 = vadd.f32 %v2934, 0.00028619796
      %v2936 = vmul.f32 %v2933, %v2935
      %v2937 = vadd.f32 %v2936, 0.0036580483
      %v2938 = vmul.f32 %v2933, %v2937
      %v2939 = vadd.f32 %v2938, 0.05243302
      %v2940 = vmul.f32 %v2933, %v2939
      %v2941 = vadd.f32 %v2940, 0.18741608
      %v2942 = vmul.f32 %v2933, %v2941
      %v2943 = vadd.f32 %v2942, 1.1283791
      %v2944 = vmul.f32 %v2850, %v2943
      %v2945 = vmul.f32 %v2933, 3.8918573e-05
      %v2946 = vadd.f32 %v2945, 0.001143296
      %v2947 = vmul.f32 %v2933, %v2946
      %v2948 = vadd.f32 %v2947, 0.014752088
      %v2949 = vmul.f32 %v2933, %v2948
      %v2950 = vadd.f32 %v2949, 0.112945676
      %v2951 = vmul.f32 %v2933, %v2950
      %v2952 = vadd.f32 %v2951, 0.4994258
      %v2953 = vmul.f32 %v2933, %v2952
      %v2954 = vadd.f32 %v2953, 1.0
      %v2955 = vrcp.pop %v2954
      %v2956 = vmul.f32 %v2954, %v2955
      %v2957 = vsub.f32 1.0, %v2956
      %v2958 = vmul.f32 %v2955, %v2957
      %v2959 = vadd.f32 %v2955, %v2958
      %vm2960 = vweird.f32 %v2954
      %vm2961 = vweird.f32 %v2955
      %vm2962 = vmor %vm2960, %vm2961
      %v2963 = vsel %vm2962, %v2955, %v2959
      %v2964 = vand.u32 2147483647, %v2954
      %vm2965 = vcmp.eq.f32.partialorder %v2964, 8.507059e+37
      %v2966 = vand.u32 %v2954, 2147483648
      %v2967 = vor.u32 1.1754944e-38, %v2966
      %v2968 = vsel %vm2965, %v2967, %v2963
      %v2969 = vmul.f32 %v2944, %v2968
      %v2970 = vmin.f32 %v2969, 1.0
      %v2971 = vmax.f32 %v2970, -1.0
      %v2972 = vmul.f32 %v2851, %v2851
      %v2973 = vmin.f32 16.0, %v2972
      %v2974 = vmul.f32 %v2973, 2.1237322e-06
      %v2975 = vadd.f32 %v2974, 0.00028619796
      %v2976 = vmul.f32 %v2973, %v2975
      %v2977 = vadd.f32 %v2976, 0.0036580483
      %v2978 = vmul.f32 %v2973, %v2977
      %v2979 = vadd.f32 %v2978, 0.05243302
      %v2980 = vmul.f32 %v2973, %v2979
      %v2981 = vadd.f32 %v2980, 0.18741608
      %v2982 = vmul.f32 %v2973, %v2981
      %v2983 = vadd.f32 %v2982, 1.1283791
      %v2984 = vmul.f32 %v2851, %v2983
      %v2985 = vmul.f32 %v2973, 3.8918573e-05
      %v2986 = vadd.f32 %v2985, 0.001143296
      %v2987 = vmul.f32 %v2973, %v2986
      %v2988 = vadd.f32 %v2987, 0.014752088
      %v2989 = vmul.f32 %v2973, %v2988
      %v2990 = vadd.f32 %v2989, 0.112945676
      %v2991 = vmul.f32 %v2973, %v2990
      %v2992 = vadd.f32 %v2991, 0.4994258
      %v2993 = vmul.f32 %v2973, %v2992
      %v2994 = vadd.f32 %v2993, 1.0
      %v2995 = vrcp.pop %v2994
      %v2996 = vmul.f32 %v2994, %v2995
      %v2997 = vsub.f32 1.0, %v2996
      %v2998 = vmul.f32 %v2995, %v2997
      %v2999 = vadd.f32 %v2995, %v2998
      %vm3000 = vweird.f32 %v2994
      %vm3001 = vweird.f32 %v2995
      %vm3002 = vmor %vm3000, %vm3001
      %v3003 = vsel %vm3002, %v2995, %v2999
      %v3004 = vand.u32 2147483647, %v2994
      %vm3005 = vcmp.eq.f32.partialorder %v3004, 8.507059e+37
      %v3006 = vand.u32 %v2994, 2147483648
      %v3007 = vor.u32 1.1754944e-38, %v3006
      %v3008 = vsel %vm3005, %v3007, %v3003
      %v3009 = vmul.f32 %v2984, %v3008
      %v3010 = vmin.f32 %v3009, 1.0
      %v3011 = vmax.f32 %v3010, -1.0
      %v3012 = vadd.f32 %v2891, 1.0
      %v3013 = vadd.f32 %v2931, 1.0
      %v3014 = vadd.f32 %v2971, 1.0
      %v3015 = vadd.f32 %v3011, 1.0
      %v3016 = vmul.f32 %v2844, %v3012
      %v3017 = vmul.f32 %v2845, %v3013
      %v3018 = vmul.f32 %v2846, %v3014
      %v3019 = vmul.f32 %v2847, %v3015
      %s3020 = scalar_lea.vmem %s13, 32
      %v3021 = vld [vmem:[%s3020] sm:$0xf]
      %v3022 = vld [vmem:[%s3020 + $0x4] sm:$0xf]
      %v3023 = vld [vmem:[%s3020 + $0x8] sm:$0xf]
      %v3024 = vld [vmem:[%s3020 + $0xc] sm:$0xf]
      %v3025 = vld [vmem:[%s3020 + $0x10] sm:$0xf]
      %v3026 = vld [vmem:[%s3020 + $0x14] sm:$0xf]
      %v3027 = vld [vmem:[%s3020 + $0x18] sm:$0xf]
      %v3028 = vld [vmem:[%s3020 + $0x1c] sm:$0xf]
      %v3029 = vpack.c.bf16 %v3017, %v3016
      %v3030 = vpack.c.bf16 %v3019, %v3018
      %v3031 = vperm.slane %v2042, 1
      %v3040 = vunpack.c.l.b16 %v3021
      %v3041 = vunpack.c.l.b16 %v3022
      %v3042 = vunpack.c.l.b16 %v3023
      %v3043 = vunpack.c.l.b16 %v3024
      %v3044 = vunpack.c.l.b16 %v3025
      %v3045 = vunpack.c.l.b16 %v3026
      %v3046 = vunpack.c.l.b16 %v3027
      %v3047 = vunpack.c.l.b16 %v3028
      %v3048 = vpack.c.b16 %v3041, %v3040
      %v3049 = vpack.c.b16 %v3043, %v3042
      %v3050 = vpack.c.b16 %v3045, %v3044
      %v3051 = vpack.c.b16 %v3047, %v3046
      %v3057 = vsel %vm1913, %v3029, 0
      %v3060 = vsel %vm1913, %v3030, 0
      %3062 = vmatpush.bf16.msra.mxu0 0
      %3063 = vmatpush.bf16.msra.mxu0 0
      %3064 = vmatpush.bf16.msra.mxu0 0
      %3065 = vmatpush.bf16.msra.mxu0 0
      %3066 = vmatpush.bf16.msra.mxu0 %v3051
      %3067 = vmatpush.bf16.msra.mxu0 %v3050
      %3068 = vmatpush.bf16.msra.mxu0 %v3049
      %3069 = vmatpush.bf16.msra.mxu0 %v3048
      %3070 = vmatmul.bf16.gmra.mxu0 %v3057
      %v3071 = vpop.f32.mrf.mxu0
      %v3072 = vadd.f32 %v3031, %v3071
      %v3073 = vpop.f32.mrf.mxu0
      %v3074 = vadd.f32 %v3031, %v3073
      %3075 = vmatmul.bf16.gmra.mxu0 %v3060
      %v3076 = vpop.f32.mrf.mxu0
      %v3077 = vadd.f32 %v3031, %v3076
      %v3078 = vpop.f32.mrf.mxu0
      %v3079 = vadd.f32 %v3031, %v3078
      %3080 = vdwg.mxu0
      %v3081 = vadd.f32 %v2791, %v3072
      %v3082 = vadd.f32 %v2792, %v3074
      %v3083 = vadd.f32 %v2793, %v3077
      %v3084 = vadd.f32 %v2794, %v3079
      %v3085 = vsel %vm918, %v3081, 0.0
      %3086 = vadd.xlane.f32.xlu0 %v3085
      %v3087 = vpop.xlane.xlu0 %3086
      %v3088 = vsel %vm918, %v3082, 0.0
      %3089 = vadd.xlane.f32.xlu0 %v3088
      %v3090 = vpop.xlane.xlu0 %3089
      %v3091 = vsel %vm918, %v3083, 0.0
      %3092 = vadd.xlane.f32.xlu0 %v3091
      %v3093 = vpop.xlane.xlu0 %3092
      %v3094 = vsel %vm918, %v3084, 0.0
      %3095 = vadd.xlane.f32.xlu0 %v3094
      %v3096 = vpop.xlane.xlu0 %3095
      %v3097 = vmul.f32 %v3087, %v1568
      %v3098 = vmul.f32 %v3090, %v1568
      %v3099 = vmul.f32 %v3093, %v1568
      %v3100 = vmul.f32 %v3096, %v1568
      %v3101 = vsub.f32 %v3081, %v3097
      %v3102 = vsub.f32 %v3082, %v3098
      %v3103 = vsub.f32 %v3083, %v3099
      %v3104 = vsub.f32 %v3084, %v3100
      %v3105 = vmul.f32 %v3101, %v3101
      %v3106 = vmul.f32 %v3102, %v3102
      %v3107 = vmul.f32 %v3103, %v3103
      %v3108 = vmul.f32 %v3104, %v3104
      %v3109 = vsel %vm918, %v3105, 0.0
      %3110 = vadd.xlane.f32.xlu0 %v3109
      %v3111 = vpop.xlane.xlu0 %3110
      %v3112 = vsel %vm918, %v3106, 0.0
      %3113 = vadd.xlane.f32.xlu0 %v3112
      %v3114 = vpop.xlane.xlu0 %3113
      %v3115 = vsel %vm918, %v3107, 0.0
      %3116 = vadd.xlane.f32.xlu0 %v3115
      %v3117 = vpop.xlane.xlu0 %3116
      %v3118 = vsel %vm918, %v3108, 0.0
      %3119 = vadd.xlane.f32.xlu0 %v3118
      %v3120 = vpop.xlane.xlu0 %3119
      %v3121 = vmul.f32 %v3111, %v1568
      %v3122 = vmul.f32 %v3114, %v1568
      %v3123 = vmul.f32 %v3117, %v1568
      %v3124 = vmul.f32 %v3120, %v1568
      %v3125 = vadd.f32 %v3121, 1e-12
      %v3126 = vadd.f32 %v3122, 1e-12
      %v3127 = vadd.f32 %v3123, 1e-12
      %v3128 = vadd.f32 %v3124, 1e-12
      %v3129 = vrsqrt.pop %v3125
      %v3130 = vmul.f32 %v3129, %v3125
      %v3131 = vmul.f32 %v3130, %v3129
      %v3132 = vmul.f32 0.5, %v3131
      %v3133 = vsub.f32 1.5, %v3132
      %v3134 = vmul.f32 %v3129, %v3133
      %vm3135 = vweird.f32 %v3125
      %vm3136 = vweird.f32 %v3129
      %vm3137 = vmor %vm3135, %vm3136
      %v3138 = vsel %vm3137, %v3129, %v3134
      %v3139 = vrsqrt.pop %v3126
      %v3140 = vmul.f32 %v3139, %v3126
      %v3141 = vmul.f32 %v3140, %v3139
      %v3142 = vmul.f32 0.5, %v3141
      %v3143 = vsub.f32 1.5, %v3142
      %v3144 = vmul.f32 %v3139, %v3143
      %vm3145 = vweird.f32 %v3126
      %vm3146 = vweird.f32 %v3139
      %vm3147 = vmor %vm3145, %vm3146
      %v3148 = vsel %vm3147, %v3139, %v3144
      %v3149 = vrsqrt.pop %v3127
      %v3150 = vmul.f32 %v3149, %v3127
      %v3151 = vmul.f32 %v3150, %v3149
      %v3152 = vmul.f32 0.5, %v3151
      %v3153 = vsub.f32 1.5, %v3152
      %v3154 = vmul.f32 %v3149, %v3153
      %vm3155 = vweird.f32 %v3127
      %vm3156 = vweird.f32 %v3149
      %vm3157 = vmor %vm3155, %vm3156
      %v3158 = vsel %vm3157, %v3149, %v3154
      %v3159 = vrsqrt.pop %v3128
      %v3160 = vmul.f32 %v3159, %v3128
      %v3161 = vmul.f32 %v3160, %v3159
      %v3162 = vmul.f32 0.5, %v3161
      %v3163 = vsub.f32 1.5, %v3162
      %v3164 = vmul.f32 %v3159, %v3163
      %vm3165 = vweird.f32 %v3128
      %vm3166 = vweird.f32 %v3159
      %vm3167 = vmor %vm3165, %vm3166
      %v3168 = vsel %vm3167, %v3159, %v3164
      %v3169 = vmul.f32 %v3101, %v3138
      %v3170 = vmul.f32 %v3102, %v3148
      %v3171 = vmul.f32 %v3103, %v3158
      %v3172 = vmul.f32 %v3104, %v3168
      %v3173 = vperm.slane %v2042, 4
      %v3174 = vmul.f32 %v3169, %v3173
      %v3175 = vmul.f32 %v3170, %v3173
      %v3176 = vmul.f32 %v3171, %v3173
      %v3177 = vmul.f32 %v3172, %v3173
      %v3178 = vperm.slane %v2042, 5
      %v3179 = vadd.f32 %v3174, %v3178
      %v3180 = vadd.f32 %v3175, %v3178
      %v3181 = vadd.f32 %v3176, %v3178
      %v3182 = vadd.f32 %v3177, %v3178
      %v3184 = vrot.slane %v3180, 7
      %v3187 = vrot.slane %v3181, 6
      %v3190 = vrot.slane %v3182, 5
      %vm3192 = vcmask 1040384
      %v3193 = vsel %vm3192, %v3179, %v3184
      %v3194 = vsel %vm711, %v3193, %v3187
      %vm3195 = vcmask 1042432
      %v3196 = vsel %vm3195, %v3194, %v3190
      %v3197 = vld [vmem:[%s15] sm:$0xf]
      %v3198 = vld [vmem:[%s15 + $0x4] sm:$0xf]
      %v3199 = vld [vmem:[%s15 + $0x8] sm:$0xf]
      %v3200 = vld [vmem:[%s15 + $0xc] sm:$0xf]
      %v3201 = vpack.c.bf16 %v3196, %v3196
      %v3202 = vld [vmem:[%s16] sm:$0x1]
      %v3204 = vperm.slane %v3202, 0
      %v3210 = vunpack.c.l.b16 %v3197
      %v3211 = vunpack.c.l.b16 %v3198
      %v3212 = vunpack.c.l.b16 %v3199
      %v3213 = vunpack.c.l.b16 %v3200
      %v3214 = vpack.c.b16 %v3211, %v3210
      %v3215 = vpack.c.b16 %v3213, %v3212
      %v3219 = vsel %vm918, %v3201, 0
      %3221 = vmatpush.bf16.msra.mxu0 0
      %3222 = vmatpush.bf16.msra.mxu0 0
      %3223 = vmatpush.bf16.msra.mxu0 0
      %3224 = vmatpush.bf16.msra.mxu0 0
      %3225 = vmatpush.bf16.msra.mxu0 0
      %3226 = vmatpush.bf16.msra.mxu0 0
      %3227 = vmatpush.bf16.msra.mxu0 %v3215
      %3228 = vmatpush.bf16.msra.mxu0 %v3214
      %3229 = vmatmul.bf16.gmra.mxu0 %v3219
      %v3230 = vpop.f32.mrf.mxu0
      %v3231 = vadd.f32 %v3204, %v3230
      %v3232 = vpop.f32.mrf.mxu0
      %3233 = vdwg.mxu0
      %v3234 = vmul.f32 %v3231, 0.5
      %v3235 = vmul.f32 %v3231, 0.70710677
      %v3236 = vmul.f32 %v3235, %v3235
      %v3237 = vmin.f32 16.0, %v3236
      %v3238 = vmul.f32 %v3237, 2.1237322e-06
      %v3239 = vadd.f32 %v3238, 0.00028619796
      %v3240 = vmul.f32 %v3237, %v3239
      %v3241 = vadd.f32 %v3240, 0.0036580483
      %v3242 = vmul.f32 %v3237, %v3241
      %v3243 = vadd.f32 %v3242, 0.05243302
      %v3244 = vmul.f32 %v3237, %v3243
      %v3245 = vadd.f32 %v3244, 0.18741608
      %v3246 = vmul.f32 %v3237, %v3245
      %v3247 = vadd.f32 %v3246, 1.1283791
      %v3248 = vmul.f32 %v3235, %v3247
      %v3249 = vmul.f32 %v3237, 3.8918573e-05
      %v3250 = vadd.f32 %v3249, 0.001143296
      %v3251 = vmul.f32 %v3237, %v3250
      %v3252 = vadd.f32 %v3251, 0.014752088
      %v3253 = vmul.f32 %v3237, %v3252
      %v3254 = vadd.f32 %v3253, 0.112945676
      %v3255 = vmul.f32 %v3237, %v3254
      %v3256 = vadd.f32 %v3255, 0.4994258
      %v3257 = vmul.f32 %v3237, %v3256
      %v3258 = vadd.f32 %v3257, 1.0
      %v3259 = vrcp.pop %v3258
      %v3260 = vmul.f32 %v3258, %v3259
      %v3261 = vsub.f32 1.0, %v3260
      %v3262 = vmul.f32 %v3259, %v3261
      %v3263 = vadd.f32 %v3259, %v3262
      %vm3264 = vweird.f32 %v3258
      %vm3265 = vweird.f32 %v3259
      %vm3266 = vmor %vm3264, %vm3265
      %v3267 = vsel %vm3266, %v3259, %v3263
      %v3268 = vand.u32 2147483647, %v3258
      %vm3269 = vcmp.eq.f32.partialorder %v3268, 8.507059e+37
      %v3270 = vand.u32 %v3258, 2147483648
      %v3271 = vor.u32 1.1754944e-38, %v3270
      %v3272 = vsel %vm3269, %v3271, %v3267
      %v3273 = vmul.f32 %v3248, %v3272
      %v3274 = vmin.f32 %v3273, 1.0
      %v3275 = vmax.f32 %v3274, -1.0
      %v3276 = vadd.f32 %v3275, 1.0
      %v3277 = vmul.f32 %v3234, %v3276
      %v3278 = vld [vmem:[%s17] sm:$0xf]
      %v3279 = vld [vmem:[%s17 + $0x4] sm:$0xf]
      %v3280 = vld [vmem:[%s17 + $0x8] sm:$0xf]
      %v3281 = vld [vmem:[%s17 + $0xc] sm:$0xf]
      %v3282 = vpack.c.bf16 %v3277, %v3277
      %v3283 = vld [vmem:[%s18] sm:$0x1]
      %v3285 = vperm.slane %v3283, 0
      %v3291 = vunpack.c.l.b16 %v3278
      %v3292 = vunpack.c.l.b16 %v3279
      %v3293 = vunpack.c.l.b16 %v3280
      %v3294 = vunpack.c.l.b16 %v3281
      %v3295 = vpack.c.b16 %v3292, %v3291
      %v3296 = vpack.c.b16 %v3294, %v3293
      %v3300 = vsel %vm918, %v3282, 0
      %3302 = vmatpush.bf16.msra.mxu0 0
      %3303 = vmatpush.bf16.msra.mxu0 0
      %3304 = vmatpush.bf16.msra.mxu0 0
      %3305 = vmatpush.bf16.msra.mxu0 0
      %3306 = vmatpush.bf16.msra.mxu0 0
      %3307 = vmatpush.bf16.msra.mxu0 0
      %3308 = vmatpush.bf16.msra.mxu0 %v3296
      %3309 = vmatpush.bf16.msra.mxu0 %v3295
      %3310 = vmatmul.bf16.gmra.mxu0 %v3300
      %v3311 = vpop.f32.mrf.mxu0
      %v3312 = vadd.f32 %v3285, %v3311
      %v3313 = vpop.f32.mrf.mxu0
      %3314 = vdwg.mxu0
      %vm3315 = vcmask 11264
      %v3316 = vsel %vm3315, %v3312, -inf
      %3317 = vmax.xlane.f32.xlu0 %v3316
      %v3318 = vpop.xlane.xlu0 %3317
      %v3319 = vsub.f32 %v3312, %v3318
      %v3320 = vmul.f32 %v3319, 1.442695
      %v3321 = vpow.pop %v3320
      %v3322 = vsel %vm3315, %v3321, 0.0
      %3323 = vadd.xlane.f32.xlu0 %v3322
      %v3324 = vpop.xlane.xlu0 %3323
      %v3325 = vrcp.pop %v3324
      %v3326 = vmul.f32 %v3324, %v3325
      %v3327 = vsub.f32 1.0, %v3326
      %v3328 = vmul.f32 %v3325, %v3327
      %v3329 = vadd.f32 %v3325, %v3328
      %vm3330 = vweird.f32 %v3324
      %vm3331 = vweird.f32 %v3325
      %vm3332 = vmor %vm3330, %vm3331
      %v3333 = vsel %vm3332, %v3325, %v3329
      %v3334 = vand.u32 2147483647, %v3324
      %vm3335 = vcmp.eq.f32.partialorder %v3334, 8.507059e+37
      %v3336 = vand.u32 %v3324, 2147483648
      %v3337 = vor.u32 1.1754944e-38, %v3336
      %v3338 = vsel %vm3335, %v3337, %v3333
      %v3339 = vmul.f32 %v3321, %v3338
      %3340 = vst.msk [vmem:[%s614] sm:$0xf] %vm3315, %v3339
      %p3341 = scmp.lt.s32.totalorder %s30, 1
      %s3342 = scalar_select %p3341, %s30, 1
      %s3343 = smul.addr %s3342, 4
      %s3344 = scalar_lea.vmem %s19, %s3343
      // Predicated region
      $region97: #{electra_classifier_forward.1} parent=95 // pred_check
        %p3345 = pneg %p457
      $region98: #{electra_classifier_forward.1} parent=95 // pred_check_branch
        %3347 = sbr.rel (%p3345) target = $region100
      $region99: #{electra_classifier_forward.1} parent=95 // pred_region
        _
      $region100: #{electra_classifier_forward.1} parent=95 // pred_fallthru
        _
    $region96: #{electra_classifier_forward.1} parent=5 // pred_fallthru
      _
    %p3348 = scmp.le.s32.totalorder 2, %s25
    // Predicated region
    $region101: #{electra_classifier_forward.1} parent=5 // pred_check
      %p3349 = pneg %p3348
    $region102: #{electra_classifier_forward.1} parent=5 // pred_check_branch
      %3351 = sbr.rel (%p3349) target = $region104
    $region103: #{electra_classifier_forward.1} parent=5 // pred_region
      %s3352 = ssub.s32 %s25, 2
      // Predicated region
      $region105: #{electra_classifier_forward.1} parent=103 // pred_check
        %p3353 = pneg %p463
      $region106: #{electra_classifier_forward.1} parent=103 // pred_check_branch
        %3355 = sbr.rel (%p3353) target = $region108
      $region107: #{electra_classifier_forward.1} parent=103 // pred_region
        %p3356 = scmp.lt.s32.totalorder %s31, 1
        %s3357 = scalar_select %p3356, %s31, 1
        %s3358 = smul.addr %s3357, 4
        %s3359 = scalar_lea.vmem %s19, %s3358
      $region108: #{electra_classifier_forward.1} parent=103 // pred_fallthru
        _
    $region104: #{electra_classifier_forward.1} parent=5 // pred_fallthru
      _
  $region6: #{electra_classifier_forward.1} parent=0 // loop_footer
    %s29 = sadd.s32 1, %s25
  $region7: #{electra_classifier_forward.1} parent=0 // loop_footer_branch
    %24 = sbr.rel target = $region3
  $region8: #{electra_classifier_forward.1} parent=0 // loop_exit
    _

</llo_original>
